<compile_context>
chip_gen: v5e
topology: v5e:2x2
jax: 0.10.0
libtpu: 0.0.40
codegen_flags: <defaults>
</compile_context>

<pallas_src>
import functools

import jax
import jax.numpy as jnp
from jax import lax
from jax.experimental import pallas as pl
from jax.experimental.pallas import tpu as pltpu

EPS = 1e-5


def _instance_norm_affine(y, gamma, beta, *, relu):
    """y: (HW, C) f32. One-pass stats; affine folded into one scale/shift FMA."""
    hw = y.shape[0]
    inv_hw = 1.0 / hw
    mean = jnp.sum(y, axis=0, keepdims=True) * inv_hw            # (1, C)
    msq = jnp.sum(y * y, axis=0, keepdims=True) * inv_hw         # (1, C)
    var = jnp.maximum(msq - mean * mean, 0.0)                    # clamp rounding
    scale = gamma * lax.rsqrt(var + EPS)                         # (1, C)
    shift = beta - mean * scale                                  # (1, C)
    out = y * scale + shift
    if relu:
        out = jnp.maximum(out, 0.0)
    return out


def _store_reflect_pad(pad_ref, x3d, H, W):
    """ReflectionPad2d(1): write x3d (H,W,C) into pad_ref (H+2,W+2,C).

    Interior store + 8 tiny border stores; no full-map concat/copy pass.
    Requires H >= 2 and W >= 2 (checked host-side).
    """
    pad_ref[pl.ds(1, H), pl.ds(1, W), :] = x3d                       # interior
    pad_ref[pl.ds(0, 1), pl.ds(1, W), :] = x3d[1:2]                  # top row
    pad_ref[pl.ds(H + 1, 1), pl.ds(1, W), :] = x3d[H - 2:H - 1]      # bottom row
    pad_ref[pl.ds(1, H), pl.ds(0, 1), :] = x3d[:, 1:2, :]            # left col
    pad_ref[pl.ds(1, H), pl.ds(W + 1, 1), :] = x3d[:, W - 2:W - 1, :]  # right col
    pad_ref[pl.ds(0, 1), pl.ds(0, 1), :] = x3d[1:2, 1:2, :]          # corners
    pad_ref[pl.ds(0, 1), pl.ds(W + 1, 1), :] = x3d[1:2, W - 2:W - 1, :]
    pad_ref[pl.ds(H + 1, 1), pl.ds(0, 1), :] = x3d[H - 2:H - 1, 1:2, :]
    pad_ref[pl.ds(H + 1, 1), pl.ds(W + 1, 1), :] = x3d[H - 2:H - 1, W - 2:W - 1, :]


def _conv3x3_from_pad(pad_ref, w_ref, row0, H, W, C):
    """3x3 conv as 3 K-packed MXU matmuls (taps packed along kx).

    pad_ref: (H+2, W+2, C) f32 reflection-padded map in VMEM.
    w_ref:   (6, 3*Cin, Cout) bf16; rows row0..row0+2 hold this conv's ky taps,
             with the per-row contraction index = kx*Cin + cin.
    Returns (H*W, C) float32.
    """
    HW = H * W
    full = pad_ref[...]                                           # (Hp, Wp, C) f32
    # im2col over width: the three kx-shifted slabs packed along the channel
    # (contraction) axis -> one bf16 LHS reused for all three ky matmuls.
    lhs_full = jnp.concatenate(
        [full[:, 0:W, :], full[:, 1:1 + W, :], full[:, 2:2 + W, :]],
        axis=-1).astype(jnp.bfloat16)                             # (Hp, W, 3C)
    acc = None
    for ky in range(3):
        lhs = lhs_full[ky:ky + H].reshape(HW, 3 * C)              # (HW, 3C) bf16
        d = jnp.dot(lhs, w_ref[row0 + ky],                        # bf16 x bf16
                    preferred_element_type=jnp.float32)           # f32 accumulate
        acc = d if acc is None else acc + d
    return acc


def _res_block_kernel(x_ref, w_ref, aff_ref, out_ref, xpad_s, h1pad_s, *, H, W, C):
    HW = H * W
    x0 = x_ref[0]                                   # (H, W, C) f32 (= residual)

    aff = aff_ref[...]                              # (4, C): g1, be1, g2, be2
    g1, be1, g2, be2 = aff[0:1], aff[1:2], aff[2:3], aff[3:4]
    # conv biases cancel exactly under InstanceNorm -> folded away host-side.

    # ---- stage 1: reflect-pad -> conv3x3 -> IN(affine) -> ReLU ------------
    _store_reflect_pad(xpad_s, x0, H, W)
    y1 = _conv3x3_from_pad(xpad_s, w_ref, 0, H, W, C)             # (HW, C) f32
    h1 = _instance_norm_affine(y1, g1, be1, relu=True)            # (HW, C) f32

    # ---- stage 2: pad h1 directly -> conv3x3 -> IN -> + residual ----------
    _store_reflect_pad(h1pad_s, h1.reshape(H, W, C), H, W)
    y2 = _conv3x3_from_pad(h1pad_s, w_ref, 3, H, W, C)            # (HW, C) f32
    out = _instance_norm_affine(y2, g2, be2, relu=False) + x0.reshape(HW, C)

    out_ref[0] = out.astype(out_ref.dtype)


def _vmem_limit_bytes(H, W, C):
    """Estimate the per-step VMEM working set from the actual shapes."""
    Hp, Wp = H + 2, W + 2
    HW = H * W
    c_lane = ((C + 127) // 128) * 128               # lane padding for narrow C
    blk = HW * c_lane * 4                           # one full-map f32 block
    pad = Hp * Wp * c_lane * 4                      # one padded f32 scratch
    wts = 6 * 3 * C * c_lane * 2                    # packed bf16 weights
    est = (2 * blk + 2 * blk                        # double-buffered in/out
           + 2 * pad                                # two pad scratches
           + 2 * wts                                # double-buffered weights
           + 8 * blk)                               # live intermediates (lhs/y/h1/out)
    return int(min(max(2 * est, 16 * 1024 * 1024), 64 * 1024 * 1024))


def res_block_forward(x, params):
    """x: (N, C, H, W) float32 -> (N, C, H, W)."""
    N, C, H, W = x.shape
    assert H >= 2 and W >= 2, "ReflectionPad2d(1) requires H, W >= 2"
    HW = H * W
    Hp, Wp = H + 2, W + 2
    w1, b1, g1, be1, w2, b2, g2, be2 = params
    del b1, b2  # conv bias is a no-op under InstanceNorm (cancels exactly)

    # Host-side prep: NCHW -> NHWC (one pass) + tiny weight/param packing.
    x_nhwc = jnp.transpose(x, (0, 2, 3, 1))                       # (N, H, W, C)

    def pack_taps(w):
        # (Cout, Cin, 3, 3) -> (3, 3*Cin, Cout); row index within ky = kx*Cin+cin
        return jnp.transpose(w, (2, 3, 1, 0)).reshape(3, 3 * C, C)

    wall = jnp.concatenate([pack_taps(w1), pack_taps(w2)],
                           axis=0).astype(jnp.bfloat16)           # (6, 3C, C)
    aff = jnp.stack([g1, be1, g2, be2], axis=0).astype(jnp.float32)  # (4, C)

    kernel = functools.partial(_res_block_kernel, H=H, W=W, C=C)
    out = pl.pallas_call(
        kernel,
        out_shape=jax.ShapeDtypeStruct((N, HW, C), jnp.float32),
        grid_spec=pltpu.PrefetchScalarGridSpec(
            num_scalar_prefetch=0,
            grid=(N,),
            in_specs=[
                pl.BlockSpec((1, H, W, C), lambda n: (n, 0, 0, 0)),   # feature map
                pl.BlockSpec((6, 3 * C, C), lambda n: (0, 0, 0)),     # both convs
                pl.BlockSpec((4, C), lambda n: (0, 0)),               # gamma/beta
            ],
            out_specs=pl.BlockSpec((1, HW, C), lambda n: (n, 0, 0)),
            scratch_shapes=[
                pltpu.VMEM((Hp, Wp, C), jnp.float32),   # padded input
                pltpu.VMEM((Hp, Wp, C), jnp.float32),   # padded intermediate h1
            ],
        ),
        compiler_params=pltpu.CompilerParams(
            dimension_semantics=("parallel",),          # shards over TCs when N>=2
            vmem_limit_bytes=_vmem_limit_bytes(H, W, C),
        ),
    )(x_nhwc, wall, aff)
    return jnp.transpose(out.reshape(N, H, W, C), (0, 3, 1, 2))


def ref_forward(x, params):
    """Pure-JAX reference of the PyTorch forward (for verification)."""
    w1, b1, g1, be1, w2, b2, g2, be2 = params

    def conv(inp, w, b):
        xp = jnp.pad(inp, ((0, 0), (0, 0), (1, 1), (1, 1)), mode="reflect")
        y = lax.conv_general_dilated(xp, w, (1, 1), "VALID",
                                     dimension_numbers=("NCHW", "OIHW", "NCHW"))
        return y + b[None, :, None, None]

    def inorm(y, g, be):
        mean = y.mean(axis=(2, 3), keepdims=True)
        var = ((y - mean) ** 2).mean(axis=(2, 3), keepdims=True)
        return (y - mean) * lax.rsqrt(var + EPS) * g[None, :, None, None] \
            + be[None, :, None, None]

    h = jax.nn.relu(inorm(conv(x, w1, b1), g1, be1))
    return inorm(conv(h, w2, b2), g2, be2) + x


if __name__ == "__main__":
    N, C, H, W = 2, 4, 16, 16
    key = jax.random.PRNGKey(0)
    ks = jax.random.split(key, 9)

    x = jax.random.normal(ks[0], (N, C, H, W), dtype=jnp.float32)
    w1 = 0.1 * jax.random.normal(ks[1], (C, C, 3, 3), dtype=jnp.float32)
    b1 = 0.1 * jax.random.normal(ks[2], (C,), dtype=jnp.float32)
    g1 = 1.0 + 0.1 * jax.random.normal(ks[3], (C,), dtype=jnp.float32)
    be1 = 0.1 * jax.random.normal(ks[4], (C,), dtype=jnp.float32)
    w2 = 0.1 * jax.random.normal(ks[5], (C, C, 3, 3), dtype=jnp.float32)
    b2 = 0.1 * jax.random.normal(ks[6], (C,), dtype=jnp.float32)
    g2 = 1.0 + 0.1 * jax.random.normal(ks[7], (C,), dtype=jnp.float32)
    be2 = 0.1 * jax.random.normal(ks[8], (C,), dtype=jnp.float32)
    params = (w1, b1, g1, be1, w2, b2, g2, be2)

    out = jax.block_until_ready(res_block_forward(x, params))
    ref = jax.block_until_ready(ref_forward(x, params))

    assert out.shape == (N, C, H, W)
    # Tolerance relaxed vs. the f32 version: conv operands are bf16 on the MXU
    # (accumulation stays f32), which perturbs results at the ~1e-2 level.
    assert jnp.allclose(out, ref, atol=5e-2, rtol=5e-2), \
        f"max err {jnp.max(jnp.abs(out - ref))}"
    print("KERNEL_OK")
</pallas_src>

<mosaic_0001>
module attributes {stable_mosaic.version = 11 : i64} {
  func.func @_res_block_kernel(%arg0: i32, %arg1: memref<1x16x16x4xf32, #tpu.memory_space<vmem>>, %arg2: memref<6x12x4xbf16, #tpu.memory_space<vmem>>, %arg3: memref<4x4xf32, #tpu.memory_space<vmem>>, %arg4: memref<1x256x4xf32, #tpu.memory_space<vmem>>, %arg5: memref<18x18x4xf32, #tpu.memory_space<vmem>>, %arg6: memref<18x18x4xf32, #tpu.memory_space<vmem>>) attributes {dimension_semantics = [#tpu.dimension_semantics<parallel>], iteration_bounds = array<i64: 2>, scalar_prefetch = 0 : i64, scratch_operands = 2 : i64, tpu.core_type = #tpu.core_type<tc>, window_params = [{transform_indices = @transform_0, window_bounds = array<i64: 1, 16, 16, 4>}, {pipeline_mode = #tpu.pipeline_mode<synchronous>, transform_indices = @transform_1, window_bounds = array<i64: 6, 12, 4>}, {pipeline_mode = #tpu.pipeline_mode<synchronous>, transform_indices = @transform_2, window_bounds = array<i64: 4, 4>}, {transform_indices = @transform_3, window_bounds = array<i64: 1, 256, 4>}]} {
    %c0 = arith.constant 0 : index
    %c0_0 = arith.constant 0 : index
    %c0_1 = arith.constant 0 : index
    %c0_2 = arith.constant 0 : index
    %0 = vector.load %arg1[%c0, %c0_0, %c0_1, %c0_2] : memref<1x16x16x4xf32, #tpu.memory_space<vmem>>, vector<1x16x16x4xf32>
    %1 = vector.shape_cast %0 : vector<1x16x16x4xf32> to vector<16x16x4xf32>
    %c0_3 = arith.constant 0 : index
    %c0_4 = arith.constant 0 : index
    %2 = vector.load %arg3[%c0_3, %c0_4] : memref<4x4xf32, #tpu.memory_space<vmem>>, vector<4x4xf32>
    %3 = vector.extract_strided_slice %2 {offsets = [0, 0], sizes = [1, 4], strides = [1, 1]} : vector<4x4xf32> to vector<1x4xf32>
    %4 = vector.extract_strided_slice %2 {offsets = [1, 0], sizes = [1, 4], strides = [1, 1]} : vector<4x4xf32> to vector<1x4xf32>
    %5 = vector.extract_strided_slice %2 {offsets = [2, 0], sizes = [1, 4], strides = [1, 1]} : vector<4x4xf32> to vector<1x4xf32>
    %6 = vector.extract_strided_slice %2 {offsets = [3, 0], sizes = [1, 4], strides = [1, 1]} : vector<4x4xf32> to vector<1x4xf32>
    %c1 = arith.constant 1 : index
    %c1_5 = arith.constant 1 : index
    %c0_6 = arith.constant 0 : index
    %7 = vector.load %arg5[%c1, %c1_5, %c0_6] : memref<18x18x4xf32, #tpu.memory_space<vmem>>, vector<16x16x4xf32>
    tpu.vector_store %arg5[%c1, %c1_5, %c0_6], %1 {strides = array<i32>} : memref<18x18x4xf32, #tpu.memory_space<vmem>>, vector<16x16x4xf32>,
    %8 = vector.extract_strided_slice %1 {offsets = [1, 0, 0], sizes = [1, 16, 4], strides = [1, 1, 1]} : vector<16x16x4xf32> to vector<1x16x4xf32>
    %c0_7 = arith.constant 0 : index
    %c1_8 = arith.constant 1 : index
    %c0_9 = arith.constant 0 : index
    %9 = vector.load %arg5[%c0_7, %c1_8, %c0_9] : memref<18x18x4xf32, #tpu.memory_space<vmem>>, vector<1x16x4xf32>
    tpu.vector_store %arg5[%c0_7, %c1_8, %c0_9], %8 {strides = array<i32>} : memref<18x18x4xf32, #tpu.memory_space<vmem>>, vector<1x16x4xf32>,
    %10 = vector.extract_strided_slice %1 {offsets = [14, 0, 0], sizes = [1, 16, 4], strides = [1, 1, 1]} : vector<16x16x4xf32> to vector<1x16x4xf32>
    %c17 = arith.constant 17 : index
    %c1_10 = arith.constant 1 : index
    %c0_11 = arith.constant 0 : index
    %11 = vector.load %arg5[%c17, %c1_10, %c0_11] : memref<18x18x4xf32, #tpu.memory_space<vmem>>, vector<1x16x4xf32>
    tpu.vector_store %arg5[%c17, %c1_10, %c0_11], %10 {strides = array<i32>} : memref<18x18x4xf32, #tpu.memory_space<vmem>>, vector<1x16x4xf32>,
    %12 = vector.extract_strided_slice %1 {offsets = [0, 1, 0], sizes = [16, 1, 4], strides = [1, 1, 1]} : vector<16x16x4xf32> to vector<16x1x4xf32>
    %c1_12 = arith.constant 1 : index
    %c0_13 = arith.constant 0 : index
    %c0_14 = arith.constant 0 : index
    %13 = vector.load %arg5[%c1_12, %c0_13, %c0_14] : memref<18x18x4xf32, #tpu.memory_space<vmem>>, vector<16x1x4xf32>
    tpu.vector_store %arg5[%c1_12, %c0_13, %c0_14], %12 {strides = array<i32>} : memref<18x18x4xf32, #tpu.memory_space<vmem>>, vector<16x1x4xf32>,
    %14 = vector.extract_strided_slice %1 {offsets = [0, 14, 0], sizes = [16, 1, 4], strides = [1, 1, 1]} : vector<16x16x4xf32> to vector<16x1x4xf32>
    %c1_15 = arith.constant 1 : index
    %c17_16 = arith.constant 17 : index
    %c0_17 = arith.constant 0 : index
    %15 = vector.load %arg5[%c1_15, %c17_16, %c0_17] : memref<18x18x4xf32, #tpu.memory_space<vmem>>, vector<16x1x4xf32>
    tpu.vector_store %arg5[%c1_15, %c17_16, %c0_17], %14 {strides = array<i32>} : memref<18x18x4xf32, #tpu.memory_space<vmem>>, vector<16x1x4xf32>,
    %16 = vector.extract_strided_slice %1 {offsets = [1, 1, 0], sizes = [1, 1, 4], strides = [1, 1, 1]} : vector<16x16x4xf32> to vector<1x1x4xf32>
    %c0_18 = arith.constant 0 : index
    %c0_19 = arith.constant 0 : index
    %c0_20 = arith.constant 0 : index
    %17 = vector.load %arg5[%c0_18, %c0_19, %c0_20] : memref<18x18x4xf32, #tpu.memory_space<vmem>>, vector<1x1x4xf32>
    tpu.vector_store %arg5[%c0_18, %c0_19, %c0_20], %16 {strides = array<i32>} : memref<18x18x4xf32, #tpu.memory_space<vmem>>, vector<1x1x4xf32>,
    %18 = vector.extract_strided_slice %1 {offsets = [1, 14, 0], sizes = [1, 1, 4], strides = [1, 1, 1]} : vector<16x16x4xf32> to vector<1x1x4xf32>
    %c0_21 = arith.constant 0 : index
    %c17_22 = arith.constant 17 : index
    %c0_23 = arith.constant 0 : index
    %19 = vector.load %arg5[%c0_21, %c17_22, %c0_23] : memref<18x18x4xf32, #tpu.memory_space<vmem>>, vector<1x1x4xf32>
    tpu.vector_store %arg5[%c0_21, %c17_22, %c0_23], %18 {strides = array<i32>} : memref<18x18x4xf32, #tpu.memory_space<vmem>>, vector<1x1x4xf32>,
    %20 = vector.extract_strided_slice %1 {offsets = [14, 1, 0], sizes = [1, 1, 4], strides = [1, 1, 1]} : vector<16x16x4xf32> to vector<1x1x4xf32>
    %c17_24 = arith.constant 17 : index
    %c0_25 = arith.constant 0 : index
    %c0_26 = arith.constant 0 : index
    %21 = vector.load %arg5[%c17_24, %c0_25, %c0_26] : memref<18x18x4xf32, #tpu.memory_space<vmem>>, vector<1x1x4xf32>
    tpu.vector_store %arg5[%c17_24, %c0_25, %c0_26], %20 {strides = array<i32>} : memref<18x18x4xf32, #tpu.memory_space<vmem>>, vector<1x1x4xf32>,
    %22 = vector.extract_strided_slice %1 {offsets = [14, 14, 0], sizes = [1, 1, 4], strides = [1, 1, 1]} : vector<16x16x4xf32> to vector<1x1x4xf32>
    %c17_27 = arith.constant 17 : index
    %c17_28 = arith.constant 17 : index
    %c0_29 = arith.constant 0 : index
    %23 = vector.load %arg5[%c17_27, %c17_28, %c0_29] : memref<18x18x4xf32, #tpu.memory_space<vmem>>, vector<1x1x4xf32>
    tpu.vector_store %arg5[%c17_27, %c17_28, %c0_29], %22 {strides = array<i32>} : memref<18x18x4xf32, #tpu.memory_space<vmem>>, vector<1x1x4xf32>,
    %c0_30 = arith.constant 0 : index
    %c0_31 = arith.constant 0 : index
    %c0_32 = arith.constant 0 : index
    %24 = vector.load %arg5[%c0_30, %c0_31, %c0_32] : memref<18x18x4xf32, #tpu.memory_space<vmem>>, vector<18x18x4xf32>
    %25 = vector.extract_strided_slice %24 {offsets = [0, 0, 0], sizes = [18, 16, 4], strides = [1, 1, 1]} : vector<18x18x4xf32> to vector<18x16x4xf32>
    %26 = vector.extract_strided_slice %24 {offsets = [0, 1, 0], sizes = [18, 16, 4], strides = [1, 1, 1]} : vector<18x18x4xf32> to vector<18x16x4xf32>
    %27 = vector.extract_strided_slice %24 {offsets = [0, 2, 0], sizes = [18, 16, 4], strides = [1, 1, 1]} : vector<18x18x4xf32> to vector<18x16x4xf32>
    %28 = tpu.concatenate %25, %26, %27 in 2 : vector<18x16x4xf32>, vector<18x16x4xf32>, vector<18x16x4xf32> -> vector<18x16x12xf32>
    %29 = arith.truncf %28 : vector<18x16x12xf32> to vector<18x16x12xbf16>
    %30 = vector.extract_strided_slice %29 {offsets = [0, 0, 0], sizes = [16, 16, 12], strides = [1, 1, 1]} : vector<18x16x12xbf16> to vector<16x16x12xbf16>
    %31 = vector.shape_cast %30 : vector<16x16x12xbf16> to vector<256x12xbf16>
    %c0_33 = arith.constant 0 : index
    %c0_34 = arith.constant 0 : index
    %c0_35 = arith.constant 0 : index
    %32 = vector.load %arg2[%c0_33, %c0_34, %c0_35] : memref<6x12x4xbf16, #tpu.memory_space<vmem>>, vector<1x12x4xbf16>
    %33 = vector.shape_cast %32 : vector<1x12x4xbf16> to vector<12x4xbf16>
    %cst = arith.constant dense<0.000000e+00> : vector<256x4xf32>
    %34 = tpu.matmul %31, %33, %cst {dimension_numbers = #tpu.dot_dimension_numbers<[1], [0], [0], [1], [0, 0, 1, 1], [], []>} : vector<256x12xbf16>, vector<12x4xbf16>, vector<256x4xf32> -> vector<256x4xf32>
    %35 = vector.extract_strided_slice %29 {offsets = [1, 0, 0], sizes = [16, 16, 12], strides = [1, 1, 1]} : vector<18x16x12xbf16> to vector<16x16x12xbf16>
    %36 = vector.shape_cast %35 : vector<16x16x12xbf16> to vector<256x12xbf16>
    %c1_36 = arith.constant 1 : index
    %c0_37 = arith.constant 0 : index
    %c0_38 = arith.constant 0 : index
    %37 = vector.load %arg2[%c1_36, %c0_37, %c0_38] : memref<6x12x4xbf16, #tpu.memory_space<vmem>>, vector<1x12x4xbf16>
    %38 = vector.shape_cast %37 : vector<1x12x4xbf16> to vector<12x4xbf16>
    %cst_39 = arith.constant dense<0.000000e+00> : vector<256x4xf32>
    %39 = tpu.matmul %36, %38, %cst_39 {dimension_numbers = #tpu.dot_dimension_numbers<[1], [0], [0], [1], [0, 0, 1, 1], [], []>} : vector<256x12xbf16>, vector<12x4xbf16>, vector<256x4xf32> -> vector<256x4xf32>
    %40 = arith.addf %34, %39 : vector<256x4xf32>
    %41 = vector.extract_strided_slice %29 {offsets = [2, 0, 0], sizes = [16, 16, 12], strides = [1, 1, 1]} : vector<18x16x12xbf16> to vector<16x16x12xbf16>
    %42 = vector.shape_cast %41 : vector<16x16x12xbf16> to vector<256x12xbf16>
    %c2 = arith.constant 2 : index
    %c0_40 = arith.constant 0 : index
    %c0_41 = arith.constant 0 : index
    %43 = vector.load %arg2[%c2, %c0_40, %c0_41] : memref<6x12x4xbf16, #tpu.memory_space<vmem>>, vector<1x12x4xbf16>
    %44 = vector.shape_cast %43 : vector<1x12x4xbf16> to vector<12x4xbf16>
    %cst_42 = arith.constant dense<0.000000e+00> : vector<256x4xf32>
    %45 = tpu.matmul %42, %44, %cst_42 {dimension_numbers = #tpu.dot_dimension_numbers<[1], [0], [0], [1], [0, 0, 1, 1], [], []>} : vector<256x12xbf16>, vector<12x4xbf16>, vector<256x4xf32> -> vector<256x4xf32>
    %46 = arith.addf %40, %45 : vector<256x4xf32>
    %cst_43 = arith.constant dense<0.000000e+00> : vector<4xf32>
    %47 = vector.multi_reduction <add>, %46, %cst_43 [0] : vector<256x4xf32> to vector<4xf32>
    %48 = vector.shape_cast %47 : vector<4xf32> to vector<1x4xf32>
    %cst_44 = arith.constant 3.906250e-03 : f32
    %49 = vector.broadcast %cst_44 : f32 to vector<1x4xf32>
    %50 = arith.mulf %48, %49 : vector<1x4xf32>
    %51 = arith.mulf %46, %46 : vector<256x4xf32>
    %cst_45 = arith.constant dense<0.000000e+00> : vector<4xf32>
    %52 = vector.multi_reduction <add>, %51, %cst_45 [0] : vector<256x4xf32> to vector<4xf32>
    %53 = vector.shape_cast %52 : vector<4xf32> to vector<1x4xf32>
    %cst_46 = arith.constant 3.906250e-03 : f32
    %54 = vector.broadcast %cst_46 : f32 to vector<1x4xf32>
    %55 = arith.mulf %53, %54 : vector<1x4xf32>
    %56 = arith.mulf %50, %50 : vector<1x4xf32>
    %57 = arith.subf %55, %56 : vector<1x4xf32>
    %cst_47 = arith.constant 0.000000e+00 : f32
    %58 = vector.broadcast %cst_47 : f32 to vector<1x4xf32>
    %59 = arith.maximumf %57, %58 : vector<1x4xf32>
    %cst_48 = arith.constant 9.99999974E-6 : f32
    %60 = vector.broadcast %cst_48 : f32 to vector<1x4xf32>
    %61 = arith.addf %59, %60 : vector<1x4xf32>
    %62 = math.rsqrt %61 : vector<1x4xf32>
    %63 = arith.mulf %3, %62 : vector<1x4xf32>
    %64 = arith.mulf %50, %63 : vector<1x4xf32>
    %65 = arith.subf %4, %64 : vector<1x4xf32>
    %66 = vector.broadcast %63 : vector<1x4xf32> to vector<256x4xf32>
    %67 = arith.mulf %46, %66 : vector<256x4xf32>
    %68 = vector.broadcast %65 : vector<1x4xf32> to vector<256x4xf32>
    %69 = arith.addf %67, %68 : vector<256x4xf32>
    %cst_49 = arith.constant 0.000000e+00 : f32
    %70 = vector.broadcast %cst_49 : f32 to vector<256x4xf32>
    %71 = arith.maximumf %69, %70 : vector<256x4xf32>
    %72 = vector.shape_cast %71 : vector<256x4xf32> to vector<16x16x4xf32>
    %c1_50 = arith.constant 1 : index
    %c1_51 = arith.constant 1 : index
    %c0_52 = arith.constant 0 : index
    %73 = vector.load %arg6[%c1_50, %c1_51, %c0_52] : memref<18x18x4xf32, #tpu.memory_space<vmem>>, vector<16x16x4xf32>
    tpu.vector_store %arg6[%c1_50, %c1_51, %c0_52], %72 {strides = array<i32>} : memref<18x18x4xf32, #tpu.memory_space<vmem>>, vector<16x16x4xf32>,
    %74 = vector.extract_strided_slice %72 {offsets = [1, 0, 0], sizes = [1, 16, 4], strides = [1, 1, 1]} : vector<16x16x4xf32> to vector<1x16x4xf32>
    %c0_53 = arith.constant 0 : index
    %c1_54 = arith.constant 1 : index
    %c0_55 = arith.constant 0 : index
    %75 = vector.load %arg6[%c0_53, %c1_54, %c0_55] : memref<18x18x4xf32, #tpu.memory_space<vmem>>, vector<1x16x4xf32>
    tpu.vector_store %arg6[%c0_53, %c1_54, %c0_55], %74 {strides = array<i32>} : memref<18x18x4xf32, #tpu.memory_space<vmem>>, vector<1x16x4xf32>,
    %76 = vector.extract_strided_slice %72 {offsets = [14, 0, 0], sizes = [1, 16, 4], strides = [1, 1, 1]} : vector<16x16x4xf32> to vector<1x16x4xf32>
    %c17_56 = arith.constant 17 : index
    %c1_57 = arith.constant 1 : index
    %c0_58 = arith.constant 0 : index
    %77 = vector.load %arg6[%c17_56, %c1_57, %c0_58] : memref<18x18x4xf32, #tpu.memory_space<vmem>>, vector<1x16x4xf32>
    tpu.vector_store %arg6[%c17_56, %c1_57, %c0_58], %76 {strides = array<i32>} : memref<18x18x4xf32, #tpu.memory_space<vmem>>, vector<1x16x4xf32>,
    %78 = vector.extract_strided_slice %72 {offsets = [0, 1, 0], sizes = [16, 1, 4], strides = [1, 1, 1]} : vector<16x16x4xf32> to vector<16x1x4xf32>
    %c1_59 = arith.constant 1 : index
    %c0_60 = arith.constant 0 : index
    %c0_61 = arith.constant 0 : index
    %79 = vector.load %arg6[%c1_59, %c0_60, %c0_61] : memref<18x18x4xf32, #tpu.memory_space<vmem>>, vector<16x1x4xf32>
    tpu.vector_store %arg6[%c1_59, %c0_60, %c0_61], %78 {strides = array<i32>} : memref<18x18x4xf32, #tpu.memory_space<vmem>>, vector<16x1x4xf32>,
    %80 = vector.extract_strided_slice %72 {offsets = [0, 14, 0], sizes = [16, 1, 4], strides = [1, 1, 1]} : vector<16x16x4xf32> to vector<16x1x4xf32>
    %c1_62 = arith.constant 1 : index
    %c17_63 = arith.constant 17 : index
    %c0_64 = arith.constant 0 : index
    %81 = vector.load %arg6[%c1_62, %c17_63, %c0_64] : memref<18x18x4xf32, #tpu.memory_space<vmem>>, vector<16x1x4xf32>
    tpu.vector_store %arg6[%c1_62, %c17_63, %c0_64], %80 {strides = array<i32>} : memref<18x18x4xf32, #tpu.memory_space<vmem>>, vector<16x1x4xf32>,
    %82 = vector.extract_strided_slice %72 {offsets = [1, 1, 0], sizes = [1, 1, 4], strides = [1, 1, 1]} : vector<16x16x4xf32> to vector<1x1x4xf32>
    %c0_65 = arith.constant 0 : index
    %c0_66 = arith.constant 0 : index
    %c0_67 = arith.constant 0 : index
    %83 = vector.load %arg6[%c0_65, %c0_66, %c0_67] : memref<18x18x4xf32, #tpu.memory_space<vmem>>, vector<1x1x4xf32>
    tpu.vector_store %arg6[%c0_65, %c0_66, %c0_67], %82 {strides = array<i32>} : memref<18x18x4xf32, #tpu.memory_space<vmem>>, vector<1x1x4xf32>,
    %84 = vector.extract_strided_slice %72 {offsets = [1, 14, 0], sizes = [1, 1, 4], strides = [1, 1, 1]} : vector<16x16x4xf32> to vector<1x1x4xf32>
    %c0_68 = arith.constant 0 : index
    %c17_69 = arith.constant 17 : index
    %c0_70 = arith.constant 0 : index
    %85 = vector.load %arg6[%c0_68, %c17_69, %c0_70] : memref<18x18x4xf32, #tpu.memory_space<vmem>>, vector<1x1x4xf32>
    tpu.vector_store %arg6[%c0_68, %c17_69, %c0_70], %84 {strides = array<i32>} : memref<18x18x4xf32, #tpu.memory_space<vmem>>, vector<1x1x4xf32>,
    %86 = vector.extract_strided_slice %72 {offsets = [14, 1, 0], sizes = [1, 1, 4], strides = [1, 1, 1]} : vector<16x16x4xf32> to vector<1x1x4xf32>
    %c17_71 = arith.constant 17 : index
    %c0_72 = arith.constant 0 : index
    %c0_73 = arith.constant 0 : index
    %87 = vector.load %arg6[%c17_71, %c0_72, %c0_73] : memref<18x18x4xf32, #tpu.memory_space<vmem>>, vector<1x1x4xf32>
    tpu.vector_store %arg6[%c17_71, %c0_72, %c0_73], %86 {strides = array<i32>} : memref<18x18x4xf32, #tpu.memory_space<vmem>>, vector<1x1x4xf32>,
    %88 = vector.extract_strided_slice %72 {offsets = [14, 14, 0], sizes = [1, 1, 4], strides = [1, 1, 1]} : vector<16x16x4xf32> to vector<1x1x4xf32>
    %c17_74 = arith.constant 17 : index
    %c17_75 = arith.constant 17 : index
    %c0_76 = arith.constant 0 : index
    %89 = vector.load %arg6[%c17_74, %c17_75, %c0_76] : memref<18x18x4xf32, #tpu.memory_space<vmem>>, vector<1x1x4xf32>
    tpu.vector_store %arg6[%c17_74, %c17_75, %c0_76], %88 {strides = array<i32>} : memref<18x18x4xf32, #tpu.memory_space<vmem>>, vector<1x1x4xf32>,
    %c0_77 = arith.constant 0 : index
    %c0_78 = arith.constant 0 : index
    %c0_79 = arith.constant 0 : index
    %90 = vector.load %arg6[%c0_77, %c0_78, %c0_79] : memref<18x18x4xf32, #tpu.memory_space<vmem>>, vector<18x18x4xf32>
    %91 = vector.extract_strided_slice %90 {offsets = [0, 0, 0], sizes = [18, 16, 4], strides = [1, 1, 1]} : vector<18x18x4xf32> to vector<18x16x4xf32>
    %92 = vector.extract_strided_slice %90 {offsets = [0, 1, 0], sizes = [18, 16, 4], strides = [1, 1, 1]} : vector<18x18x4xf32> to vector<18x16x4xf32>
    %93 = vector.extract_strided_slice %90 {offsets = [0, 2, 0], sizes = [18, 16, 4], strides = [1, 1, 1]} : vector<18x18x4xf32> to vector<18x16x4xf32>
    %94 = tpu.concatenate %91, %92, %93 in 2 : vector<18x16x4xf32>, vector<18x16x4xf32>, vector<18x16x4xf32> -> vector<18x16x12xf32>
    %95 = arith.truncf %94 : vector<18x16x12xf32> to vector<18x16x12xbf16>
    %96 = vector.extract_strided_slice %95 {offsets = [0, 0, 0], sizes = [16, 16, 12], strides = [1, 1, 1]} : vector<18x16x12xbf16> to vector<16x16x12xbf16>
    %97 = vector.shape_cast %96 : vector<16x16x12xbf16> to vector<256x12xbf16>
    %c3 = arith.constant 3 : index
    %c0_80 = arith.constant 0 : index
    %c0_81 = arith.constant 0 : index
    %98 = vector.load %arg2[%c3, %c0_80, %c0_81] : memref<6x12x4xbf16, #tpu.memory_space<vmem>>, vector<1x12x4xbf16>
    %99 = vector.shape_cast %98 : vector<1x12x4xbf16> to vector<12x4xbf16>
    %cst_82 = arith.constant dense<0.000000e+00> : vector<256x4xf32>
    %100 = tpu.matmul %97, %99, %cst_82 {dimension_numbers = #tpu.dot_dimension_numbers<[1], [0], [0], [1], [0, 0, 1, 1], [], []>} : vector<256x12xbf16>, vector<12x4xbf16>, vector<256x4xf32> -> vector<256x4xf32>
    %101 = vector.extract_strided_slice %95 {offsets = [1, 0, 0], sizes = [16, 16, 12], strides = [1, 1, 1]} : vector<18x16x12xbf16> to vector<16x16x12xbf16>
    %102 = vector.shape_cast %101 : vector<16x16x12xbf16> to vector<256x12xbf16>
    %c4 = arith.constant 4 : index
    %c0_83 = arith.constant 0 : index
    %c0_84 = arith.constant 0 : index
    %103 = vector.load %arg2[%c4, %c0_83, %c0_84] : memref<6x12x4xbf16, #tpu.memory_space<vmem>>, vector<1x12x4xbf16>
    %104 = vector.shape_cast %103 : vector<1x12x4xbf16> to vector<12x4xbf16>
    %cst_85 = arith.constant dense<0.000000e+00> : vector<256x4xf32>
    %105 = tpu.matmul %102, %104, %cst_85 {dimension_numbers = #tpu.dot_dimension_numbers<[1], [0], [0], [1], [0, 0, 1, 1], [], []>} : vector<256x12xbf16>, vector<12x4xbf16>, vector<256x4xf32> -> vector<256x4xf32>
    %106 = arith.addf %100, %105 : vector<256x4xf32>
    %107 = vector.extract_strided_slice %95 {offsets = [2, 0, 0], sizes = [16, 16, 12], strides = [1, 1, 1]} : vector<18x16x12xbf16> to vector<16x16x12xbf16>
    %108 = vector.shape_cast %107 : vector<16x16x12xbf16> to vector<256x12xbf16>
    %c5 = arith.constant 5 : index
    %c0_86 = arith.constant 0 : index
    %c0_87 = arith.constant 0 : index
    %109 = vector.load %arg2[%c5, %c0_86, %c0_87] : memref<6x12x4xbf16, #tpu.memory_space<vmem>>, vector<1x12x4xbf16>
    %110 = vector.shape_cast %109 : vector<1x12x4xbf16> to vector<12x4xbf16>
    %cst_88 = arith.constant dense<0.000000e+00> : vector<256x4xf32>
    %111 = tpu.matmul %108, %110, %cst_88 {dimension_numbers = #tpu.dot_dimension_numbers<[1], [0], [0], [1], [0, 0, 1, 1], [], []>} : vector<256x12xbf16>, vector<12x4xbf16>, vector<256x4xf32> -> vector<256x4xf32>
    %112 = arith.addf %106, %111 : vector<256x4xf32>
    %cst_89 = arith.constant dense<0.000000e+00> : vector<4xf32>
    %113 = vector.multi_reduction <add>, %112, %cst_89 [0] : vector<256x4xf32> to vector<4xf32>
    %114 = vector.shape_cast %113 : vector<4xf32> to vector<1x4xf32>
    %cst_90 = arith.constant 3.906250e-03 : f32
    %115 = vector.broadcast %cst_90 : f32 to vector<1x4xf32>
    %116 = arith.mulf %114, %115 : vector<1x4xf32>
    %117 = arith.mulf %112, %112 : vector<256x4xf32>
    %cst_91 = arith.constant dense<0.000000e+00> : vector<4xf32>
    %118 = vector.multi_reduction <add>, %117, %cst_91 [0] : vector<256x4xf32> to vector<4xf32>
    %119 = vector.shape_cast %118 : vector<4xf32> to vector<1x4xf32>
    %cst_92 = arith.constant 3.906250e-03 : f32
    %120 = vector.broadcast %cst_92 : f32 to vector<1x4xf32>
    %121 = arith.mulf %119, %120 : vector<1x4xf32>
    %122 = arith.mulf %116, %116 : vector<1x4xf32>
    %123 = arith.subf %121, %122 : vector<1x4xf32>
    %cst_93 = arith.constant 0.000000e+00 : f32
    %124 = vector.broadcast %cst_93 : f32 to vector<1x4xf32>
    %125 = arith.maximumf %123, %124 : vector<1x4xf32>
    %cst_94 = arith.constant 9.99999974E-6 : f32
    %126 = vector.broadcast %cst_94 : f32 to vector<1x4xf32>
    %127 = arith.addf %125, %126 : vector<1x4xf32>
    %128 = math.rsqrt %127 : vector<1x4xf32>
    %129 = arith.mulf %5, %128 : vector<1x4xf32>
    %130 = arith.mulf %116, %129 : vector<1x4xf32>
    %131 = arith.subf %6, %130 : vector<1x4xf32>
    %132 = vector.broadcast %129 : vector<1x4xf32> to vector<256x4xf32>
    %133 = arith.mulf %112, %132 : vector<256x4xf32>
    %134 = vector.broadcast %131 : vector<1x4xf32> to vector<256x4xf32>
    %135 = arith.addf %133, %134 : vector<256x4xf32>
    %136 = vector.shape_cast %1 : vector<16x16x4xf32> to vector<256x4xf32>
    %137 = arith.addf %135, %136 : vector<256x4xf32>
    %c0_95 = arith.constant 0 : index
    %c0_96 = arith.constant 0 : index
    %c0_97 = arith.constant 0 : index
    %138 = vector.load %arg4[%c0_95, %c0_96, %c0_97] : memref<1x256x4xf32, #tpu.memory_space<vmem>>, vector<1x256x4xf32>
    %139 = vector.shape_cast %138 : vector<1x256x4xf32> to vector<256x4xf32>
    %140 = vector.shape_cast %137 : vector<256x4xf32> to vector<1x256x4xf32>
    tpu.vector_store %arg4[%c0_95, %c0_96, %c0_97], %140 {strides = array<i32>} : memref<1x256x4xf32, #tpu.memory_space<vmem>>, vector<1x256x4xf32>,
    return
  }
  func.func @transform_0(%arg0: i32) -> (i32, i32, i32, i32) {
    %c0_i32 = arith.constant 0 : i32
    %c0_i32_0 = arith.constant 0 : i32
    %c0_i32_1 = arith.constant 0 : i32
    %c0_i32_2 = arith.constant 0 : i32
    return %arg0, %c0_i32, %c0_i32_0, %c0_i32_1 : i32, i32, i32, i32
  }
  func.func @transform_1(%arg0: i32) -> (i32, i32, i32) {
    %c0_i32 = arith.constant 0 : i32
    %c0_i32_0 = arith.constant 0 : i32
    %c0_i32_1 = arith.constant 0 : i32
    %c0_i32_2 = arith.constant 0 : i32
    return %c0_i32, %c0_i32_0, %c0_i32_1 : i32, i32, i32
  }
  func.func @transform_2(%arg0: i32) -> (i32, i32) {
    %c0_i32 = arith.constant 0 : i32
    %c0_i32_0 = arith.constant 0 : i32
    %c0_i32_1 = arith.constant 0 : i32
    return %c0_i32, %c0_i32_0 : i32, i32
  }
  func.func @transform_3(%arg0: i32) -> (i32, i32, i32) {
    %c0_i32 = arith.constant 0 : i32
    %c0_i32_0 = arith.constant 0 : i32
    %c0_i32_1 = arith.constant 0 : i32
    return %arg0, %c0_i32, %c0_i32_0 : i32, i32, i32
  }
}

</mosaic_0001>

<llo_original>
// kernel: tpu_custom_call.1
$region0: #{tpu_custom_call.1}
  #allocation0 [shape = 'u32[]', space=smem, size = 0x4, offset = 0x4, fixed_abs, tag = 'smem constant byte address 0x4 - core index']
  #allocation1 [shape = 'u32[72,128]{1,0:T(1,128)}', space=vmem, size = 0x9000, scoped, tag = 'internal scratch']
  #allocation2 [shape = 'f32[18,18,4]{2,1,0:T(8,128)}', space=vmem, size = 0x36000, scoped, tag = 'scratch operand']
  #allocation3 [shape = 'f32[18,18,4]{2,1,0:T(8,128)}', space=vmem, size = 0x36000, scoped, tag = 'scratch operand']
  %s0 = inlined_call_operand.vmem [shape: f32[2,16,16,4], index: 0, kind: input, shape index: {}]
  %s1 = inlined_call_operand.vmem [shape: bf16[6,12,4], index: 1, kind: input, shape index: {}]
  %s2 = inlined_call_operand.vmem [shape: f32[4,4], index: 2, kind: input, shape index: {}]
  %s3 = inlined_call_operand.vmem [shape: f32[2,256,4], index: 3, kind: output, shape index: {}]
  %s4 = sld [smem:[#allocation0]]
  $region45: #{tpu_custom_call.1} parent=0
    _
  %s6 = ssub.s32 1, %s4
  %s7 = scalar_select 0, %s6, %s4
  loop: start=0, step=1, limit=4
  $region2: #{tpu_custom_call.1} parent=0 // loop_pre_header
    _
  $region3: #{tpu_custom_call.1} parent=0 // loop_header
    %s9 = sphi 0, %s13
    %p10 = scmp.ge.s32.totalorder %s9, 4
    %s19 = sphi 0, %s21
    %s22 = sphi 0, %s19
    %s23 = sphi 0, %s22
    %s39 = sphi 0, %s23
    %s43 = sphi 0, %s43
    %s45 = sphi 0, %s43
    %s46 = sphi 0, %s45
    %s60 = sphi 0, %s46
    %s64 = sphi 0, %s64
    %s66 = sphi 0, %s64
    %s67 = sphi 0, %s66
    %s81 = sphi 0, %s67
    %s87 = sphi 0, %s89
    %s90 = sphi 0, %s87
    %s91 = sphi 0, %s90
    %s107 = sphi 0, %s91
  $region4: #{tpu_custom_call.1} parent=0 // loop_header_branch
    %12 = sbr.rel (%p10) target = $region8
  $region5: #{tpu_custom_call.1} parent=0 // loop_body
    %s14 = ssub.s32 %s9, 1
    %s15 = ssub.s32 %s9, 2
    %s16 = sadd.s32 %s9, 1
    %s17 = ssub.s32 %s9, %s16
    %p18 = scmp.eq.s32.totalorder %s17, 0
    %s20 = sadd.s32 %s19, 1
    %s21 = scalar_select %p18, %s19, %s20
    %p24 = pneg %p18
    %p25 = scmp.eq.s32.totalorder %s9, 1
    %p26 = por %p24, %p25
    %p27 = scmp.ne.s32.totalorder %s19, %s22
    %p28 = scmp.eq.s32.totalorder %s9, 0
    %p29 = por %p27, %p28
    %p30 = scmp.ne.s32.totalorder %s19, %s22
    %p31 = scmp.eq.s32.totalorder %s14, 1
    %p32 = por %p30, %p31
    %p33 = scmp.ne.s32.totalorder %s22, %s23
    %p34 = scmp.eq.s32.totalorder %s14, 0
    %p35 = por %p33, %p34
    %p36 = scmp.ne.s32.totalorder %s22, %s23
    %p37 = scmp.eq.s32.totalorder %s15, 1
    %p38 = por %p36, %p37
    %p40 = scmp.ne.s32.totalorder %s23, %s39
    %p41 = scmp.eq.s32.totalorder %s15, 0
    %p42 = por %p40, %p41
    %s44 = sadd.s32 %s43, 1
    %p47 = scmp.eq.s32.totalorder %s9, 1
    %p48 = scmp.ne.s32.totalorder %s43, %s45
    %p49 = scmp.eq.s32.totalorder %s9, 0
    %p50 = por %p48, %p49
    %p51 = scmp.ne.s32.totalorder %s43, %s45
    %p52 = scmp.eq.s32.totalorder %s14, 1
    %p53 = por %p51, %p52
    %p54 = scmp.ne.s32.totalorder %s45, %s46
    %p55 = scmp.eq.s32.totalorder %s14, 0
    %p56 = por %p54, %p55
    %p57 = scmp.ne.s32.totalorder %s45, %s46
    %p58 = scmp.eq.s32.totalorder %s15, 1
    %p59 = por %p57, %p58
    %p61 = scmp.ne.s32.totalorder %s46, %s60
    %p62 = scmp.eq.s32.totalorder %s15, 0
    %p63 = por %p61, %p62
    %s65 = sadd.s32 %s64, 1
    %p68 = scmp.eq.s32.totalorder %s9, 1
    %p69 = scmp.ne.s32.totalorder %s64, %s66
    %p70 = scmp.eq.s32.totalorder %s9, 0
    %p71 = por %p69, %p70
    %p72 = scmp.ne.s32.totalorder %s64, %s66
    %p73 = scmp.eq.s32.totalorder %s14, 1
    %p74 = por %p72, %p73
    %p75 = scmp.ne.s32.totalorder %s66, %s67
    %p76 = scmp.eq.s32.totalorder %s14, 0
    %p77 = por %p75, %p76
    %p78 = scmp.ne.s32.totalorder %s66, %s67
    %p79 = scmp.eq.s32.totalorder %s15, 1
    %p80 = por %p78, %p79
    %p82 = scmp.ne.s32.totalorder %s67, %s81
    %p83 = scmp.eq.s32.totalorder %s15, 0
    %p84 = por %p82, %p83
    %s85 = ssub.s32 %s9, %s16
    %p86 = scmp.eq.s32.totalorder %s85, 0
    %s88 = sadd.s32 %s87, 1
    %s89 = scalar_select %p86, %s87, %s88
    %p92 = pneg %p86
    %p93 = scmp.eq.s32.totalorder %s9, 1
    %p94 = por %p92, %p93
    %p95 = scmp.ne.s32.totalorder %s87, %s90
    %p96 = scmp.eq.s32.totalorder %s9, 0
    %p97 = por %p95, %p96
    %p98 = scmp.ne.s32.totalorder %s87, %s90
    %p99 = scmp.eq.s32.totalorder %s14, 1
    %p100 = por %p98, %p99
    %p101 = scmp.ne.s32.totalorder %s90, %s91
    %p102 = scmp.eq.s32.totalorder %s14, 0
    %p103 = por %p101, %p102
    %p104 = scmp.ne.s32.totalorder %s90, %s91
    %p105 = scmp.eq.s32.totalorder %s15, 1
    %p106 = por %p104, %p105
    %p108 = scmp.ne.s32.totalorder %s91, %s107
    %p109 = scmp.eq.s32.totalorder %s15, 0
    %p110 = por %p108, %p109
    %p111 = scmp.le.s32.totalorder 1, %s9
    %p112 = scmp.lt.s32.totalorder %s9, 3
    %p113 = pnand %p111, %p112
    %p114 = pneg %p113
    // Predicated region
    $region9: #{tpu_custom_call.1} parent=5 // pred_check
      _
    $region10: #{tpu_custom_call.1} parent=5 // pred_check_branch
      %116 = sbr.rel (%p113) target = $region12
    $region11: #{tpu_custom_call.1} parent=5 // pred_region
      %s117 = ssub.s32 %s9, 1
      // Predicated region
      $region13: #{tpu_custom_call.1} parent=11 // pred_check
        %p118 = pneg %p56
      $region14: #{tpu_custom_call.1} parent=11 // pred_check_branch
        %120 = sbr.rel (%p118) target = $region16
      $region15: #{tpu_custom_call.1} parent=11 // pred_region
        _
      $region16: #{tpu_custom_call.1} parent=11 // pred_fallthru
        _
      // Predicated region
      $region17: #{tpu_custom_call.1} parent=11 // pred_check
        %p121 = pneg %p77
      $region18: #{tpu_custom_call.1} parent=11 // pred_check_branch
        %123 = sbr.rel (%p121) target = $region20
      $region19: #{tpu_custom_call.1} parent=11 // pred_region
        _
      $region20: #{tpu_custom_call.1} parent=11 // pred_fallthru
        _
    $region12: #{tpu_custom_call.1} parent=5 // pred_fallthru
      _
    %p124 = scmp.lt.s32.totalorder %s9, 2
    // Predicated region
    $region21: #{tpu_custom_call.1} parent=5 // pred_check
      %p125 = pneg %p124
    $region22: #{tpu_custom_call.1} parent=5 // pred_check_branch
      %127 = sbr.rel (%p125) target = $region24
    $region23: #{tpu_custom_call.1} parent=5 // pred_region
      // Predicated region
      $region25: #{tpu_custom_call.1} parent=23 // pred_check
        %p128 = pneg %p29
      $region26: #{tpu_custom_call.1} parent=23 // pred_check_branch
        %130 = sbr.rel (%p128) target = $region28
      $region27: #{tpu_custom_call.1} parent=23 // pred_region
        %p131 = scmp.lt.s32.totalorder %s9, 1
        %s132 = scalar_select %p131, %s9, 1
        %s133 = smul.addr %s132, 32
        %s134 = smul.addr %s133, 8
        %s135 = scalar_lea.vmem %s0, %s134
      $region28: #{tpu_custom_call.1} parent=23 // pred_fallthru
        _
    $region24: #{tpu_custom_call.1} parent=5 // pred_fallthru
      _
    %p136 = scmp.le.s32.totalorder 1, %s9
    %p137 = scmp.lt.s32.totalorder %s9, 3
    %p138 = pnand %p136, %p137
    %p139 = pneg %p138
    // Predicated region
    $region29: #{tpu_custom_call.1} parent=5 // pred_check
      _
    $region30: #{tpu_custom_call.1} parent=5 // pred_check_branch
      %141 = sbr.rel (%p138) target = $region32
    $region31: #{tpu_custom_call.1} parent=5 // pred_region
      %s142 = ssub.s32 %s9, 1
      %p143 = scmp.lt.s32.totalorder %s14, 1
      %s144 = scalar_select %p143, %s14, 1
      %s145 = smul.addr %s144, 32
      %s146 = smul.addr %s145, 8
      %s147 = scalar_lea.vmem %s0, %s146
      %p148 = pneg %p35
      %p149 = pneg %p32
      %p150 = pneg %p56
      %p151 = pneg %p53
      %p152 = pneg %p77
      %p153 = pneg %p74
      %p154 = pneg %p103
      %p155 = pneg %p100
      %p156 = scmp.lt.s32.totalorder %s14, 1
      %s157 = scalar_select %p156, %s14, 1
      %s158 = smul.addr %s157, 32
      %s159 = smul.addr %s158, 8
      %s160 = scalar_lea.vmem %s3, %s159
      %p161 = scmp.lt.s32.totalorder %s14, 1
      %s162 = scalar_select %p161, %s14, 1
      %s163 = smul.addr %s162, 32
      %s164 = smul.addr %s163, 8
      %s165 = scalar_lea.vmem %s0, %s164
      %p166 = scmp.lt.s32.totalorder %s14, 1
      %s167 = scalar_select %p166, %s14, 1
      %s168 = smul.addr %s167, 32
      %s169 = smul.addr %s168, 8
      %s170 = scalar_lea.vmem %s3, %s169
      %v172 = vld [vmem:[%s165] sm:$0xff]
      %v173 = vld [vmem:[%s165 + $0x8] sm:$0xff]
      %v174 = vld [vmem:[%s165 + $0x10] sm:$0xff]
      %v175 = vld [vmem:[%s165 + $0x18] sm:$0xff]
      %v176 = vld [vmem:[%s165 + $0x20] sm:$0xff]
      %v177 = vld [vmem:[%s165 + $0x28] sm:$0xff]
      %v178 = vld [vmem:[%s165 + $0x30] sm:$0xff]
      %v179 = vld [vmem:[%s165 + $0x38] sm:$0xff]
      %v180 = vld [vmem:[%s165 + $0x40] sm:$0xff]
      %v181 = vld [vmem:[%s165 + $0x48] sm:$0xff]
      %v182 = vld [vmem:[%s165 + $0x50] sm:$0xff]
      %v183 = vld [vmem:[%s165 + $0x58] sm:$0xff]
      %v184 = vld [vmem:[%s165 + $0x60] sm:$0xff]
      %v185 = vld [vmem:[%s165 + $0x68] sm:$0xff]
      %v186 = vld [vmem:[%s165 + $0x70] sm:$0xff]
      %v187 = vld [vmem:[%s165 + $0x78] sm:$0xff]
      %v188 = vld [vmem:[%s165 + $0x80] sm:$0xff]
      %v189 = vld [vmem:[%s165 + $0x88] sm:$0xff]
      %v190 = vld [vmem:[%s165 + $0x90] sm:$0xff]
      %v191 = vld [vmem:[%s165 + $0x98] sm:$0xff]
      %v192 = vld [vmem:[%s165 + $0xa0] sm:$0xff]
      %v193 = vld [vmem:[%s165 + $0xa8] sm:$0xff]
      %v194 = vld [vmem:[%s165 + $0xb0] sm:$0xff]
      %v195 = vld [vmem:[%s165 + $0xb8] sm:$0xff]
      %v196 = vld [vmem:[%s165 + $0xc0] sm:$0xff]
      %v197 = vld [vmem:[%s165 + $0xc8] sm:$0xff]
      %v198 = vld [vmem:[%s165 + $0xd0] sm:$0xff]
      %v199 = vld [vmem:[%s165 + $0xd8] sm:$0xff]
      %v200 = vld [vmem:[%s165 + $0xe0] sm:$0xff]
      %v201 = vld [vmem:[%s165 + $0xe8] sm:$0xff]
      %v202 = vld [vmem:[%s165 + $0xf0] sm:$0xff]
      %v203 = vld [vmem:[%s165 + $0xf8] sm:$0xff]
      %v204 = vld [vmem:[%s2] sm:$0xf]
      %s205 = scalar_lea.vmem [#allocation2], 24
      %vm206 = vcmask 31744
      %207 = vst.msk [vmem:[%s205 + $0x1] sm:$0xff] %vm206, %v172
      %208 = vst.msk [vmem:[%s205 + $0x9] sm:$0xff] %vm206, %v173
      %209 = vst.msk [vmem:[%s205 + $0x19] sm:$0xff] %vm206, %v174
      %210 = vst.msk [vmem:[%s205 + $0x21] sm:$0xff] %vm206, %v175
      %211 = vst.msk [vmem:[%s205 + $0x31] sm:$0xff] %vm206, %v176
      %212 = vst.msk [vmem:[%s205 + $0x39] sm:$0xff] %vm206, %v177
      %213 = vst.msk [vmem:[%s205 + $0x49] sm:$0xff] %vm206, %v178
      %214 = vst.msk [vmem:[%s205 + $0x51] sm:$0xff] %vm206, %v179
      %215 = vst.msk [vmem:[%s205 + $0x61] sm:$0xff] %vm206, %v180
      %216 = vst.msk [vmem:[%s205 + $0x69] sm:$0xff] %vm206, %v181
      %217 = vst.msk [vmem:[%s205 + $0x79] sm:$0xff] %vm206, %v182
      %218 = vst.msk [vmem:[%s205 + $0x81] sm:$0xff] %vm206, %v183
      %219 = vst.msk [vmem:[%s205 + $0x91] sm:$0xff] %vm206, %v184
      %220 = vst.msk [vmem:[%s205 + $0x99] sm:$0xff] %vm206, %v185
      %221 = vst.msk [vmem:[%s205 + $0xa9] sm:$0xff] %vm206, %v186
      %222 = vst.msk [vmem:[%s205 + $0xb1] sm:$0xff] %vm206, %v187
      %223 = vst.msk [vmem:[%s205 + $0xc1] sm:$0xff] %vm206, %v188
      %224 = vst.msk [vmem:[%s205 + $0xc9] sm:$0xff] %vm206, %v189
      %225 = vst.msk [vmem:[%s205 + $0xd9] sm:$0xff] %vm206, %v190
      %226 = vst.msk [vmem:[%s205 + $0xe1] sm:$0xff] %vm206, %v191
      %227 = vst.msk [vmem:[%s205 + $0xf1] sm:$0xff] %vm206, %v192
      %228 = vst.msk [vmem:[%s205 + $0xf9] sm:$0xff] %vm206, %v193
      %229 = vst.msk [vmem:[%s205 + $0x109] sm:$0xff] %vm206, %v194
      %230 = vst.msk [vmem:[%s205 + $0x111] sm:$0xff] %vm206, %v195
      %231 = vst.msk [vmem:[%s205 + $0x121] sm:$0xff] %vm206, %v196
      %232 = vst.msk [vmem:[%s205 + $0x129] sm:$0xff] %vm206, %v197
      %233 = vst.msk [vmem:[%s205 + $0x139] sm:$0xff] %vm206, %v198
      %234 = vst.msk [vmem:[%s205 + $0x141] sm:$0xff] %vm206, %v199
      %235 = vst.msk [vmem:[%s205 + $0x151] sm:$0xff] %vm206, %v200
      %236 = vst.msk [vmem:[%s205 + $0x159] sm:$0xff] %vm206, %v201
      %237 = vst.msk [vmem:[%s205 + $0x169] sm:$0xff] %vm206, %v202
      %238 = vst.msk [vmem:[%s205 + $0x171] sm:$0xff] %vm206, %v203
      %239 = vst.msk [vmem:[#allocation2 + $0x1] sm:$0xff] %vm206, %v174
      %240 = vst.msk [vmem:[#allocation2 + $0x9] sm:$0xff] %vm206, %v175
      %s241 = scalar_lea.vmem [#allocation2], 408
      %242 = vst.msk [vmem:[%s241 + $0x1] sm:$0xff] %vm206, %v200
      %243 = vst.msk [vmem:[%s241 + $0x9] sm:$0xff] %vm206, %v201
      %vm244 = vcmask 25601
      %245 = vst.msk [vmem:[%s205 - $0x1] sm:$0x2] %vm244, %v172
      %246 = vst.msk [vmem:[%s205 + $0x17] sm:$0x2] %vm244, %v174
      %247 = vst.msk [vmem:[%s205 + $0x2f] sm:$0x2] %vm244, %v176
      %248 = vst.msk [vmem:[%s205 + $0x47] sm:$0x2] %vm244, %v178
      %249 = vst.msk [vmem:[%s205 + $0x5f] sm:$0x2] %vm244, %v180
      %250 = vst.msk [vmem:[%s205 + $0x77] sm:$0x2] %vm244, %v182
      %251 = vst.msk [vmem:[%s205 + $0x8f] sm:$0x2] %vm244, %v184
      %252 = vst.msk [vmem:[%s205 + $0xa7] sm:$0x2] %vm244, %v186
      %253 = vst.msk [vmem:[%s205 + $0xbf] sm:$0x2] %vm244, %v188
      %254 = vst.msk [vmem:[%s205 + $0xd7] sm:$0x2] %vm244, %v190
      %255 = vst.msk [vmem:[%s205 + $0xef] sm:$0x2] %vm244, %v192
      %256 = vst.msk [vmem:[%s205 + $0x107] sm:$0x2] %vm244, %v194
      %257 = vst.msk [vmem:[%s205 + $0x11f] sm:$0x2] %vm244, %v196
      %258 = vst.msk [vmem:[%s205 + $0x137] sm:$0x2] %vm244, %v198
      %259 = vst.msk [vmem:[%s205 + $0x14f] sm:$0x2] %vm244, %v200
      %260 = vst.msk [vmem:[%s205 + $0x167] sm:$0x2] %vm244, %v202
      %vm261 = vcmask 30726
      %262 = vst.msk [vmem:[%s205 + $0xb] sm:$0x40] %vm261, %v173
      %263 = vst.msk [vmem:[%s205 + $0x23] sm:$0x40] %vm261, %v175
      %264 = vst.msk [vmem:[%s205 + $0x3b] sm:$0x40] %vm261, %v177
      %265 = vst.msk [vmem:[%s205 + $0x53] sm:$0x40] %vm261, %v179
      %266 = vst.msk [vmem:[%s205 + $0x6b] sm:$0x40] %vm261, %v181
      %267 = vst.msk [vmem:[%s205 + $0x83] sm:$0x40] %vm261, %v183
      %268 = vst.msk [vmem:[%s205 + $0x9b] sm:$0x40] %vm261, %v185
      %269 = vst.msk [vmem:[%s205 + $0xb3] sm:$0x40] %vm261, %v187
      %270 = vst.msk [vmem:[%s205 + $0xcb] sm:$0x40] %vm261, %v189
      %271 = vst.msk [vmem:[%s205 + $0xe3] sm:$0x40] %vm261, %v191
      %272 = vst.msk [vmem:[%s205 + $0xfb] sm:$0x40] %vm261, %v193
      %273 = vst.msk [vmem:[%s205 + $0x113] sm:$0x40] %vm261, %v195
      %274 = vst.msk [vmem:[%s205 + $0x12b] sm:$0x40] %vm261, %v197
      %275 = vst.msk [vmem:[%s205 + $0x143] sm:$0x40] %vm261, %v199
      %276 = vst.msk [vmem:[%s205 + $0x15b] sm:$0x40] %vm261, %v201
      %277 = vst.msk [vmem:[%s205 + $0x173] sm:$0x40] %vm261, %v203
      %278 = vst.msk [vmem:[#allocation2 - $0x1] sm:$0x2] %vm244, %v174
      %279 = vst.msk [vmem:[#allocation2 + $0xb] sm:$0x40] %vm261, %v175
      %280 = vst.msk [vmem:[%s241 - $0x1] sm:$0x2] %vm244, %v200
      %281 = vst.msk [vmem:[%s241 + $0xb] sm:$0x40] %vm261, %v201
      %v282 = vld [vmem:[#allocation2] sm:$0xff]
      %v283 = vld [vmem:[#allocation2 + $0x8] sm:$0xff]
      %v284 = vld [vmem:[#allocation2 + $0x10] sm:$0x3]
      %v285 = vld [vmem:[#allocation2 + $0x18] sm:$0xff]
      %v286 = vld [vmem:[#allocation2 + $0x20] sm:$0xff]
      %v287 = vld [vmem:[#allocation2 + $0x28] sm:$0x3]
      %v288 = vld [vmem:[#allocation2 + $0x30] sm:$0xff]
      %v289 = vld [vmem:[#allocation2 + $0x38] sm:$0xff]
      %v290 = vld [vmem:[#allocation2 + $0x40] sm:$0x3]
      %v291 = vld [vmem:[#allocation2 + $0x48] sm:$0xff]
      %v292 = vld [vmem:[#allocation2 + $0x50] sm:$0xff]
      %v293 = vld [vmem:[#allocation2 + $0x58] sm:$0x3]
      %v294 = vld [vmem:[#allocation2 + $0x60] sm:$0xff]
      %v295 = vld [vmem:[#allocation2 + $0x68] sm:$0xff]
      %v296 = vld [vmem:[#allocation2 + $0x70] sm:$0x3]
      %v297 = vld [vmem:[#allocation2 + $0x78] sm:$0xff]
      %v298 = vld [vmem:[#allocation2 + $0x80] sm:$0xff]
      %v299 = vld [vmem:[#allocation2 + $0x88] sm:$0x3]
      %v300 = vld [vmem:[#allocation2 + $0x90] sm:$0xff]
      %v301 = vld [vmem:[#allocation2 + $0x98] sm:$0xff]
      %v302 = vld [vmem:[#allocation2 + $0xa0] sm:$0x3]
      %v303 = vld [vmem:[#allocation2 + $0xa8] sm:$0xff]
      %v304 = vld [vmem:[#allocation2 + $0xb0] sm:$0xff]
      %v305 = vld [vmem:[#allocation2 + $0xb8] sm:$0x3]
      %v306 = vld [vmem:[#allocation2 + $0xc0] sm:$0xff]
      %v307 = vld [vmem:[#allocation2 + $0xc8] sm:$0xff]
      %v308 = vld [vmem:[#allocation2 + $0xd0] sm:$0x3]
      %v309 = vld [vmem:[#allocation2 + $0xd8] sm:$0xff]
      %v310 = vld [vmem:[#allocation2 + $0xe0] sm:$0xff]
      %v311 = vld [vmem:[#allocation2 + $0xe8] sm:$0x3]
      %v312 = vld [vmem:[#allocation2 + $0xf0] sm:$0xff]
      %v313 = vld [vmem:[#allocation2 + $0xf8] sm:$0xff]
      %v314 = vld [vmem:[#allocation2 + $0x100] sm:$0x3]
      %v315 = vld [vmem:[#allocation2 + $0x108] sm:$0xff]
      %v316 = vld [vmem:[#allocation2 + $0x110] sm:$0xff]
      %v317 = vld [vmem:[#allocation2 + $0x118] sm:$0x3]
      %v318 = vld [vmem:[#allocation2 + $0x120] sm:$0xff]
      %v319 = vld [vmem:[#allocation2 + $0x128] sm:$0xff]
      %v320 = vld [vmem:[#allocation2 + $0x130] sm:$0x3]
      %v321 = vld [vmem:[#allocation2 + $0x138] sm:$0xff]
      %v322 = vld [vmem:[#allocation2 + $0x140] sm:$0xff]
      %v323 = vld [vmem:[#allocation2 + $0x148] sm:$0x3]
      %v324 = vld [vmem:[#allocation2 + $0x150] sm:$0xff]
      %v325 = vld [vmem:[#allocation2 + $0x158] sm:$0xff]
      %v326 = vld [vmem:[#allocation2 + $0x160] sm:$0x3]
      %v327 = vld [vmem:[#allocation2 + $0x168] sm:$0xff]
      %v328 = vld [vmem:[#allocation2 + $0x170] sm:$0xff]
      %v329 = vld [vmem:[#allocation2 + $0x178] sm:$0x3]
      %v330 = vld [vmem:[#allocation2 + $0x180] sm:$0xff]
      %v331 = vld [vmem:[#allocation2 + $0x188] sm:$0xff]
      %v332 = vld [vmem:[#allocation2 + $0x190] sm:$0x3]
      %v333 = vld [vmem:[#allocation2 + $0x198] sm:$0xff]
      %v334 = vld [vmem:[#allocation2 + $0x1a0] sm:$0xff]
      %v335 = vld [vmem:[#allocation2 + $0x1a8] sm:$0x3]
      %vm390 = vcmask 1046528
      %v391 = vrot.slane %v282, 1
      %v392 = vrot.slane %v283, 1
      %v393 = vsel %vm390, %v391, %v392
      %v394 = vrot.slane %v284, 1
      %v395 = vsel %vm390, %v392, %v394
      %v396 = vrot.slane %v285, 1
      %v397 = vrot.slane %v286, 1
      %v398 = vsel %vm390, %v396, %v397
      %v399 = vrot.slane %v287, 1
      %v400 = vsel %vm390, %v397, %v399
      %v401 = vrot.slane %v288, 1
      %v402 = vrot.slane %v289, 1
      %v403 = vsel %vm390, %v401, %v402
      %v404 = vrot.slane %v290, 1
      %v405 = vsel %vm390, %v402, %v404
      %v406 = vrot.slane %v291, 1
      %v407 = vrot.slane %v292, 1
      %v408 = vsel %vm390, %v406, %v407
      %v409 = vrot.slane %v293, 1
      %v410 = vsel %vm390, %v407, %v409
      %v411 = vrot.slane %v294, 1
      %v412 = vrot.slane %v295, 1
      %v413 = vsel %vm390, %v411, %v412
      %v414 = vrot.slane %v296, 1
      %v415 = vsel %vm390, %v412, %v414
      %v416 = vrot.slane %v297, 1
      %v417 = vrot.slane %v298, 1
      %v418 = vsel %vm390, %v416, %v417
      %v419 = vrot.slane %v299, 1
      %v420 = vsel %vm390, %v417, %v419
      %v421 = vrot.slane %v300, 1
      %v422 = vrot.slane %v301, 1
      %v423 = vsel %vm390, %v421, %v422
      %v424 = vrot.slane %v302, 1
      %v425 = vsel %vm390, %v422, %v424
      %v426 = vrot.slane %v303, 1
      %v427 = vrot.slane %v304, 1
      %v428 = vsel %vm390, %v426, %v427
      %v429 = vrot.slane %v305, 1
      %v430 = vsel %vm390, %v427, %v429
      %v431 = vrot.slane %v306, 1
      %v432 = vrot.slane %v307, 1
      %v433 = vsel %vm390, %v431, %v432
      %v434 = vrot.slane %v308, 1
      %v435 = vsel %vm390, %v432, %v434
      %v436 = vrot.slane %v309, 1
      %v437 = vrot.slane %v310, 1
      %v438 = vsel %vm390, %v436, %v437
      %v439 = vrot.slane %v311, 1
      %v440 = vsel %vm390, %v437, %v439
      %v441 = vrot.slane %v312, 1
      %v442 = vrot.slane %v313, 1
      %v443 = vsel %vm390, %v441, %v442
      %v444 = vrot.slane %v314, 1
      %v445 = vsel %vm390, %v442, %v444
      %v446 = vrot.slane %v315, 1
      %v447 = vrot.slane %v316, 1
      %v448 = vsel %vm390, %v446, %v447
      %v449 = vrot.slane %v317, 1
      %v450 = vsel %vm390, %v447, %v449
      %v451 = vrot.slane %v318, 1
      %v452 = vrot.slane %v319, 1
      %v453 = vsel %vm390, %v451, %v452
      %v454 = vrot.slane %v320, 1
      %v455 = vsel %vm390, %v452, %v454
      %v456 = vrot.slane %v321, 1
      %v457 = vrot.slane %v322, 1
      %v458 = vsel %vm390, %v456, %v457
      %v459 = vrot.slane %v323, 1
      %v460 = vsel %vm390, %v457, %v459
      %v461 = vrot.slane %v324, 1
      %v462 = vrot.slane %v325, 1
      %v463 = vsel %vm390, %v461, %v462
      %v464 = vrot.slane %v326, 1
      %v465 = vsel %vm390, %v462, %v464
      %v466 = vrot.slane %v327, 1
      %v467 = vrot.slane %v328, 1
      %v468 = vsel %vm390, %v466, %v467
      %v469 = vrot.slane %v329, 1
      %v470 = vsel %vm390, %v467, %v469
      %v471 = vrot.slane %v330, 1
      %v472 = vrot.slane %v331, 1
      %v473 = vsel %vm390, %v471, %v472
      %v474 = vrot.slane %v332, 1
      %v475 = vsel %vm390, %v472, %v474
      %v476 = vrot.slane %v333, 1
      %v477 = vrot.slane %v334, 1
      %v478 = vsel %vm390, %v476, %v477
      %v479 = vrot.slane %v335, 1
      %v480 = vsel %vm390, %v477, %v479
      %481 = vrot.lane.b32.xlu0 %v393, 4
      %v482 = vpop.permute.xlu0 %481
      %483 = vrot.lane.b32.xlu0 %v395, 4
      %v484 = vpop.permute.xlu0 %483
      %485 = vrot.lane.b32.xlu0 %v398, 4
      %v486 = vpop.permute.xlu0 %485
      %487 = vrot.lane.b32.xlu0 %v400, 4
      %v488 = vpop.permute.xlu0 %487
      %489 = vrot.lane.b32.xlu0 %v403, 4
      %v490 = vpop.permute.xlu0 %489
      %491 = vrot.lane.b32.xlu0 %v405, 4
      %v492 = vpop.permute.xlu0 %491
      %493 = vrot.lane.b32.xlu0 %v408, 4
      %v494 = vpop.permute.xlu0 %493
      %495 = vrot.lane.b32.xlu0 %v410, 4
      %v496 = vpop.permute.xlu0 %495
      %497 = vrot.lane.b32.xlu0 %v413, 4
      %v498 = vpop.permute.xlu0 %497
      %499 = vrot.lane.b32.xlu0 %v415, 4
      %v500 = vpop.permute.xlu0 %499
      %501 = vrot.lane.b32.xlu0 %v418, 4
      %v502 = vpop.permute.xlu0 %501
      %503 = vrot.lane.b32.xlu0 %v420, 4
      %v504 = vpop.permute.xlu0 %503
      %505 = vrot.lane.b32.xlu0 %v423, 4
      %v506 = vpop.permute.xlu0 %505
      %507 = vrot.lane.b32.xlu0 %v425, 4
      %v508 = vpop.permute.xlu0 %507
      %509 = vrot.lane.b32.xlu0 %v428, 4
      %v510 = vpop.permute.xlu0 %509
      %511 = vrot.lane.b32.xlu0 %v430, 4
      %v512 = vpop.permute.xlu0 %511
      %513 = vrot.lane.b32.xlu0 %v433, 4
      %v514 = vpop.permute.xlu0 %513
      %515 = vrot.lane.b32.xlu0 %v435, 4
      %v516 = vpop.permute.xlu0 %515
      %517 = vrot.lane.b32.xlu0 %v438, 4
      %v518 = vpop.permute.xlu0 %517
      %519 = vrot.lane.b32.xlu0 %v440, 4
      %v520 = vpop.permute.xlu0 %519
      %521 = vrot.lane.b32.xlu0 %v443, 4
      %v522 = vpop.permute.xlu0 %521
      %523 = vrot.lane.b32.xlu0 %v445, 4
      %v524 = vpop.permute.xlu0 %523
      %525 = vrot.lane.b32.xlu0 %v448, 4
      %v526 = vpop.permute.xlu0 %525
      %527 = vrot.lane.b32.xlu0 %v450, 4
      %v528 = vpop.permute.xlu0 %527
      %529 = vrot.lane.b32.xlu0 %v453, 4
      %v530 = vpop.permute.xlu0 %529
      %531 = vrot.lane.b32.xlu0 %v455, 4
      %v532 = vpop.permute.xlu0 %531
      %533 = vrot.lane.b32.xlu0 %v458, 4
      %v534 = vpop.permute.xlu0 %533
      %535 = vrot.lane.b32.xlu0 %v460, 4
      %v536 = vpop.permute.xlu0 %535
      %537 = vrot.lane.b32.xlu0 %v463, 4
      %v538 = vpop.permute.xlu0 %537
      %539 = vrot.lane.b32.xlu0 %v465, 4
      %v540 = vpop.permute.xlu0 %539
      %541 = vrot.lane.b32.xlu0 %v468, 4
      %v542 = vpop.permute.xlu0 %541
      %543 = vrot.lane.b32.xlu0 %v470, 4
      %v544 = vpop.permute.xlu0 %543
      %545 = vrot.lane.b32.xlu0 %v473, 4
      %v546 = vpop.permute.xlu0 %545
      %547 = vrot.lane.b32.xlu0 %v475, 4
      %v548 = vpop.permute.xlu0 %547
      %549 = vrot.lane.b32.xlu0 %v478, 4
      %v550 = vpop.permute.xlu0 %549
      %551 = vrot.lane.b32.xlu0 %v480, 4
      %v552 = vpop.permute.xlu0 %551
      %vm589 = vcmask 1045504
      %v590 = vrot.slane %v282, 2
      %v591 = vrot.slane %v283, 2
      %v592 = vsel %vm589, %v590, %v591
      %v593 = vrot.slane %v284, 2
      %v594 = vsel %vm589, %v591, %v593
      %v595 = vrot.slane %v285, 2
      %v596 = vrot.slane %v286, 2
      %v597 = vsel %vm589, %v595, %v596
      %v598 = vrot.slane %v287, 2
      %v599 = vsel %vm589, %v596, %v598
      %v600 = vrot.slane %v288, 2
      %v601 = vrot.slane %v289, 2
      %v602 = vsel %vm589, %v600, %v601
      %v603 = vrot.slane %v290, 2
      %v604 = vsel %vm589, %v601, %v603
      %v605 = vrot.slane %v291, 2
      %v606 = vrot.slane %v292, 2
      %v607 = vsel %vm589, %v605, %v606
      %v608 = vrot.slane %v293, 2
      %v609 = vsel %vm589, %v606, %v608
      %v610 = vrot.slane %v294, 2
      %v611 = vrot.slane %v295, 2
      %v612 = vsel %vm589, %v610, %v611
      %v613 = vrot.slane %v296, 2
      %v614 = vsel %vm589, %v611, %v613
      %v615 = vrot.slane %v297, 2
      %v616 = vrot.slane %v298, 2
      %v617 = vsel %vm589, %v615, %v616
      %v618 = vrot.slane %v299, 2
      %v619 = vsel %vm589, %v616, %v618
      %v620 = vrot.slane %v300, 2
      %v621 = vrot.slane %v301, 2
      %v622 = vsel %vm589, %v620, %v621
      %v623 = vrot.slane %v302, 2
      %v624 = vsel %vm589, %v621, %v623
      %v625 = vrot.slane %v303, 2
      %v626 = vrot.slane %v304, 2
      %v627 = vsel %vm589, %v625, %v626
      %v628 = vrot.slane %v305, 2
      %v629 = vsel %vm589, %v626, %v628
      %v630 = vrot.slane %v306, 2
      %v631 = vrot.slane %v307, 2
      %v632 = vsel %vm589, %v630, %v631
      %v633 = vrot.slane %v308, 2
      %v634 = vsel %vm589, %v631, %v633
      %v635 = vrot.slane %v309, 2
      %v636 = vrot.slane %v310, 2
      %v637 = vsel %vm589, %v635, %v636
      %v638 = vrot.slane %v311, 2
      %v639 = vsel %vm589, %v636, %v638
      %v640 = vrot.slane %v312, 2
      %v641 = vrot.slane %v313, 2
      %v642 = vsel %vm589, %v640, %v641
      %v643 = vrot.slane %v314, 2
      %v644 = vsel %vm589, %v641, %v643
      %v645 = vrot.slane %v315, 2
      %v646 = vrot.slane %v316, 2
      %v647 = vsel %vm589, %v645, %v646
      %v648 = vrot.slane %v317, 2
      %v649 = vsel %vm589, %v646, %v648
      %v650 = vrot.slane %v318, 2
      %v651 = vrot.slane %v319, 2
      %v652 = vsel %vm589, %v650, %v651
      %v653 = vrot.slane %v320, 2
      %v654 = vsel %vm589, %v651, %v653
      %v655 = vrot.slane %v321, 2
      %v656 = vrot.slane %v322, 2
      %v657 = vsel %vm589, %v655, %v656
      %v658 = vrot.slane %v323, 2
      %v659 = vsel %vm589, %v656, %v658
      %v660 = vrot.slane %v324, 2
      %v661 = vrot.slane %v325, 2
      %v662 = vsel %vm589, %v660, %v661
      %v663 = vrot.slane %v326, 2
      %v664 = vsel %vm589, %v661, %v663
      %v665 = vrot.slane %v327, 2
      %v666 = vrot.slane %v328, 2
      %v667 = vsel %vm589, %v665, %v666
      %v668 = vrot.slane %v329, 2
      %v669 = vsel %vm589, %v666, %v668
      %v670 = vrot.slane %v330, 2
      %v671 = vrot.slane %v331, 2
      %v672 = vsel %vm589, %v670, %v671
      %v673 = vrot.slane %v332, 2
      %v674 = vsel %vm589, %v671, %v673
      %v675 = vrot.slane %v333, 2
      %v676 = vrot.slane %v334, 2
      %v677 = vsel %vm589, %v675, %v676
      %v678 = vrot.slane %v335, 2
      %v679 = vsel %vm589, %v676, %v678
      %680 = vrot.lane.b32.xlu0 %v592, 8
      %v681 = vpop.permute.xlu0 %680
      %682 = vrot.lane.b32.xlu0 %v594, 8
      %v683 = vpop.permute.xlu0 %682
      %684 = vrot.lane.b32.xlu0 %v597, 8
      %v685 = vpop.permute.xlu0 %684
      %686 = vrot.lane.b32.xlu0 %v599, 8
      %v687 = vpop.permute.xlu0 %686
      %688 = vrot.lane.b32.xlu0 %v602, 8
      %v689 = vpop.permute.xlu0 %688
      %690 = vrot.lane.b32.xlu0 %v604, 8
      %v691 = vpop.permute.xlu0 %690
      %692 = vrot.lane.b32.xlu0 %v607, 8
      %v693 = vpop.permute.xlu0 %692
      %694 = vrot.lane.b32.xlu0 %v609, 8
      %v695 = vpop.permute.xlu0 %694
      %696 = vrot.lane.b32.xlu0 %v612, 8
      %v697 = vpop.permute.xlu0 %696
      %698 = vrot.lane.b32.xlu0 %v614, 8
      %v699 = vpop.permute.xlu0 %698
      %700 = vrot.lane.b32.xlu0 %v617, 8
      %v701 = vpop.permute.xlu0 %700
      %702 = vrot.lane.b32.xlu0 %v619, 8
      %v703 = vpop.permute.xlu0 %702
      %704 = vrot.lane.b32.xlu0 %v622, 8
      %v705 = vpop.permute.xlu0 %704
      %706 = vrot.lane.b32.xlu0 %v624, 8
      %v707 = vpop.permute.xlu0 %706
      %708 = vrot.lane.b32.xlu0 %v627, 8
      %v709 = vpop.permute.xlu0 %708
      %710 = vrot.lane.b32.xlu0 %v629, 8
      %v711 = vpop.permute.xlu0 %710
      %712 = vrot.lane.b32.xlu0 %v632, 8
      %v713 = vpop.permute.xlu0 %712
      %714 = vrot.lane.b32.xlu0 %v634, 8
      %v715 = vpop.permute.xlu0 %714
      %716 = vrot.lane.b32.xlu0 %v637, 8
      %v717 = vpop.permute.xlu0 %716
      %718 = vrot.lane.b32.xlu0 %v639, 8
      %v719 = vpop.permute.xlu0 %718
      %720 = vrot.lane.b32.xlu0 %v642, 8
      %v721 = vpop.permute.xlu0 %720
      %722 = vrot.lane.b32.xlu0 %v644, 8
      %v723 = vpop.permute.xlu0 %722
      %724 = vrot.lane.b32.xlu0 %v647, 8
      %v725 = vpop.permute.xlu0 %724
      %726 = vrot.lane.b32.xlu0 %v649, 8
      %v727 = vpop.permute.xlu0 %726
      %728 = vrot.lane.b32.xlu0 %v652, 8
      %v729 = vpop.permute.xlu0 %728
      %730 = vrot.lane.b32.xlu0 %v654, 8
      %v731 = vpop.permute.xlu0 %730
      %732 = vrot.lane.b32.xlu0 %v657, 8
      %v733 = vpop.permute.xlu0 %732
      %734 = vrot.lane.b32.xlu0 %v659, 8
      %v735 = vpop.permute.xlu0 %734
      %736 = vrot.lane.b32.xlu0 %v662, 8
      %v737 = vpop.permute.xlu0 %736
      %738 = vrot.lane.b32.xlu0 %v664, 8
      %v739 = vpop.permute.xlu0 %738
      %740 = vrot.lane.b32.xlu0 %v667, 8
      %v741 = vpop.permute.xlu0 %740
      %742 = vrot.lane.b32.xlu0 %v669, 8
      %v743 = vpop.permute.xlu0 %742
      %744 = vrot.lane.b32.xlu0 %v672, 8
      %v745 = vpop.permute.xlu0 %744
      %746 = vrot.lane.b32.xlu0 %v674, 8
      %v747 = vpop.permute.xlu0 %746
      %748 = vrot.lane.b32.xlu0 %v677, 8
      %v749 = vpop.permute.xlu0 %748
      %750 = vrot.lane.b32.xlu0 %v679, 8
      %v751 = vpop.permute.xlu0 %750
      %v788 = vsel %vm206, %v282, %v482
      %v789 = vsel %vm206, %v283, %v484
      %v790 = vsel %vm206, %v285, %v486
      %v791 = vsel %vm206, %v286, %v488
      %v792 = vsel %vm206, %v288, %v490
      %v793 = vsel %vm206, %v289, %v492
      %v794 = vsel %vm206, %v291, %v494
      %v795 = vsel %vm206, %v292, %v496
      %v796 = vsel %vm206, %v294, %v498
      %v797 = vsel %vm206, %v295, %v500
      %v798 = vsel %vm206, %v297, %v502
      %v799 = vsel %vm206, %v298, %v504
      %v800 = vsel %vm206, %v300, %v506
      %v801 = vsel %vm206, %v301, %v508
      %v802 = vsel %vm206, %v303, %v510
      %v803 = vsel %vm206, %v304, %v512
      %v804 = vsel %vm206, %v306, %v514
      %v805 = vsel %vm206, %v307, %v516
      %v806 = vsel %vm206, %v309, %v518
      %v807 = vsel %vm206, %v310, %v520
      %v808 = vsel %vm206, %v312, %v522
      %v809 = vsel %vm206, %v313, %v524
      %v810 = vsel %vm206, %v315, %v526
      %v811 = vsel %vm206, %v316, %v528
      %v812 = vsel %vm206, %v318, %v530
      %v813 = vsel %vm206, %v319, %v532
      %v814 = vsel %vm206, %v321, %v534
      %v815 = vsel %vm206, %v322, %v536
      %v816 = vsel %vm206, %v324, %v538
      %v817 = vsel %vm206, %v325, %v540
      %v818 = vsel %vm206, %v327, %v542
      %v819 = vsel %vm206, %v328, %v544
      %v820 = vsel %vm206, %v330, %v546
      %v821 = vsel %vm206, %v331, %v548
      %v822 = vsel %vm206, %v333, %v550
      %v823 = vsel %vm206, %v334, %v552
      %vm824 = vcmask 64512
      %v825 = vsel %vm824, %v788, %v681
      %v826 = vsel %vm824, %v789, %v683
      %v827 = vsel %vm824, %v790, %v685
      %v828 = vsel %vm824, %v791, %v687
      %v829 = vsel %vm824, %v792, %v689
      %v830 = vsel %vm824, %v793, %v691
      %v831 = vsel %vm824, %v794, %v693
      %v832 = vsel %vm824, %v795, %v695
      %v833 = vsel %vm824, %v796, %v697
      %v834 = vsel %vm824, %v797, %v699
      %v835 = vsel %vm824, %v798, %v701
      %v836 = vsel %vm824, %v799, %v703
      %v837 = vsel %vm824, %v800, %v705
      %v838 = vsel %vm824, %v801, %v707
      %v839 = vsel %vm824, %v802, %v709
      %v840 = vsel %vm824, %v803, %v711
      %v841 = vsel %vm824, %v804, %v713
      %v842 = vsel %vm824, %v805, %v715
      %v843 = vsel %vm824, %v806, %v717
      %v844 = vsel %vm824, %v807, %v719
      %v845 = vsel %vm824, %v808, %v721
      %v846 = vsel %vm824, %v809, %v723
      %v847 = vsel %vm824, %v810, %v725
      %v848 = vsel %vm824, %v811, %v727
      %v849 = vsel %vm824, %v812, %v729
      %v850 = vsel %vm824, %v813, %v731
      %v851 = vsel %vm824, %v814, %v733
      %v852 = vsel %vm824, %v815, %v735
      %v853 = vsel %vm824, %v816, %v737
      %v854 = vsel %vm824, %v817, %v739
      %v855 = vsel %vm824, %v818, %v741
      %v856 = vsel %vm824, %v819, %v743
      %v857 = vsel %vm824, %v820, %v745
      %v858 = vsel %vm824, %v821, %v747
      %v859 = vsel %vm824, %v822, %v749
      %v860 = vsel %vm824, %v823, %v751
      %v861 = vpack.c.bf16 %v825, %v825
      %v862 = vpack.c.bf16 %v826, %v826
      %v863 = vpack.c.bf16 %v827, %v827
      %v864 = vpack.c.bf16 %v828, %v828
      %v865 = vpack.c.bf16 %v829, %v829
      %v866 = vpack.c.bf16 %v830, %v830
      %v867 = vpack.c.bf16 %v831, %v831
      %v868 = vpack.c.bf16 %v832, %v832
      %v869 = vpack.c.bf16 %v833, %v833
      %v870 = vpack.c.bf16 %v834, %v834
      %v871 = vpack.c.bf16 %v835, %v835
      %v872 = vpack.c.bf16 %v836, %v836
      %v873 = vpack.c.bf16 %v837, %v837
      %v874 = vpack.c.bf16 %v838, %v838
      %v875 = vpack.c.bf16 %v839, %v839
      %v876 = vpack.c.bf16 %v840, %v840
      %v877 = vpack.c.bf16 %v841, %v841
      %v878 = vpack.c.bf16 %v842, %v842
      %v879 = vpack.c.bf16 %v843, %v843
      %v880 = vpack.c.bf16 %v844, %v844
      %v881 = vpack.c.bf16 %v845, %v845
      %v882 = vpack.c.bf16 %v846, %v846
      %v883 = vpack.c.bf16 %v847, %v847
      %v884 = vpack.c.bf16 %v848, %v848
      %v885 = vpack.c.bf16 %v849, %v849
      %v886 = vpack.c.bf16 %v850, %v850
      %v887 = vpack.c.bf16 %v851, %v851
      %v888 = vpack.c.bf16 %v852, %v852
      %v889 = vpack.c.bf16 %v853, %v853
      %v890 = vpack.c.bf16 %v854, %v854
      %v891 = vpack.c.bf16 %v855, %v855
      %v892 = vpack.c.bf16 %v856, %v856
      %v893 = vpack.c.bf16 %v857, %v857
      %v894 = vpack.c.bf16 %v858, %v858
      %v895 = vpack.c.bf16 %v859, %v859
      %v896 = vpack.c.bf16 %v860, %v860
      %v897 = vld [vmem:[%s1] sm:$0xf]
      %v898 = vld [vmem:[%s1 + $0x4] sm:$0x3]
      %s899 = scalar_lea.vmem %s1, 8
      %v900 = vld [vmem:[%s899] sm:$0xf]
      %v901 = vld [vmem:[%s899 + $0x4] sm:$0x3]
      %v934 = vunpack.c.l.b16 %v863
      %v935 = vunpack.c.l.b16 %v864
      %v936 = vunpack.c.l.b16 %v865
      %v937 = vunpack.c.l.b16 %v866
      %v938 = vunpack.c.l.b16 %v867
      %v939 = vunpack.c.l.b16 %v868
      %v940 = vunpack.c.l.b16 %v869
      %v941 = vunpack.c.l.b16 %v870
      %v942 = vunpack.c.l.b16 %v871
      %v943 = vunpack.c.l.b16 %v872
      %v944 = vunpack.c.l.b16 %v873
      %v945 = vunpack.c.l.b16 %v874
      %v946 = vunpack.c.l.b16 %v875
      %v947 = vunpack.c.l.b16 %v876
      %v948 = vunpack.c.l.b16 %v877
      %v949 = vunpack.c.l.b16 %v878
      %v950 = vunpack.c.l.b16 %v879
      %v951 = vunpack.c.l.b16 %v880
      %v952 = vunpack.c.l.b16 %v881
      %v953 = vunpack.c.l.b16 %v882
      %v954 = vunpack.c.l.b16 %v883
      %v955 = vunpack.c.l.b16 %v884
      %v956 = vunpack.c.l.b16 %v885
      %v957 = vunpack.c.l.b16 %v886
      %v958 = vunpack.c.l.b16 %v887
      %v959 = vunpack.c.l.b16 %v888
      %v960 = vunpack.c.l.b16 %v889
      %v961 = vunpack.c.l.b16 %v890
      %v962 = vunpack.c.l.b16 %v891
      %v963 = vunpack.c.l.b16 %v892
      %v964 = vunpack.c.l.b16 %v893
      %v965 = vunpack.c.l.b16 %v894
      %v966 = vpack.c.b16 %v935, %v934
      %v967 = vpack.c.b16 %v937, %v936
      %v968 = vpack.c.b16 %v939, %v938
      %v969 = vpack.c.b16 %v941, %v940
      %v970 = vpack.c.b16 %v943, %v942
      %v971 = vpack.c.b16 %v945, %v944
      %v972 = vpack.c.b16 %v947, %v946
      %v973 = vpack.c.b16 %v949, %v948
      %v974 = vpack.c.b16 %v951, %v950
      %v975 = vpack.c.b16 %v953, %v952
      %v976 = vpack.c.b16 %v955, %v954
      %v977 = vpack.c.b16 %v957, %v956
      %v978 = vpack.c.b16 %v959, %v958
      %v979 = vpack.c.b16 %v961, %v960
      %v980 = vpack.c.b16 %v963, %v962
      %v981 = vpack.c.b16 %v965, %v964
      %v984 = vunpack.c.l.b16 %v900
      %v985 = vunpack.c.l.b16 %v901
      %v986 = vpack.c.b16 %v985, %v984
      %vm987 = vcmask 97280
      %v989 = vsel %vm987, %v966, 0
      %v992 = vsel %vm987, %v967, 0
      %v995 = vsel %vm987, %v968, 0
      %v998 = vsel %vm987, %v969, 0
      %v1001 = vsel %vm987, %v970, 0
      %v1004 = vsel %vm987, %v971, 0
      %v1007 = vsel %vm987, %v972, 0
      %v1010 = vsel %vm987, %v973, 0
      %v1013 = vsel %vm987, %v974, 0
      %v1016 = vsel %vm987, %v975, 0
      %v1019 = vsel %vm987, %v976, 0
      %v1022 = vsel %vm987, %v977, 0
      %v1025 = vsel %vm987, %v978, 0
      %v1028 = vsel %vm987, %v979, 0
      %v1031 = vsel %vm987, %v980, 0
      %v1034 = vsel %vm987, %v981, 0
      %v1037 = vsel %vm589, %v986, 0
      %1039 = vmatpush.bf16.msra.mxu0 0
      %1040 = vmatpush.bf16.msra.mxu0 0
      %1041 = vmatpush.bf16.msra.mxu0 0
      %1042 = vmatpush.bf16.msra.mxu0 0
      %1043 = vmatpush.bf16.msra.mxu0 0
      %1044 = vmatpush.bf16.msra.mxu0 0
      %1045 = vmatpush.bf16.msra.mxu0 0
      %1046 = vmatpush.bf16.msra.mxu0 %v1037
      %1047 = vmatmul.bf16.gmra.mxu0 %v989
      %v1048 = vpop.f32.mrf.mxu0
      %v1049 = vadd.f32 0.0, %v1048
      %v1050 = vpop.f32.mrf.mxu0
      %v1051 = vadd.f32 0.0, %v1050
      %1052 = vmatmul.bf16.gmra.mxu0 %v992
      %v1053 = vpop.f32.mrf.mxu0
      %v1054 = vadd.f32 0.0, %v1053
      %v1055 = vpop.f32.mrf.mxu0
      %v1056 = vadd.f32 0.0, %v1055
      %1057 = vmatmul.bf16.gmra.mxu0 %v995
      %v1058 = vpop.f32.mrf.mxu0
      %v1059 = vadd.f32 0.0, %v1058
      %v1060 = vpop.f32.mrf.mxu0
      %v1061 = vadd.f32 0.0, %v1060
      %1062 = vmatmul.bf16.gmra.mxu0 %v998
      %v1063 = vpop.f32.mrf.mxu0
      %v1064 = vadd.f32 0.0, %v1063
      %v1065 = vpop.f32.mrf.mxu0
      %v1066 = vadd.f32 0.0, %v1065
      %1067 = vmatmul.bf16.gmra.mxu0 %v1001
      %v1068 = vpop.f32.mrf.mxu0
      %v1069 = vadd.f32 0.0, %v1068
      %v1070 = vpop.f32.mrf.mxu0
      %v1071 = vadd.f32 0.0, %v1070
      %1072 = vmatmul.bf16.gmra.mxu0 %v1004
      %v1073 = vpop.f32.mrf.mxu0
      %v1074 = vadd.f32 0.0, %v1073
      %v1075 = vpop.f32.mrf.mxu0
      %v1076 = vadd.f32 0.0, %v1075
      %1077 = vmatmul.bf16.gmra.mxu0 %v1007
      %v1078 = vpop.f32.mrf.mxu0
      %v1079 = vadd.f32 0.0, %v1078
      %v1080 = vpop.f32.mrf.mxu0
      %v1081 = vadd.f32 0.0, %v1080
      %1082 = vmatmul.bf16.gmra.mxu0 %v1010
      %v1083 = vpop.f32.mrf.mxu0
      %v1084 = vadd.f32 0.0, %v1083
      %v1085 = vpop.f32.mrf.mxu0
      %v1086 = vadd.f32 0.0, %v1085
      %1087 = vmatmul.bf16.gmra.mxu0 %v1013
      %v1088 = vpop.f32.mrf.mxu0
      %v1089 = vadd.f32 0.0, %v1088
      %v1090 = vpop.f32.mrf.mxu0
      %v1091 = vadd.f32 0.0, %v1090
      %1092 = vmatmul.bf16.gmra.mxu0 %v1016
      %v1093 = vpop.f32.mrf.mxu0
      %v1094 = vadd.f32 0.0, %v1093
      %v1095 = vpop.f32.mrf.mxu0
      %v1096 = vadd.f32 0.0, %v1095
      %1097 = vmatmul.bf16.gmra.mxu0 %v1019
      %v1098 = vpop.f32.mrf.mxu0
      %v1099 = vadd.f32 0.0, %v1098
      %v1100 = vpop.f32.mrf.mxu0
      %v1101 = vadd.f32 0.0, %v1100
      %1102 = vmatmul.bf16.gmra.mxu0 %v1022
      %v1103 = vpop.f32.mrf.mxu0
      %v1104 = vadd.f32 0.0, %v1103
      %v1105 = vpop.f32.mrf.mxu0
      %v1106 = vadd.f32 0.0, %v1105
      %1107 = vmatmul.bf16.gmra.mxu0 %v1025
      %v1108 = vpop.f32.mrf.mxu0
      %v1109 = vadd.f32 0.0, %v1108
      %v1110 = vpop.f32.mrf.mxu0
      %v1111 = vadd.f32 0.0, %v1110
      %1112 = vmatmul.bf16.gmra.mxu0 %v1028
      %v1113 = vpop.f32.mrf.mxu0
      %v1114 = vadd.f32 0.0, %v1113
      %v1115 = vpop.f32.mrf.mxu0
      %v1116 = vadd.f32 0.0, %v1115
      %1117 = vmatmul.bf16.gmra.mxu0 %v1031
      %v1118 = vpop.f32.mrf.mxu0
      %v1119 = vadd.f32 0.0, %v1118
      %v1120 = vpop.f32.mrf.mxu0
      %v1121 = vadd.f32 0.0, %v1120
      %1122 = vmatmul.bf16.gmra.mxu0 %v1034
      %v1123 = vpop.f32.mrf.mxu0
      %v1124 = vadd.f32 0.0, %v1123
      %v1125 = vpop.f32.mrf.mxu0
      %v1126 = vadd.f32 0.0, %v1125
      %1127 = vdwg.mxu0
      %v1130 = vunpack.c.l.b16 %v861
      %v1131 = vunpack.c.l.b16 %v862
      %v1132 = vpack.c.b16 %v1131, %v1130
      %v1135 = vunpack.c.l.b16 %v897
      %v1136 = vunpack.c.l.b16 %v898
      %v1137 = vpack.c.b16 %v1136, %v1135
      %v1139 = vsel %vm987, %v1132, 0
      %v1142 = vsel %vm589, %v1137, 0
      %1144 = vmatpush.bf16.msra.mxu0 0
      %1145 = vmatpush.bf16.msra.mxu0 0
      %1146 = vmatpush.bf16.msra.mxu0 0
      %1147 = vmatpush.bf16.msra.mxu0 0
      %1148 = vmatpush.bf16.msra.mxu0 0
      %1149 = vmatpush.bf16.msra.mxu0 0
      %1150 = vmatpush.bf16.msra.mxu0 0
      %1151 = vmatpush.bf16.msra.mxu0 %v1142
      %1152 = vmatmul.bf16.gmra.mxu0 %v1139
      %v1153 = vpop.f32.mrf.mxu0
      %v1154 = vadd.f32 %v1049, %v1153
      %v1155 = vpop.f32.mrf.mxu0
      %v1156 = vadd.f32 %v1051, %v1155
      %1157 = vmatmul.bf16.gmra.mxu0 %v989
      %v1158 = vpop.f32.mrf.mxu0
      %v1159 = vadd.f32 %v1054, %v1158
      %v1160 = vpop.f32.mrf.mxu0
      %v1161 = vadd.f32 %v1056, %v1160
      %1162 = vmatmul.bf16.gmra.mxu0 %v992
      %v1163 = vpop.f32.mrf.mxu0
      %v1164 = vadd.f32 %v1059, %v1163
      %v1165 = vpop.f32.mrf.mxu0
      %v1166 = vadd.f32 %v1061, %v1165
      %1167 = vmatmul.bf16.gmra.mxu0 %v995
      %v1168 = vpop.f32.mrf.mxu0
      %v1169 = vadd.f32 %v1064, %v1168
      %v1170 = vpop.f32.mrf.mxu0
      %v1171 = vadd.f32 %v1066, %v1170
      %1172 = vmatmul.bf16.gmra.mxu0 %v998
      %v1173 = vpop.f32.mrf.mxu0
      %v1174 = vadd.f32 %v1069, %v1173
      %v1175 = vpop.f32.mrf.mxu0
      %v1176 = vadd.f32 %v1071, %v1175
      %1177 = vmatmul.bf16.gmra.mxu0 %v1001
      %v1178 = vpop.f32.mrf.mxu0
      %v1179 = vadd.f32 %v1074, %v1178
      %v1180 = vpop.f32.mrf.mxu0
      %v1181 = vadd.f32 %v1076, %v1180
      %1182 = vmatmul.bf16.gmra.mxu0 %v1004
      %v1183 = vpop.f32.mrf.mxu0
      %v1184 = vadd.f32 %v1079, %v1183
      %v1185 = vpop.f32.mrf.mxu0
      %v1186 = vadd.f32 %v1081, %v1185
      %1187 = vmatmul.bf16.gmra.mxu0 %v1007
      %v1188 = vpop.f32.mrf.mxu0
      %v1189 = vadd.f32 %v1084, %v1188
      %v1190 = vpop.f32.mrf.mxu0
      %v1191 = vadd.f32 %v1086, %v1190
      %1192 = vmatmul.bf16.gmra.mxu0 %v1010
      %v1193 = vpop.f32.mrf.mxu0
      %v1194 = vadd.f32 %v1089, %v1193
      %v1195 = vpop.f32.mrf.mxu0
      %v1196 = vadd.f32 %v1091, %v1195
      %1197 = vmatmul.bf16.gmra.mxu0 %v1013
      %v1198 = vpop.f32.mrf.mxu0
      %v1199 = vadd.f32 %v1094, %v1198
      %v1200 = vpop.f32.mrf.mxu0
      %v1201 = vadd.f32 %v1096, %v1200
      %1202 = vmatmul.bf16.gmra.mxu0 %v1016
      %v1203 = vpop.f32.mrf.mxu0
      %v1204 = vadd.f32 %v1099, %v1203
      %v1205 = vpop.f32.mrf.mxu0
      %v1206 = vadd.f32 %v1101, %v1205
      %1207 = vmatmul.bf16.gmra.mxu0 %v1019
      %v1208 = vpop.f32.mrf.mxu0
      %v1209 = vadd.f32 %v1104, %v1208
      %v1210 = vpop.f32.mrf.mxu0
      %v1211 = vadd.f32 %v1106, %v1210
      %1212 = vmatmul.bf16.gmra.mxu0 %v1022
      %v1213 = vpop.f32.mrf.mxu0
      %v1214 = vadd.f32 %v1109, %v1213
      %v1215 = vpop.f32.mrf.mxu0
      %v1216 = vadd.f32 %v1111, %v1215
      %1217 = vmatmul.bf16.gmra.mxu0 %v1025
      %v1218 = vpop.f32.mrf.mxu0
      %v1219 = vadd.f32 %v1114, %v1218
      %v1220 = vpop.f32.mrf.mxu0
      %v1221 = vadd.f32 %v1116, %v1220
      %1222 = vmatmul.bf16.gmra.mxu0 %v1028
      %v1223 = vpop.f32.mrf.mxu0
      %v1224 = vadd.f32 %v1119, %v1223
      %v1225 = vpop.f32.mrf.mxu0
      %v1226 = vadd.f32 %v1121, %v1225
      %1227 = vmatmul.bf16.gmra.mxu0 %v1031
      %v1228 = vpop.f32.mrf.mxu0
      %v1229 = vadd.f32 %v1124, %v1228
      %v1230 = vpop.f32.mrf.mxu0
      %v1231 = vadd.f32 %v1126, %v1230
      %1232 = vdwg.mxu0
      %s1233 = scalar_lea.vmem %s1, 16
      %v1234 = vld [vmem:[%s1233] sm:$0xf]
      %v1235 = vld [vmem:[%s1233 + $0x4] sm:$0x3]
      %v1238 = vunpack.c.l.b16 %v895
      %v1239 = vunpack.c.l.b16 %v896
      %v1240 = vpack.c.b16 %v1239, %v1238
      %v1243 = vunpack.c.l.b16 %v1234
      %v1244 = vunpack.c.l.b16 %v1235
      %v1245 = vpack.c.b16 %v1244, %v1243
      %v1247 = vsel %vm987, %v1240, 0
      %v1250 = vsel %vm589, %v1245, 0
      %1252 = vmatpush.bf16.msra.mxu0 0
      %1253 = vmatpush.bf16.msra.mxu0 0
      %1254 = vmatpush.bf16.msra.mxu0 0
      %1255 = vmatpush.bf16.msra.mxu0 0
      %1256 = vmatpush.bf16.msra.mxu0 0
      %1257 = vmatpush.bf16.msra.mxu0 0
      %1258 = vmatpush.bf16.msra.mxu0 0
      %1259 = vmatpush.bf16.msra.mxu0 %v1250
      %1260 = vmatmul.bf16.gmra.mxu0 %v992
      %v1261 = vpop.f32.mrf.mxu0
      %v1262 = vadd.f32 0.0, %v1261
      %v1263 = vpop.f32.mrf.mxu0
      %v1264 = vadd.f32 0.0, %v1263
      %1265 = vmatmul.bf16.gmra.mxu0 %v995
      %v1266 = vpop.f32.mrf.mxu0
      %v1267 = vadd.f32 0.0, %v1266
      %v1268 = vpop.f32.mrf.mxu0
      %v1269 = vadd.f32 0.0, %v1268
      %1270 = vmatmul.bf16.gmra.mxu0 %v998
      %v1271 = vpop.f32.mrf.mxu0
      %v1272 = vadd.f32 0.0, %v1271
      %v1273 = vpop.f32.mrf.mxu0
      %v1274 = vadd.f32 0.0, %v1273
      %1275 = vmatmul.bf16.gmra.mxu0 %v1001
      %v1276 = vpop.f32.mrf.mxu0
      %v1277 = vadd.f32 0.0, %v1276
      %v1278 = vpop.f32.mrf.mxu0
      %v1279 = vadd.f32 0.0, %v1278
      %1280 = vmatmul.bf16.gmra.mxu0 %v1004
      %v1281 = vpop.f32.mrf.mxu0
      %v1282 = vadd.f32 0.0, %v1281
      %v1283 = vpop.f32.mrf.mxu0
      %v1284 = vadd.f32 0.0, %v1283
      %1285 = vmatmul.bf16.gmra.mxu0 %v1007
      %v1286 = vpop.f32.mrf.mxu0
      %v1287 = vadd.f32 0.0, %v1286
      %v1288 = vpop.f32.mrf.mxu0
      %v1289 = vadd.f32 0.0, %v1288
      %1290 = vmatmul.bf16.gmra.mxu0 %v1010
      %v1291 = vpop.f32.mrf.mxu0
      %v1292 = vadd.f32 0.0, %v1291
      %v1293 = vpop.f32.mrf.mxu0
      %v1294 = vadd.f32 0.0, %v1293
      %1295 = vmatmul.bf16.gmra.mxu0 %v1013
      %v1296 = vpop.f32.mrf.mxu0
      %v1297 = vadd.f32 0.0, %v1296
      %v1298 = vpop.f32.mrf.mxu0
      %v1299 = vadd.f32 0.0, %v1298
      %1300 = vmatmul.bf16.gmra.mxu0 %v1016
      %v1301 = vpop.f32.mrf.mxu0
      %v1302 = vadd.f32 0.0, %v1301
      %v1303 = vpop.f32.mrf.mxu0
      %v1304 = vadd.f32 0.0, %v1303
      %1305 = vmatmul.bf16.gmra.mxu0 %v1019
      %v1306 = vpop.f32.mrf.mxu0
      %v1307 = vadd.f32 0.0, %v1306
      %v1308 = vpop.f32.mrf.mxu0
      %v1309 = vadd.f32 0.0, %v1308
      %1310 = vmatmul.bf16.gmra.mxu0 %v1022
      %v1311 = vpop.f32.mrf.mxu0
      %v1312 = vadd.f32 0.0, %v1311
      %v1313 = vpop.f32.mrf.mxu0
      %v1314 = vadd.f32 0.0, %v1313
      %1315 = vmatmul.bf16.gmra.mxu0 %v1025
      %v1316 = vpop.f32.mrf.mxu0
      %v1317 = vadd.f32 0.0, %v1316
      %v1318 = vpop.f32.mrf.mxu0
      %v1319 = vadd.f32 0.0, %v1318
      %1320 = vmatmul.bf16.gmra.mxu0 %v1028
      %v1321 = vpop.f32.mrf.mxu0
      %v1322 = vadd.f32 0.0, %v1321
      %v1323 = vpop.f32.mrf.mxu0
      %v1324 = vadd.f32 0.0, %v1323
      %1325 = vmatmul.bf16.gmra.mxu0 %v1031
      %v1326 = vpop.f32.mrf.mxu0
      %v1327 = vadd.f32 0.0, %v1326
      %v1328 = vpop.f32.mrf.mxu0
      %v1329 = vadd.f32 0.0, %v1328
      %1330 = vmatmul.bf16.gmra.mxu0 %v1034
      %v1331 = vpop.f32.mrf.mxu0
      %v1332 = vadd.f32 0.0, %v1331
      %v1333 = vpop.f32.mrf.mxu0
      %v1334 = vadd.f32 0.0, %v1333
      %1335 = vmatmul.bf16.gmra.mxu0 %v1247
      %v1336 = vpop.f32.mrf.mxu0
      %v1337 = vadd.f32 0.0, %v1336
      %v1338 = vpop.f32.mrf.mxu0
      %v1339 = vadd.f32 0.0, %v1338
      %1340 = vdwg.mxu0
      %v1341 = vadd.f32 %v1154, %v1262
      %v1342 = vadd.f32 %v1156, %v1264
      %v1343 = vadd.f32 %v1159, %v1267
      %v1344 = vadd.f32 %v1161, %v1269
      %v1345 = vadd.f32 %v1164, %v1272
      %v1346 = vadd.f32 %v1166, %v1274
      %v1347 = vadd.f32 %v1169, %v1277
      %v1348 = vadd.f32 %v1171, %v1279
      %v1349 = vadd.f32 %v1174, %v1282
      %v1350 = vadd.f32 %v1176, %v1284
      %v1351 = vadd.f32 %v1179, %v1287
      %v1352 = vadd.f32 %v1181, %v1289
      %v1353 = vadd.f32 %v1184, %v1292
      %v1354 = vadd.f32 %v1186, %v1294
      %v1355 = vadd.f32 %v1189, %v1297
      %v1356 = vadd.f32 %v1191, %v1299
      %v1357 = vadd.f32 %v1194, %v1302
      %v1358 = vadd.f32 %v1196, %v1304
      %v1359 = vadd.f32 %v1199, %v1307
      %v1360 = vadd.f32 %v1201, %v1309
      %v1361 = vadd.f32 %v1204, %v1312
      %v1362 = vadd.f32 %v1206, %v1314
      %v1363 = vadd.f32 %v1209, %v1317
      %v1364 = vadd.f32 %v1211, %v1319
      %v1365 = vadd.f32 %v1214, %v1322
      %v1366 = vadd.f32 %v1216, %v1324
      %v1367 = vadd.f32 %v1219, %v1327
      %v1368 = vadd.f32 %v1221, %v1329
      %v1369 = vadd.f32 %v1224, %v1332
      %v1370 = vadd.f32 %v1226, %v1334
      %v1371 = vadd.f32 %v1229, %v1337
      %v1372 = vadd.f32 %v1231, %v1339
      %v1373 = vsel %vm206, %v1341, 0.0
      %v1374 = vsel %vm206, %v1342, 0.0
      %v1375 = vadd.f32 %v1373, %v1374
      %v1376 = vsel %vm206, %v1343, 0.0
      %v1377 = vadd.f32 %v1375, %v1376
      %v1378 = vsel %vm206, %v1344, 0.0
      %v1379 = vadd.f32 %v1377, %v1378
      %v1380 = vsel %vm206, %v1345, 0.0
      %v1381 = vadd.f32 %v1379, %v1380
      %v1382 = vsel %vm206, %v1346, 0.0
      %v1383 = vadd.f32 %v1381, %v1382
      %v1384 = vsel %vm206, %v1347, 0.0
      %v1385 = vadd.f32 %v1383, %v1384
      %v1386 = vsel %vm206, %v1348, 0.0
      %v1387 = vadd.f32 %v1385, %v1386
      %v1388 = vsel %vm206, %v1349, 0.0
      %v1389 = vadd.f32 %v1387, %v1388
      %v1390 = vsel %vm206, %v1350, 0.0
      %v1391 = vadd.f32 %v1389, %v1390
      %v1392 = vsel %vm206, %v1351, 0.0
      %v1393 = vadd.f32 %v1391, %v1392
      %v1394 = vsel %vm206, %v1352, 0.0
      %v1395 = vadd.f32 %v1393, %v1394
      %v1396 = vsel %vm206, %v1353, 0.0
      %v1397 = vadd.f32 %v1395, %v1396
      %v1398 = vsel %vm206, %v1354, 0.0
      %v1399 = vadd.f32 %v1397, %v1398
      %v1400 = vsel %vm206, %v1355, 0.0
      %v1401 = vadd.f32 %v1399, %v1400
      %v1402 = vsel %vm206, %v1356, 0.0
      %v1403 = vadd.f32 %v1401, %v1402
      %v1404 = vsel %vm206, %v1357, 0.0
      %v1405 = vadd.f32 %v1403, %v1404
      %v1406 = vsel %vm206, %v1358, 0.0
      %v1407 = vadd.f32 %v1405, %v1406
      %v1408 = vsel %vm206, %v1359, 0.0
      %v1409 = vadd.f32 %v1407, %v1408
      %v1410 = vsel %vm206, %v1360, 0.0
      %v1411 = vadd.f32 %v1409, %v1410
      %v1412 = vsel %vm206, %v1361, 0.0
      %v1413 = vadd.f32 %v1411, %v1412
      %v1414 = vsel %vm206, %v1362, 0.0
      %v1415 = vadd.f32 %v1413, %v1414
      %v1416 = vsel %vm206, %v1363, 0.0
      %v1417 = vadd.f32 %v1415, %v1416
      %v1418 = vsel %vm206, %v1364, 0.0
      %v1419 = vadd.f32 %v1417, %v1418
      %v1420 = vsel %vm206, %v1365, 0.0
      %v1421 = vadd.f32 %v1419, %v1420
      %v1422 = vsel %vm206, %v1366, 0.0
      %v1423 = vadd.f32 %v1421, %v1422
      %v1424 = vsel %vm206, %v1367, 0.0
      %v1425 = vadd.f32 %v1423, %v1424
      %v1426 = vsel %vm206, %v1368, 0.0
      %v1427 = vadd.f32 %v1425, %v1426
      %v1428 = vsel %vm206, %v1369, 0.0
      %v1429 = vadd.f32 %v1427, %v1428
      %v1430 = vsel %vm206, %v1370, 0.0
      %v1431 = vadd.f32 %v1429, %v1430
      %v1432 = vsel %vm206, %v1371, 0.0
      %v1433 = vadd.f32 %v1431, %v1432
      %v1434 = vsel %vm206, %v1372, 0.0
      %v1435 = vadd.f32 %v1433, %v1434
      %v1436 = vrot.slane %v1435, 4
      %v1437 = vadd.f32 %v1435, %v1436
      %v1438 = vrot.slane %v1437, 2
      %v1439 = vadd.f32 %v1437, %v1438
      %v1440 = vrot.slane %v1439, 1
      %v1441 = vadd.f32 %v1439, %v1440
      %v1442 = vmul.f32 %v1441, 0.00390625
      %v1443 = vmul.f32 %v1341, %v1341
      %v1444 = vmul.f32 %v1342, %v1342
      %v1445 = vmul.f32 %v1343, %v1343
      %v1446 = vmul.f32 %v1344, %v1344
      %v1447 = vmul.f32 %v1345, %v1345
      %v1448 = vmul.f32 %v1346, %v1346
      %v1449 = vmul.f32 %v1347, %v1347
      %v1450 = vmul.f32 %v1348, %v1348
      %v1451 = vmul.f32 %v1349, %v1349
      %v1452 = vmul.f32 %v1350, %v1350
      %v1453 = vmul.f32 %v1351, %v1351
      %v1454 = vmul.f32 %v1352, %v1352
      %v1455 = vmul.f32 %v1353, %v1353
      %v1456 = vmul.f32 %v1354, %v1354
      %v1457 = vmul.f32 %v1355, %v1355
      %v1458 = vmul.f32 %v1356, %v1356
      %v1459 = vmul.f32 %v1357, %v1357
      %v1460 = vmul.f32 %v1358, %v1358
      %v1461 = vmul.f32 %v1359, %v1359
      %v1462 = vmul.f32 %v1360, %v1360
      %v1463 = vmul.f32 %v1361, %v1361
      %v1464 = vmul.f32 %v1362, %v1362
      %v1465 = vmul.f32 %v1363, %v1363
      %v1466 = vmul.f32 %v1364, %v1364
      %v1467 = vmul.f32 %v1365, %v1365
      %v1468 = vmul.f32 %v1366, %v1366
      %v1469 = vmul.f32 %v1367, %v1367
      %v1470 = vmul.f32 %v1368, %v1368
      %v1471 = vmul.f32 %v1369, %v1369
      %v1472 = vmul.f32 %v1370, %v1370
      %v1473 = vmul.f32 %v1371, %v1371
      %v1474 = vmul.f32 %v1372, %v1372
      %v1475 = vsel %vm206, %v1443, 0.0
      %v1476 = vsel %vm206, %v1444, 0.0
      %v1477 = vadd.f32 %v1475, %v1476
      %v1478 = vsel %vm206, %v1445, 0.0
      %v1479 = vadd.f32 %v1477, %v1478
      %v1480 = vsel %vm206, %v1446, 0.0
      %v1481 = vadd.f32 %v1479, %v1480
      %v1482 = vsel %vm206, %v1447, 0.0
      %v1483 = vadd.f32 %v1481, %v1482
      %v1484 = vsel %vm206, %v1448, 0.0
      %v1485 = vadd.f32 %v1483, %v1484
      %v1486 = vsel %vm206, %v1449, 0.0
      %v1487 = vadd.f32 %v1485, %v1486
      %v1488 = vsel %vm206, %v1450, 0.0
      %v1489 = vadd.f32 %v1487, %v1488
      %v1490 = vsel %vm206, %v1451, 0.0
      %v1491 = vadd.f32 %v1489, %v1490
      %v1492 = vsel %vm206, %v1452, 0.0
      %v1493 = vadd.f32 %v1491, %v1492
      %v1494 = vsel %vm206, %v1453, 0.0
      %v1495 = vadd.f32 %v1493, %v1494
      %v1496 = vsel %vm206, %v1454, 0.0
      %v1497 = vadd.f32 %v1495, %v1496
      %v1498 = vsel %vm206, %v1455, 0.0
      %v1499 = vadd.f32 %v1497, %v1498
      %v1500 = vsel %vm206, %v1456, 0.0
      %v1501 = vadd.f32 %v1499, %v1500
      %v1502 = vsel %vm206, %v1457, 0.0
      %v1503 = vadd.f32 %v1501, %v1502
      %v1504 = vsel %vm206, %v1458, 0.0
      %v1505 = vadd.f32 %v1503, %v1504
      %v1506 = vsel %vm206, %v1459, 0.0
      %v1507 = vadd.f32 %v1505, %v1506
      %v1508 = vsel %vm206, %v1460, 0.0
      %v1509 = vadd.f32 %v1507, %v1508
      %v1510 = vsel %vm206, %v1461, 0.0
      %v1511 = vadd.f32 %v1509, %v1510
      %v1512 = vsel %vm206, %v1462, 0.0
      %v1513 = vadd.f32 %v1511, %v1512
      %v1514 = vsel %vm206, %v1463, 0.0
      %v1515 = vadd.f32 %v1513, %v1514
      %v1516 = vsel %vm206, %v1464, 0.0
      %v1517 = vadd.f32 %v1515, %v1516
      %v1518 = vsel %vm206, %v1465, 0.0
      %v1519 = vadd.f32 %v1517, %v1518
      %v1520 = vsel %vm206, %v1466, 0.0
      %v1521 = vadd.f32 %v1519, %v1520
      %v1522 = vsel %vm206, %v1467, 0.0
      %v1523 = vadd.f32 %v1521, %v1522
      %v1524 = vsel %vm206, %v1468, 0.0
      %v1525 = vadd.f32 %v1523, %v1524
      %v1526 = vsel %vm206, %v1469, 0.0
      %v1527 = vadd.f32 %v1525, %v1526
      %v1528 = vsel %vm206, %v1470, 0.0
      %v1529 = vadd.f32 %v1527, %v1528
      %v1530 = vsel %vm206, %v1471, 0.0
      %v1531 = vadd.f32 %v1529, %v1530
      %v1532 = vsel %vm206, %v1472, 0.0
      %v1533 = vadd.f32 %v1531, %v1532
      %v1534 = vsel %vm206, %v1473, 0.0
      %v1535 = vadd.f32 %v1533, %v1534
      %v1536 = vsel %vm206, %v1474, 0.0
      %v1537 = vadd.f32 %v1535, %v1536
      %v1538 = vrot.slane %v1537, 4
      %v1539 = vadd.f32 %v1537, %v1538
      %v1540 = vrot.slane %v1539, 2
      %v1541 = vadd.f32 %v1539, %v1540
      %v1542 = vrot.slane %v1541, 1
      %v1543 = vadd.f32 %v1541, %v1542
      %v1544 = vmul.f32 %v1543, 0.00390625
      %v1545 = vmul.f32 %v1442, %v1442
      %v1546 = vsub.f32 %v1544, %v1545
      %v1547 = vmax.f32 %v1546, 0.0
      %v1548 = vadd.f32 %v1547, 1e-05
      %v1549 = vrsqrt.pop %v1548
      %v1550 = vmul.f32 %v1549, %v1548
      %v1551 = vmul.f32 %v1550, %v1549
      %v1552 = vmul.f32 0.5, %v1551
      %v1553 = vsub.f32 1.5, %v1552
      %v1554 = vmul.f32 %v1549, %v1553
      %vm1555 = vweird.f32 %v1548
      %vm1556 = vweird.f32 %v1549
      %vm1557 = vmor %vm1555, %vm1556
      %v1558 = vsel %vm1557, %v1549, %v1554
      %v1559 = vmul.f32 %v204, %v1558
      %v1560 = vmul.f32 %v1442, %v1559
      %v1562 = vrot.slane %v1560, 7
      %v1564 = vsub.f32 %v204, %v1562
      %v1565 = vperm.slane %v1559, 0
      %v1566 = vmul.f32 %v1341, %v1565
      %v1567 = vmul.f32 %v1342, %v1565
      %v1568 = vmul.f32 %v1343, %v1565
      %v1569 = vmul.f32 %v1344, %v1565
      %v1570 = vmul.f32 %v1345, %v1565
      %v1571 = vmul.f32 %v1346, %v1565
      %v1572 = vmul.f32 %v1347, %v1565
      %v1573 = vmul.f32 %v1348, %v1565
      %v1574 = vmul.f32 %v1349, %v1565
      %v1575 = vmul.f32 %v1350, %v1565
      %v1576 = vmul.f32 %v1351, %v1565
      %v1577 = vmul.f32 %v1352, %v1565
      %v1578 = vmul.f32 %v1353, %v1565
      %v1579 = vmul.f32 %v1354, %v1565
      %v1580 = vmul.f32 %v1355, %v1565
      %v1581 = vmul.f32 %v1356, %v1565
      %v1582 = vmul.f32 %v1357, %v1565
      %v1583 = vmul.f32 %v1358, %v1565
      %v1584 = vmul.f32 %v1359, %v1565
      %v1585 = vmul.f32 %v1360, %v1565
      %v1586 = vmul.f32 %v1361, %v1565
      %v1587 = vmul.f32 %v1362, %v1565
      %v1588 = vmul.f32 %v1363, %v1565
      %v1589 = vmul.f32 %v1364, %v1565
      %v1590 = vmul.f32 %v1365, %v1565
      %v1591 = vmul.f32 %v1366, %v1565
      %v1592 = vmul.f32 %v1367, %v1565
      %v1593 = vmul.f32 %v1368, %v1565
      %v1594 = vmul.f32 %v1369, %v1565
      %v1595 = vmul.f32 %v1370, %v1565
      %v1596 = vmul.f32 %v1371, %v1565
      %v1597 = vmul.f32 %v1372, %v1565
      %v1598 = vperm.slane %v1564, 1
      %v1599 = vadd.f32 %v1566, %v1598
      %v1600 = vadd.f32 %v1567, %v1598
      %v1601 = vadd.f32 %v1568, %v1598
      %v1602 = vadd.f32 %v1569, %v1598
      %v1603 = vadd.f32 %v1570, %v1598
      %v1604 = vadd.f32 %v1571, %v1598
      %v1605 = vadd.f32 %v1572, %v1598
      %v1606 = vadd.f32 %v1573, %v1598
      %v1607 = vadd.f32 %v1574, %v1598
      %v1608 = vadd.f32 %v1575, %v1598
      %v1609 = vadd.f32 %v1576, %v1598
      %v1610 = vadd.f32 %v1577, %v1598
      %v1611 = vadd.f32 %v1578, %v1598
      %v1612 = vadd.f32 %v1579, %v1598
      %v1613 = vadd.f32 %v1580, %v1598
      %v1614 = vadd.f32 %v1581, %v1598
      %v1615 = vadd.f32 %v1582, %v1598
      %v1616 = vadd.f32 %v1583, %v1598
      %v1617 = vadd.f32 %v1584, %v1598
      %v1618 = vadd.f32 %v1585, %v1598
      %v1619 = vadd.f32 %v1586, %v1598
      %v1620 = vadd.f32 %v1587, %v1598
      %v1621 = vadd.f32 %v1588, %v1598
      %v1622 = vadd.f32 %v1589, %v1598
      %v1623 = vadd.f32 %v1590, %v1598
      %v1624 = vadd.f32 %v1591, %v1598
      %v1625 = vadd.f32 %v1592, %v1598
      %v1626 = vadd.f32 %v1593, %v1598
      %v1627 = vadd.f32 %v1594, %v1598
      %v1628 = vadd.f32 %v1595, %v1598
      %v1629 = vadd.f32 %v1596, %v1598
      %v1630 = vadd.f32 %v1597, %v1598
      %v1631 = vmax.f32 %v1599, 0.0
      %v1632 = vmax.f32 %v1600, 0.0
      %v1633 = vmax.f32 %v1601, 0.0
      %v1634 = vmax.f32 %v1602, 0.0
      %v1635 = vmax.f32 %v1603, 0.0
      %v1636 = vmax.f32 %v1604, 0.0
      %v1637 = vmax.f32 %v1605, 0.0
      %v1638 = vmax.f32 %v1606, 0.0
      %v1639 = vmax.f32 %v1607, 0.0
      %v1640 = vmax.f32 %v1608, 0.0
      %v1641 = vmax.f32 %v1609, 0.0
      %v1642 = vmax.f32 %v1610, 0.0
      %v1643 = vmax.f32 %v1611, 0.0
      %v1644 = vmax.f32 %v1612, 0.0
      %v1645 = vmax.f32 %v1613, 0.0
      %v1646 = vmax.f32 %v1614, 0.0
      %v1647 = vmax.f32 %v1615, 0.0
      %v1648 = vmax.f32 %v1616, 0.0
      %v1649 = vmax.f32 %v1617, 0.0
      %v1650 = vmax.f32 %v1618, 0.0
      %v1651 = vmax.f32 %v1619, 0.0
      %v1652 = vmax.f32 %v1620, 0.0
      %v1653 = vmax.f32 %v1621, 0.0
      %v1654 = vmax.f32 %v1622, 0.0
      %v1655 = vmax.f32 %v1623, 0.0
      %v1656 = vmax.f32 %v1624, 0.0
      %v1657 = vmax.f32 %v1625, 0.0
      %v1658 = vmax.f32 %v1626, 0.0
      %v1659 = vmax.f32 %v1627, 0.0
      %v1660 = vmax.f32 %v1628, 0.0
      %v1661 = vmax.f32 %v1629, 0.0
      %v1662 = vmax.f32 %v1630, 0.0
      %s1663 = scalar_lea.vmem [#allocation3], 24
      %1664 = vst.msk [vmem:[%s1663 + $0x1] sm:$0xff] %vm206, %v1631
      %1665 = vst.msk [vmem:[%s1663 + $0x9] sm:$0xff] %vm206, %v1632
      %1666 = vst.msk [vmem:[%s1663 + $0x19] sm:$0xff] %vm206, %v1633
      %1667 = vst.msk [vmem:[%s1663 + $0x21] sm:$0xff] %vm206, %v1634
      %1668 = vst.msk [vmem:[%s1663 + $0x31] sm:$0xff] %vm206, %v1635
      %1669 = vst.msk [vmem:[%s1663 + $0x39] sm:$0xff] %vm206, %v1636
      %1670 = vst.msk [vmem:[%s1663 + $0x49] sm:$0xff] %vm206, %v1637
      %1671 = vst.msk [vmem:[%s1663 + $0x51] sm:$0xff] %vm206, %v1638
      %1672 = vst.msk [vmem:[%s1663 + $0x61] sm:$0xff] %vm206, %v1639
      %1673 = vst.msk [vmem:[%s1663 + $0x69] sm:$0xff] %vm206, %v1640
      %1674 = vst.msk [vmem:[%s1663 + $0x79] sm:$0xff] %vm206, %v1641
      %1675 = vst.msk [vmem:[%s1663 + $0x81] sm:$0xff] %vm206, %v1642
      %1676 = vst.msk [vmem:[%s1663 + $0x91] sm:$0xff] %vm206, %v1643
      %1677 = vst.msk [vmem:[%s1663 + $0x99] sm:$0xff] %vm206, %v1644
      %1678 = vst.msk [vmem:[%s1663 + $0xa9] sm:$0xff] %vm206, %v1645
      %1679 = vst.msk [vmem:[%s1663 + $0xb1] sm:$0xff] %vm206, %v1646
      %1680 = vst.msk [vmem:[%s1663 + $0xc1] sm:$0xff] %vm206, %v1647
      %1681 = vst.msk [vmem:[%s1663 + $0xc9] sm:$0xff] %vm206, %v1648
      %1682 = vst.msk [vmem:[%s1663 + $0xd9] sm:$0xff] %vm206, %v1649
      %1683 = vst.msk [vmem:[%s1663 + $0xe1] sm:$0xff] %vm206, %v1650
      %1684 = vst.msk [vmem:[%s1663 + $0xf1] sm:$0xff] %vm206, %v1651
      %1685 = vst.msk [vmem:[%s1663 + $0xf9] sm:$0xff] %vm206, %v1652
      %1686 = vst.msk [vmem:[%s1663 + $0x109] sm:$0xff] %vm206, %v1653
      %1687 = vst.msk [vmem:[%s1663 + $0x111] sm:$0xff] %vm206, %v1654
      %1688 = vst.msk [vmem:[%s1663 + $0x121] sm:$0xff] %vm206, %v1655
      %1689 = vst.msk [vmem:[%s1663 + $0x129] sm:$0xff] %vm206, %v1656
      %1690 = vst.msk [vmem:[%s1663 + $0x139] sm:$0xff] %vm206, %v1657
      %1691 = vst.msk [vmem:[%s1663 + $0x141] sm:$0xff] %vm206, %v1658
      %1692 = vst.msk [vmem:[%s1663 + $0x151] sm:$0xff] %vm206, %v1659
      %1693 = vst.msk [vmem:[%s1663 + $0x159] sm:$0xff] %vm206, %v1660
      %1694 = vst.msk [vmem:[%s1663 + $0x169] sm:$0xff] %vm206, %v1661
      %1695 = vst.msk [vmem:[%s1663 + $0x171] sm:$0xff] %vm206, %v1662
      %1696 = vst.msk [vmem:[#allocation3 + $0x1] sm:$0xff] %vm206, %v1633
      %1697 = vst.msk [vmem:[#allocation3 + $0x9] sm:$0xff] %vm206, %v1634
      %s1698 = scalar_lea.vmem [#allocation3], 408
      %1699 = vst.msk [vmem:[%s1698 + $0x1] sm:$0xff] %vm206, %v1659
      %1700 = vst.msk [vmem:[%s1698 + $0x9] sm:$0xff] %vm206, %v1660
      %1701 = vst.msk [vmem:[%s1663 - $0x1] sm:$0x2] %vm244, %v1631
      %1702 = vst.msk [vmem:[%s1663 + $0x17] sm:$0x2] %vm244, %v1633
      %1703 = vst.msk [vmem:[%s1663 + $0x2f] sm:$0x2] %vm244, %v1635
      %1704 = vst.msk [vmem:[%s1663 + $0x47] sm:$0x2] %vm244, %v1637
      %1705 = vst.msk [vmem:[%s1663 + $0x5f] sm:$0x2] %vm244, %v1639
      %1706 = vst.msk [vmem:[%s1663 + $0x77] sm:$0x2] %vm244, %v1641
      %1707 = vst.msk [vmem:[%s1663 + $0x8f] sm:$0x2] %vm244, %v1643
      %1708 = vst.msk [vmem:[%s1663 + $0xa7] sm:$0x2] %vm244, %v1645
      %1709 = vst.msk [vmem:[%s1663 + $0xbf] sm:$0x2] %vm244, %v1647
      %1710 = vst.msk [vmem:[%s1663 + $0xd7] sm:$0x2] %vm244, %v1649
      %1711 = vst.msk [vmem:[%s1663 + $0xef] sm:$0x2] %vm244, %v1651
      %1712 = vst.msk [vmem:[%s1663 + $0x107] sm:$0x2] %vm244, %v1653
      %1713 = vst.msk [vmem:[%s1663 + $0x11f] sm:$0x2] %vm244, %v1655
      %1714 = vst.msk [vmem:[%s1663 + $0x137] sm:$0x2] %vm244, %v1657
      %1715 = vst.msk [vmem:[%s1663 + $0x14f] sm:$0x2] %vm244, %v1659
      %1716 = vst.msk [vmem:[%s1663 + $0x167] sm:$0x2] %vm244, %v1661
      %1717 = vst.msk [vmem:[%s1663 + $0xb] sm:$0x40] %vm261, %v1632
      %1718 = vst.msk [vmem:[%s1663 + $0x23] sm:$0x40] %vm261, %v1634
      %1719 = vst.msk [vmem:[%s1663 + $0x3b] sm:$0x40] %vm261, %v1636
      %1720 = vst.msk [vmem:[%s1663 + $0x53] sm:$0x40] %vm261, %v1638
      %1721 = vst.msk [vmem:[%s1663 + $0x6b] sm:$0x40] %vm261, %v1640
      %1722 = vst.msk [vmem:[%s1663 + $0x83] sm:$0x40] %vm261, %v1642
      %1723 = vst.msk [vmem:[%s1663 + $0x9b] sm:$0x40] %vm261, %v1644
      %1724 = vst.msk [vmem:[%s1663 + $0xb3] sm:$0x40] %vm261, %v1646
      %1725 = vst.msk [vmem:[%s1663 + $0xcb] sm:$0x40] %vm261, %v1648
      %1726 = vst.msk [vmem:[%s1663 + $0xe3] sm:$0x40] %vm261, %v1650
      %1727 = vst.msk [vmem:[%s1663 + $0xfb] sm:$0x40] %vm261, %v1652
      %1728 = vst.msk [vmem:[%s1663 + $0x113] sm:$0x40] %vm261, %v1654
      %1729 = vst.msk [vmem:[%s1663 + $0x12b] sm:$0x40] %vm261, %v1656
      %1730 = vst.msk [vmem:[%s1663 + $0x143] sm:$0x40] %vm261, %v1658
      %1731 = vst.msk [vmem:[%s1663 + $0x15b] sm:$0x40] %vm261, %v1660
      %1732 = vst.msk [vmem:[%s1663 + $0x173] sm:$0x40] %vm261, %v1662
      %1733 = vst.msk [vmem:[#allocation3 - $0x1] sm:$0x2] %vm244, %v1633
      %1734 = vst.msk [vmem:[#allocation3 + $0xb] sm:$0x40] %vm261, %v1634
      %1735 = vst.msk [vmem:[%s1698 - $0x1] sm:$0x2] %vm244, %v1659
      %1736 = vst.msk [vmem:[%s1698 + $0xb] sm:$0x40] %vm261, %v1660
      %v1737 = vld [vmem:[#allocation3] sm:$0xff]
      %v1738 = vld [vmem:[#allocation3 + $0x8] sm:$0xff]
      %v1739 = vld [vmem:[#allocation3 + $0x10] sm:$0x3]
      %v1740 = vld [vmem:[#allocation3 + $0x18] sm:$0xff]
      %v1741 = vld [vmem:[#allocation3 + $0x20] sm:$0xff]
      %v1742 = vld [vmem:[#allocation3 + $0x28] sm:$0x3]
      %v1743 = vld [vmem:[#allocation3 + $0x30] sm:$0xff]
      %v1744 = vld [vmem:[#allocation3 + $0x38] sm:$0xff]
      %v1745 = vld [vmem:[#allocation3 + $0x40] sm:$0x3]
      %v1746 = vld [vmem:[#allocation3 + $0x48] sm:$0xff]
      %v1747 = vld [vmem:[#allocation3 + $0x50] sm:$0xff]
      %v1748 = vld [vmem:[#allocation3 + $0x58] sm:$0x3]
      %v1749 = vld [vmem:[#allocation3 + $0x60] sm:$0xff]
      %v1750 = vld [vmem:[#allocation3 + $0x68] sm:$0xff]
      %v1751 = vld [vmem:[#allocation3 + $0x70] sm:$0x3]
      %v1752 = vld [vmem:[#allocation3 + $0x78] sm:$0xff]
      %v1753 = vld [vmem:[#allocation3 + $0x80] sm:$0xff]
      %v1754 = vld [vmem:[#allocation3 + $0x88] sm:$0x3]
      %v1755 = vld [vmem:[#allocation3 + $0x90] sm:$0xff]
      %v1756 = vld [vmem:[#allocation3 + $0x98] sm:$0xff]
      %v1757 = vld [vmem:[#allocation3 + $0xa0] sm:$0x3]
      %v1758 = vld [vmem:[#allocation3 + $0xa8] sm:$0xff]
      %v1759 = vld [vmem:[#allocation3 + $0xb0] sm:$0xff]
      %v1760 = vld [vmem:[#allocation3 + $0xb8] sm:$0x3]
      %v1761 = vld [vmem:[#allocation3 + $0xc0] sm:$0xff]
      %v1762 = vld [vmem:[#allocation3 + $0xc8] sm:$0xff]
      %v1763 = vld [vmem:[#allocation3 + $0xd0] sm:$0x3]
      %v1764 = vld [vmem:[#allocation3 + $0xd8] sm:$0xff]
      %v1765 = vld [vmem:[#allocation3 + $0xe0] sm:$0xff]
      %v1766 = vld [vmem:[#allocation3 + $0xe8] sm:$0x3]
      %v1767 = vld [vmem:[#allocation3 + $0xf0] sm:$0xff]
      %v1768 = vld [vmem:[#allocation3 + $0xf8] sm:$0xff]
      %v1769 = vld [vmem:[#allocation3 + $0x100] sm:$0x3]
      %v1770 = vld [vmem:[#allocation3 + $0x108] sm:$0xff]
      %v1771 = vld [vmem:[#allocation3 + $0x110] sm:$0xff]
      %v1772 = vld [vmem:[#allocation3 + $0x118] sm:$0x3]
      %v1773 = vld [vmem:[#allocation3 + $0x120] sm:$0xff]
      %v1774 = vld [vmem:[#allocation3 + $0x128] sm:$0xff]
      %v1775 = vld [vmem:[#allocation3 + $0x130] sm:$0x3]
      %v1776 = vld [vmem:[#allocation3 + $0x138] sm:$0xff]
      %v1777 = vld [vmem:[#allocation3 + $0x140] sm:$0xff]
      %v1778 = vld [vmem:[#allocation3 + $0x148] sm:$0x3]
      %v1779 = vld [vmem:[#allocation3 + $0x150] sm:$0xff]
      %v1780 = vld [vmem:[#allocation3 + $0x158] sm:$0xff]
      %v1781 = vld [vmem:[#allocation3 + $0x160] sm:$0x3]
      %v1782 = vld [vmem:[#allocation3 + $0x168] sm:$0xff]
      %v1783 = vld [vmem:[#allocation3 + $0x170] sm:$0xff]
      %v1784 = vld [vmem:[#allocation3 + $0x178] sm:$0x3]
      %v1785 = vld [vmem:[#allocation3 + $0x180] sm:$0xff]
      %v1786 = vld [vmem:[#allocation3 + $0x188] sm:$0xff]
      %v1787 = vld [vmem:[#allocation3 + $0x190] sm:$0x3]
      %v1788 = vld [vmem:[#allocation3 + $0x198] sm:$0xff]
      %v1789 = vld [vmem:[#allocation3 + $0x1a0] sm:$0xff]
      %v1790 = vld [vmem:[#allocation3 + $0x1a8] sm:$0x3]
      %v1845 = vrot.slane %v1737, 1
      %v1846 = vrot.slane %v1738, 1
      %v1847 = vsel %vm390, %v1845, %v1846
      %v1848 = vrot.slane %v1739, 1
      %v1849 = vsel %vm390, %v1846, %v1848
      %v1850 = vrot.slane %v1740, 1
      %v1851 = vrot.slane %v1741, 1
      %v1852 = vsel %vm390, %v1850, %v1851
      %v1853 = vrot.slane %v1742, 1
      %v1854 = vsel %vm390, %v1851, %v1853
      %v1855 = vrot.slane %v1743, 1
      %v1856 = vrot.slane %v1744, 1
      %v1857 = vsel %vm390, %v1855, %v1856
      %v1858 = vrot.slane %v1745, 1
      %v1859 = vsel %vm390, %v1856, %v1858
      %v1860 = vrot.slane %v1746, 1
      %v1861 = vrot.slane %v1747, 1
      %v1862 = vsel %vm390, %v1860, %v1861
      %v1863 = vrot.slane %v1748, 1
      %v1864 = vsel %vm390, %v1861, %v1863
      %v1865 = vrot.slane %v1749, 1
      %v1866 = vrot.slane %v1750, 1
      %v1867 = vsel %vm390, %v1865, %v1866
      %v1868 = vrot.slane %v1751, 1
      %v1869 = vsel %vm390, %v1866, %v1868
      %v1870 = vrot.slane %v1752, 1
      %v1871 = vrot.slane %v1753, 1
      %v1872 = vsel %vm390, %v1870, %v1871
      %v1873 = vrot.slane %v1754, 1
      %v1874 = vsel %vm390, %v1871, %v1873
      %v1875 = vrot.slane %v1755, 1
      %v1876 = vrot.slane %v1756, 1
      %v1877 = vsel %vm390, %v1875, %v1876
      %v1878 = vrot.slane %v1757, 1
      %v1879 = vsel %vm390, %v1876, %v1878
      %v1880 = vrot.slane %v1758, 1
      %v1881 = vrot.slane %v1759, 1
      %v1882 = vsel %vm390, %v1880, %v1881
      %v1883 = vrot.slane %v1760, 1
      %v1884 = vsel %vm390, %v1881, %v1883
      %v1885 = vrot.slane %v1761, 1
      %v1886 = vrot.slane %v1762, 1
      %v1887 = vsel %vm390, %v1885, %v1886
      %v1888 = vrot.slane %v1763, 1
      %v1889 = vsel %vm390, %v1886, %v1888
      %v1890 = vrot.slane %v1764, 1
      %v1891 = vrot.slane %v1765, 1
      %v1892 = vsel %vm390, %v1890, %v1891
      %v1893 = vrot.slane %v1766, 1
      %v1894 = vsel %vm390, %v1891, %v1893
      %v1895 = vrot.slane %v1767, 1
      %v1896 = vrot.slane %v1768, 1
      %v1897 = vsel %vm390, %v1895, %v1896
      %v1898 = vrot.slane %v1769, 1
      %v1899 = vsel %vm390, %v1896, %v1898
      %v1900 = vrot.slane %v1770, 1
      %v1901 = vrot.slane %v1771, 1
      %v1902 = vsel %vm390, %v1900, %v1901
      %v1903 = vrot.slane %v1772, 1
      %v1904 = vsel %vm390, %v1901, %v1903
      %v1905 = vrot.slane %v1773, 1
      %v1906 = vrot.slane %v1774, 1
      %v1907 = vsel %vm390, %v1905, %v1906
      %v1908 = vrot.slane %v1775, 1
      %v1909 = vsel %vm390, %v1906, %v1908
      %v1910 = vrot.slane %v1776, 1
      %v1911 = vrot.slane %v1777, 1
      %v1912 = vsel %vm390, %v1910, %v1911
      %v1913 = vrot.slane %v1778, 1
      %v1914 = vsel %vm390, %v1911, %v1913
      %v1915 = vrot.slane %v1779, 1
      %v1916 = vrot.slane %v1780, 1
      %v1917 = vsel %vm390, %v1915, %v1916
      %v1918 = vrot.slane %v1781, 1
      %v1919 = vsel %vm390, %v1916, %v1918
      %v1920 = vrot.slane %v1782, 1
      %v1921 = vrot.slane %v1783, 1
      %v1922 = vsel %vm390, %v1920, %v1921
      %v1923 = vrot.slane %v1784, 1
      %v1924 = vsel %vm390, %v1921, %v1923
      %v1925 = vrot.slane %v1785, 1
      %v1926 = vrot.slane %v1786, 1
      %v1927 = vsel %vm390, %v1925, %v1926
      %v1928 = vrot.slane %v1787, 1
      %v1929 = vsel %vm390, %v1926, %v1928
      %v1930 = vrot.slane %v1788, 1
      %v1931 = vrot.slane %v1789, 1
      %v1932 = vsel %vm390, %v1930, %v1931
      %v1933 = vrot.slane %v1790, 1
      %v1934 = vsel %vm390, %v1931, %v1933
      %1935 = vrot.lane.b32.xlu0 %v1847, 4
      %v1936 = vpop.permute.xlu0 %1935
      %1937 = vrot.lane.b32.xlu0 %v1849, 4
      %v1938 = vpop.permute.xlu0 %1937
      %1939 = vrot.lane.b32.xlu0 %v1852, 4
      %v1940 = vpop.permute.xlu0 %1939
      %1941 = vrot.lane.b32.xlu0 %v1854, 4
      %v1942 = vpop.permute.xlu0 %1941
      %1943 = vrot.lane.b32.xlu0 %v1857, 4
      %v1944 = vpop.permute.xlu0 %1943
      %1945 = vrot.lane.b32.xlu0 %v1859, 4
      %v1946 = vpop.permute.xlu0 %1945
      %1947 = vrot.lane.b32.xlu0 %v1862, 4
      %v1948 = vpop.permute.xlu0 %1947
      %1949 = vrot.lane.b32.xlu0 %v1864, 4
      %v1950 = vpop.permute.xlu0 %1949
      %1951 = vrot.lane.b32.xlu0 %v1867, 4
      %v1952 = vpop.permute.xlu0 %1951
      %1953 = vrot.lane.b32.xlu0 %v1869, 4
      %v1954 = vpop.permute.xlu0 %1953
      %1955 = vrot.lane.b32.xlu0 %v1872, 4
      %v1956 = vpop.permute.xlu0 %1955
      %1957 = vrot.lane.b32.xlu0 %v1874, 4
      %v1958 = vpop.permute.xlu0 %1957
      %1959 = vrot.lane.b32.xlu0 %v1877, 4
      %v1960 = vpop.permute.xlu0 %1959
      %1961 = vrot.lane.b32.xlu0 %v1879, 4
      %v1962 = vpop.permute.xlu0 %1961
      %1963 = vrot.lane.b32.xlu0 %v1882, 4
      %v1964 = vpop.permute.xlu0 %1963
      %1965 = vrot.lane.b32.xlu0 %v1884, 4
      %v1966 = vpop.permute.xlu0 %1965
      %1967 = vrot.lane.b32.xlu0 %v1887, 4
      %v1968 = vpop.permute.xlu0 %1967
      %1969 = vrot.lane.b32.xlu0 %v1889, 4
      %v1970 = vpop.permute.xlu0 %1969
      %1971 = vrot.lane.b32.xlu0 %v1892, 4
      %v1972 = vpop.permute.xlu0 %1971
      %1973 = vrot.lane.b32.xlu0 %v1894, 4
      %v1974 = vpop.permute.xlu0 %1973
      %1975 = vrot.lane.b32.xlu0 %v1897, 4
      %v1976 = vpop.permute.xlu0 %1975
      %1977 = vrot.lane.b32.xlu0 %v1899, 4
      %v1978 = vpop.permute.xlu0 %1977
      %1979 = vrot.lane.b32.xlu0 %v1902, 4
      %v1980 = vpop.permute.xlu0 %1979
      %1981 = vrot.lane.b32.xlu0 %v1904, 4
      %v1982 = vpop.permute.xlu0 %1981
      %1983 = vrot.lane.b32.xlu0 %v1907, 4
      %v1984 = vpop.permute.xlu0 %1983
      %1985 = vrot.lane.b32.xlu0 %v1909, 4
      %v1986 = vpop.permute.xlu0 %1985
      %1987 = vrot.lane.b32.xlu0 %v1912, 4
      %v1988 = vpop.permute.xlu0 %1987
      %1989 = vrot.lane.b32.xlu0 %v1914, 4
      %v1990 = vpop.permute.xlu0 %1989
      %1991 = vrot.lane.b32.xlu0 %v1917, 4
      %v1992 = vpop.permute.xlu0 %1991
      %1993 = vrot.lane.b32.xlu0 %v1919, 4
      %v1994 = vpop.permute.xlu0 %1993
      %1995 = vrot.lane.b32.xlu0 %v1922, 4
      %v1996 = vpop.permute.xlu0 %1995
      %1997 = vrot.lane.b32.xlu0 %v1924, 4
      %v1998 = vpop.permute.xlu0 %1997
      %1999 = vrot.lane.b32.xlu0 %v1927, 4
      %v2000 = vpop.permute.xlu0 %1999
      %2001 = vrot.lane.b32.xlu0 %v1929, 4
      %v2002 = vpop.permute.xlu0 %2001
      %2003 = vrot.lane.b32.xlu0 %v1932, 4
      %v2004 = vpop.permute.xlu0 %2003
      %2005 = vrot.lane.b32.xlu0 %v1934, 4
      %v2006 = vpop.permute.xlu0 %2005
      %v2043 = vrot.slane %v1737, 2
      %v2044 = vrot.slane %v1738, 2
      %v2045 = vsel %vm589, %v2043, %v2044
      %v2046 = vrot.slane %v1739, 2
      %v2047 = vsel %vm589, %v2044, %v2046
      %v2048 = vrot.slane %v1740, 2
      %v2049 = vrot.slane %v1741, 2
      %v2050 = vsel %vm589, %v2048, %v2049
      %v2051 = vrot.slane %v1742, 2
      %v2052 = vsel %vm589, %v2049, %v2051
      %v2053 = vrot.slane %v1743, 2
      %v2054 = vrot.slane %v1744, 2
      %v2055 = vsel %vm589, %v2053, %v2054
      %v2056 = vrot.slane %v1745, 2
      %v2057 = vsel %vm589, %v2054, %v2056
      %v2058 = vrot.slane %v1746, 2
      %v2059 = vrot.slane %v1747, 2
      %v2060 = vsel %vm589, %v2058, %v2059
      %v2061 = vrot.slane %v1748, 2
      %v2062 = vsel %vm589, %v2059, %v2061
      %v2063 = vrot.slane %v1749, 2
      %v2064 = vrot.slane %v1750, 2
      %v2065 = vsel %vm589, %v2063, %v2064
      %v2066 = vrot.slane %v1751, 2
      %v2067 = vsel %vm589, %v2064, %v2066
      %v2068 = vrot.slane %v1752, 2
      %v2069 = vrot.slane %v1753, 2
      %v2070 = vsel %vm589, %v2068, %v2069
      %v2071 = vrot.slane %v1754, 2
      %v2072 = vsel %vm589, %v2069, %v2071
      %v2073 = vrot.slane %v1755, 2
      %v2074 = vrot.slane %v1756, 2
      %v2075 = vsel %vm589, %v2073, %v2074
      %v2076 = vrot.slane %v1757, 2
      %v2077 = vsel %vm589, %v2074, %v2076
      %v2078 = vrot.slane %v1758, 2
      %v2079 = vrot.slane %v1759, 2
      %v2080 = vsel %vm589, %v2078, %v2079
      %v2081 = vrot.slane %v1760, 2
      %v2082 = vsel %vm589, %v2079, %v2081
      %v2083 = vrot.slane %v1761, 2
      %v2084 = vrot.slane %v1762, 2
      %v2085 = vsel %vm589, %v2083, %v2084
      %v2086 = vrot.slane %v1763, 2
      %v2087 = vsel %vm589, %v2084, %v2086
      %v2088 = vrot.slane %v1764, 2
      %v2089 = vrot.slane %v1765, 2
      %v2090 = vsel %vm589, %v2088, %v2089
      %v2091 = vrot.slane %v1766, 2
      %v2092 = vsel %vm589, %v2089, %v2091
      %v2093 = vrot.slane %v1767, 2
      %v2094 = vrot.slane %v1768, 2
      %v2095 = vsel %vm589, %v2093, %v2094
      %v2096 = vrot.slane %v1769, 2
      %v2097 = vsel %vm589, %v2094, %v2096
      %v2098 = vrot.slane %v1770, 2
      %v2099 = vrot.slane %v1771, 2
      %v2100 = vsel %vm589, %v2098, %v2099
      %v2101 = vrot.slane %v1772, 2
      %v2102 = vsel %vm589, %v2099, %v2101
      %v2103 = vrot.slane %v1773, 2
      %v2104 = vrot.slane %v1774, 2
      %v2105 = vsel %vm589, %v2103, %v2104
      %v2106 = vrot.slane %v1775, 2
      %v2107 = vsel %vm589, %v2104, %v2106
      %v2108 = vrot.slane %v1776, 2
      %v2109 = vrot.slane %v1777, 2
      %v2110 = vsel %vm589, %v2108, %v2109
      %v2111 = vrot.slane %v1778, 2
      %v2112 = vsel %vm589, %v2109, %v2111
      %v2113 = vrot.slane %v1779, 2
      %v2114 = vrot.slane %v1780, 2
      %v2115 = vsel %vm589, %v2113, %v2114
      %v2116 = vrot.slane %v1781, 2
      %v2117 = vsel %vm589, %v2114, %v2116
      %v2118 = vrot.slane %v1782, 2
      %v2119 = vrot.slane %v1783, 2
      %v2120 = vsel %vm589, %v2118, %v2119
      %v2121 = vrot.slane %v1784, 2
      %v2122 = vsel %vm589, %v2119, %v2121
      %v2123 = vrot.slane %v1785, 2
      %v2124 = vrot.slane %v1786, 2
      %v2125 = vsel %vm589, %v2123, %v2124
      %v2126 = vrot.slane %v1787, 2
      %v2127 = vsel %vm589, %v2124, %v2126
      %v2128 = vrot.slane %v1788, 2
      %v2129 = vrot.slane %v1789, 2
      %v2130 = vsel %vm589, %v2128, %v2129
      %v2131 = vrot.slane %v1790, 2
      %v2132 = vsel %vm589, %v2129, %v2131
      %2133 = vrot.lane.b32.xlu0 %v2045, 8
      %v2134 = vpop.permute.xlu0 %2133
      %2135 = vrot.lane.b32.xlu0 %v2047, 8
      %v2136 = vpop.permute.xlu0 %2135
      %2137 = vrot.lane.b32.xlu0 %v2050, 8
      %v2138 = vpop.permute.xlu0 %2137
      %2139 = vrot.lane.b32.xlu0 %v2052, 8
      %v2140 = vpop.permute.xlu0 %2139
      %2141 = vrot.lane.b32.xlu0 %v2055, 8
      %v2142 = vpop.permute.xlu0 %2141
      %2143 = vrot.lane.b32.xlu0 %v2057, 8
      %v2144 = vpop.permute.xlu0 %2143
      %2145 = vrot.lane.b32.xlu0 %v2060, 8
      %v2146 = vpop.permute.xlu0 %2145
      %2147 = vrot.lane.b32.xlu0 %v2062, 8
      %v2148 = vpop.permute.xlu0 %2147
      %2149 = vrot.lane.b32.xlu0 %v2065, 8
      %v2150 = vpop.permute.xlu0 %2149
      %2151 = vrot.lane.b32.xlu0 %v2067, 8
      %v2152 = vpop.permute.xlu0 %2151
      %2153 = vrot.lane.b32.xlu0 %v2070, 8
      %v2154 = vpop.permute.xlu0 %2153
      %2155 = vrot.lane.b32.xlu0 %v2072, 8
      %v2156 = vpop.permute.xlu0 %2155
      %2157 = vrot.lane.b32.xlu0 %v2075, 8
      %v2158 = vpop.permute.xlu0 %2157
      %2159 = vrot.lane.b32.xlu0 %v2077, 8
      %v2160 = vpop.permute.xlu0 %2159
      %2161 = vrot.lane.b32.xlu0 %v2080, 8
      %v2162 = vpop.permute.xlu0 %2161
      %2163 = vrot.lane.b32.xlu0 %v2082, 8
      %v2164 = vpop.permute.xlu0 %2163
      %2165 = vrot.lane.b32.xlu0 %v2085, 8
      %v2166 = vpop.permute.xlu0 %2165
      %2167 = vrot.lane.b32.xlu0 %v2087, 8
      %v2168 = vpop.permute.xlu0 %2167
      %2169 = vrot.lane.b32.xlu0 %v2090, 8
      %v2170 = vpop.permute.xlu0 %2169
      %2171 = vrot.lane.b32.xlu0 %v2092, 8
      %v2172 = vpop.permute.xlu0 %2171
      %2173 = vrot.lane.b32.xlu0 %v2095, 8
      %v2174 = vpop.permute.xlu0 %2173
      %2175 = vrot.lane.b32.xlu0 %v2097, 8
      %v2176 = vpop.permute.xlu0 %2175
      %2177 = vrot.lane.b32.xlu0 %v2100, 8
      %v2178 = vpop.permute.xlu0 %2177
      %2179 = vrot.lane.b32.xlu0 %v2102, 8
      %v2180 = vpop.permute.xlu0 %2179
      %2181 = vrot.lane.b32.xlu0 %v2105, 8
      %v2182 = vpop.permute.xlu0 %2181
      %2183 = vrot.lane.b32.xlu0 %v2107, 8
      %v2184 = vpop.permute.xlu0 %2183
      %2185 = vrot.lane.b32.xlu0 %v2110, 8
      %v2186 = vpop.permute.xlu0 %2185
      %2187 = vrot.lane.b32.xlu0 %v2112, 8
      %v2188 = vpop.permute.xlu0 %2187
      %2189 = vrot.lane.b32.xlu0 %v2115, 8
      %v2190 = vpop.permute.xlu0 %2189
      %2191 = vrot.lane.b32.xlu0 %v2117, 8
      %v2192 = vpop.permute.xlu0 %2191
      %2193 = vrot.lane.b32.xlu0 %v2120, 8
      %v2194 = vpop.permute.xlu0 %2193
      %2195 = vrot.lane.b32.xlu0 %v2122, 8
      %v2196 = vpop.permute.xlu0 %2195
      %2197 = vrot.lane.b32.xlu0 %v2125, 8
      %v2198 = vpop.permute.xlu0 %2197
      %2199 = vrot.lane.b32.xlu0 %v2127, 8
      %v2200 = vpop.permute.xlu0 %2199
      %2201 = vrot.lane.b32.xlu0 %v2130, 8
      %v2202 = vpop.permute.xlu0 %2201
      %2203 = vrot.lane.b32.xlu0 %v2132, 8
      %v2204 = vpop.permute.xlu0 %2203
      %v2241 = vsel %vm206, %v1737, %v1936
      %v2242 = vsel %vm206, %v1738, %v1938
      %v2243 = vsel %vm206, %v1740, %v1940
      %v2244 = vsel %vm206, %v1741, %v1942
      %v2245 = vsel %vm206, %v1743, %v1944
      %v2246 = vsel %vm206, %v1744, %v1946
      %v2247 = vsel %vm206, %v1746, %v1948
      %v2248 = vsel %vm206, %v1747, %v1950
      %v2249 = vsel %vm206, %v1749, %v1952
      %v2250 = vsel %vm206, %v1750, %v1954
      %v2251 = vsel %vm206, %v1752, %v1956
      %v2252 = vsel %vm206, %v1753, %v1958
      %v2253 = vsel %vm206, %v1755, %v1960
      %v2254 = vsel %vm206, %v1756, %v1962
      %v2255 = vsel %vm206, %v1758, %v1964
      %v2256 = vsel %vm206, %v1759, %v1966
      %v2257 = vsel %vm206, %v1761, %v1968
      %v2258 = vsel %vm206, %v1762, %v1970
      %v2259 = vsel %vm206, %v1764, %v1972
      %v2260 = vsel %vm206, %v1765, %v1974
      %v2261 = vsel %vm206, %v1767, %v1976
      %v2262 = vsel %vm206, %v1768, %v1978
      %v2263 = vsel %vm206, %v1770, %v1980
      %v2264 = vsel %vm206, %v1771, %v1982
      %v2265 = vsel %vm206, %v1773, %v1984
      %v2266 = vsel %vm206, %v1774, %v1986
      %v2267 = vsel %vm206, %v1776, %v1988
      %v2268 = vsel %vm206, %v1777, %v1990
      %v2269 = vsel %vm206, %v1779, %v1992
      %v2270 = vsel %vm206, %v1780, %v1994
      %v2271 = vsel %vm206, %v1782, %v1996
      %v2272 = vsel %vm206, %v1783, %v1998
      %v2273 = vsel %vm206, %v1785, %v2000
      %v2274 = vsel %vm206, %v1786, %v2002
      %v2275 = vsel %vm206, %v1788, %v2004
      %v2276 = vsel %vm206, %v1789, %v2006
      %v2277 = vsel %vm824, %v2241, %v2134
      %v2278 = vsel %vm824, %v2242, %v2136
      %v2279 = vsel %vm824, %v2243, %v2138
      %v2280 = vsel %vm824, %v2244, %v2140
      %v2281 = vsel %vm824, %v2245, %v2142
      %v2282 = vsel %vm824, %v2246, %v2144
      %v2283 = vsel %vm824, %v2247, %v2146
      %v2284 = vsel %vm824, %v2248, %v2148
      %v2285 = vsel %vm824, %v2249, %v2150
      %v2286 = vsel %vm824, %v2250, %v2152
      %v2287 = vsel %vm824, %v2251, %v2154
      %v2288 = vsel %vm824, %v2252, %v2156
      %v2289 = vsel %vm824, %v2253, %v2158
      %v2290 = vsel %vm824, %v2254, %v2160
      %v2291 = vsel %vm824, %v2255, %v2162
      %v2292 = vsel %vm824, %v2256, %v2164
      %v2293 = vsel %vm824, %v2257, %v2166
      %v2294 = vsel %vm824, %v2258, %v2168
      %v2295 = vsel %vm824, %v2259, %v2170
      %v2296 = vsel %vm824, %v2260, %v2172
      %v2297 = vsel %vm824, %v2261, %v2174
      %v2298 = vsel %vm824, %v2262, %v2176
      %v2299 = vsel %vm824, %v2263, %v2178
      %v2300 = vsel %vm824, %v2264, %v2180
      %v2301 = vsel %vm824, %v2265, %v2182
      %v2302 = vsel %vm824, %v2266, %v2184
      %v2303 = vsel %vm824, %v2267, %v2186
      %v2304 = vsel %vm824, %v2268, %v2188
      %v2305 = vsel %vm824, %v2269, %v2190
      %v2306 = vsel %vm824, %v2270, %v2192
      %v2307 = vsel %vm824, %v2271, %v2194
      %v2308 = vsel %vm824, %v2272, %v2196
      %v2309 = vsel %vm824, %v2273, %v2198
      %v2310 = vsel %vm824, %v2274, %v2200
      %v2311 = vsel %vm824, %v2275, %v2202
      %v2312 = vsel %vm824, %v2276, %v2204
      %v2313 = vpack.c.bf16 %v2277, %v2277
      %v2314 = vpack.c.bf16 %v2278, %v2278
      %v2315 = vpack.c.bf16 %v2279, %v2279
      %v2316 = vpack.c.bf16 %v2280, %v2280
      %v2317 = vpack.c.bf16 %v2281, %v2281
      %v2318 = vpack.c.bf16 %v2282, %v2282
      %v2319 = vpack.c.bf16 %v2283, %v2283
      %v2320 = vpack.c.bf16 %v2284, %v2284
      %v2321 = vpack.c.bf16 %v2285, %v2285
      %v2322 = vpack.c.bf16 %v2286, %v2286
      %v2323 = vpack.c.bf16 %v2287, %v2287
      %v2324 = vpack.c.bf16 %v2288, %v2288
      %v2325 = vpack.c.bf16 %v2289, %v2289
      %v2326 = vpack.c.bf16 %v2290, %v2290
      %v2327 = vpack.c.bf16 %v2291, %v2291
      %v2328 = vpack.c.bf16 %v2292, %v2292
      %v2329 = vpack.c.bf16 %v2293, %v2293
      %v2330 = vpack.c.bf16 %v2294, %v2294
      %v2331 = vpack.c.bf16 %v2295, %v2295
      %v2332 = vpack.c.bf16 %v2296, %v2296
      %v2333 = vpack.c.bf16 %v2297, %v2297
      %v2334 = vpack.c.bf16 %v2298, %v2298
      %v2335 = vpack.c.bf16 %v2299, %v2299
      %v2336 = vpack.c.bf16 %v2300, %v2300
      %v2337 = vpack.c.bf16 %v2301, %v2301
      %v2338 = vpack.c.bf16 %v2302, %v2302
      %v2339 = vpack.c.bf16 %v2303, %v2303
      %v2340 = vpack.c.bf16 %v2304, %v2304
      %v2341 = vpack.c.bf16 %v2305, %v2305
      %v2342 = vpack.c.bf16 %v2306, %v2306
      %v2343 = vpack.c.bf16 %v2307, %v2307
      %v2344 = vpack.c.bf16 %v2308, %v2308
      %v2345 = vpack.c.bf16 %v2309, %v2309
      %v2346 = vpack.c.bf16 %v2310, %v2310
      %v2347 = vpack.c.bf16 %v2311, %v2311
      %v2348 = vpack.c.bf16 %v2312, %v2312
      %s2349 = scalar_lea.vmem %s1, 24
      %v2350 = vld [vmem:[%s2349] sm:$0xf]
      %v2351 = vld [vmem:[%s2349 + $0x4] sm:$0x3]
      %s2352 = scalar_lea.vmem %s1, 32
      %v2353 = vld [vmem:[%s2352] sm:$0xf]
      %v2354 = vld [vmem:[%s2352 + $0x4] sm:$0x3]
      %v2387 = vunpack.c.l.b16 %v2315
      %v2388 = vunpack.c.l.b16 %v2316
      %v2389 = vunpack.c.l.b16 %v2317
      %v2390 = vunpack.c.l.b16 %v2318
      %v2391 = vunpack.c.l.b16 %v2319
      %v2392 = vunpack.c.l.b16 %v2320
      %v2393 = vunpack.c.l.b16 %v2321
      %v2394 = vunpack.c.l.b16 %v2322
      %v2395 = vunpack.c.l.b16 %v2323
      %v2396 = vunpack.c.l.b16 %v2324
      %v2397 = vunpack.c.l.b16 %v2325
      %v2398 = vunpack.c.l.b16 %v2326
      %v2399 = vunpack.c.l.b16 %v2327
      %v2400 = vunpack.c.l.b16 %v2328
      %v2401 = vunpack.c.l.b16 %v2329
      %v2402 = vunpack.c.l.b16 %v2330
      %v2403 = vunpack.c.l.b16 %v2331
      %v2404 = vunpack.c.l.b16 %v2332
      %v2405 = vunpack.c.l.b16 %v2333
      %v2406 = vunpack.c.l.b16 %v2334
      %v2407 = vunpack.c.l.b16 %v2335
      %v2408 = vunpack.c.l.b16 %v2336
      %v2409 = vunpack.c.l.b16 %v2337
      %v2410 = vunpack.c.l.b16 %v2338
      %v2411 = vunpack.c.l.b16 %v2339
      %v2412 = vunpack.c.l.b16 %v2340
      %v2413 = vunpack.c.l.b16 %v2341
      %v2414 = vunpack.c.l.b16 %v2342
      %v2415 = vunpack.c.l.b16 %v2343
      %v2416 = vunpack.c.l.b16 %v2344
      %v2417 = vunpack.c.l.b16 %v2345
      %v2418 = vunpack.c.l.b16 %v2346
      %v2419 = vpack.c.b16 %v2388, %v2387
      %v2420 = vpack.c.b16 %v2390, %v2389
      %v2421 = vpack.c.b16 %v2392, %v2391
      %v2422 = vpack.c.b16 %v2394, %v2393
      %v2423 = vpack.c.b16 %v2396, %v2395
      %v2424 = vpack.c.b16 %v2398, %v2397
      %v2425 = vpack.c.b16 %v2400, %v2399
      %v2426 = vpack.c.b16 %v2402, %v2401
      %v2427 = vpack.c.b16 %v2404, %v2403
      %v2428 = vpack.c.b16 %v2406, %v2405
      %v2429 = vpack.c.b16 %v2408, %v2407
      %v2430 = vpack.c.b16 %v2410, %v2409
      %v2431 = vpack.c.b16 %v2412, %v2411
      %v2432 = vpack.c.b16 %v2414, %v2413
      %v2433 = vpack.c.b16 %v2416, %v2415
      %v2434 = vpack.c.b16 %v2418, %v2417
      %v2437 = vunpack.c.l.b16 %v2353
      %v2438 = vunpack.c.l.b16 %v2354
      %v2439 = vpack.c.b16 %v2438, %v2437
      %v2441 = vsel %vm987, %v2419, 0
      %v2444 = vsel %vm987, %v2420, 0
      %v2447 = vsel %vm987, %v2421, 0
      %v2450 = vsel %vm987, %v2422, 0
      %v2453 = vsel %vm987, %v2423, 0
      %v2456 = vsel %vm987, %v2424, 0
      %v2459 = vsel %vm987, %v2425, 0
      %v2462 = vsel %vm987, %v2426, 0
      %v2465 = vsel %vm987, %v2427, 0
      %v2468 = vsel %vm987, %v2428, 0
      %v2471 = vsel %vm987, %v2429, 0
      %v2474 = vsel %vm987, %v2430, 0
      %v2477 = vsel %vm987, %v2431, 0
      %v2480 = vsel %vm987, %v2432, 0
      %v2483 = vsel %vm987, %v2433, 0
      %v2486 = vsel %vm987, %v2434, 0
      %v2489 = vsel %vm589, %v2439, 0
      %2491 = vmatpush.bf16.msra.mxu0 0
      %2492 = vmatpush.bf16.msra.mxu0 0
      %2493 = vmatpush.bf16.msra.mxu0 0
      %2494 = vmatpush.bf16.msra.mxu0 0
      %2495 = vmatpush.bf16.msra.mxu0 0
      %2496 = vmatpush.bf16.msra.mxu0 0
      %2497 = vmatpush.bf16.msra.mxu0 0
      %2498 = vmatpush.bf16.msra.mxu0 %v2489
      %2499 = vmatmul.bf16.gmra.mxu0 %v2441
      %v2500 = vpop.f32.mrf.mxu0
      %v2501 = vadd.f32 0.0, %v2500
      %v2502 = vpop.f32.mrf.mxu0
      %v2503 = vadd.f32 0.0, %v2502
      %2504 = vmatmul.bf16.gmra.mxu0 %v2444
      %v2505 = vpop.f32.mrf.mxu0
      %v2506 = vadd.f32 0.0, %v2505
      %v2507 = vpop.f32.mrf.mxu0
      %v2508 = vadd.f32 0.0, %v2507
      %2509 = vmatmul.bf16.gmra.mxu0 %v2447
      %v2510 = vpop.f32.mrf.mxu0
      %v2511 = vadd.f32 0.0, %v2510
      %v2512 = vpop.f32.mrf.mxu0
      %v2513 = vadd.f32 0.0, %v2512
      %2514 = vmatmul.bf16.gmra.mxu0 %v2450
      %v2515 = vpop.f32.mrf.mxu0
      %v2516 = vadd.f32 0.0, %v2515
      %v2517 = vpop.f32.mrf.mxu0
      %v2518 = vadd.f32 0.0, %v2517
      %2519 = vmatmul.bf16.gmra.mxu0 %v2453
      %v2520 = vpop.f32.mrf.mxu0
      %v2521 = vadd.f32 0.0, %v2520
      %v2522 = vpop.f32.mrf.mxu0
      %v2523 = vadd.f32 0.0, %v2522
      %2524 = vmatmul.bf16.gmra.mxu0 %v2456
      %v2525 = vpop.f32.mrf.mxu0
      %v2526 = vadd.f32 0.0, %v2525
      %v2527 = vpop.f32.mrf.mxu0
      %v2528 = vadd.f32 0.0, %v2527
      %2529 = vmatmul.bf16.gmra.mxu0 %v2459
      %v2530 = vpop.f32.mrf.mxu0
      %v2531 = vadd.f32 0.0, %v2530
      %v2532 = vpop.f32.mrf.mxu0
      %v2533 = vadd.f32 0.0, %v2532
      %2534 = vmatmul.bf16.gmra.mxu0 %v2462
      %v2535 = vpop.f32.mrf.mxu0
      %v2536 = vadd.f32 0.0, %v2535
      %v2537 = vpop.f32.mrf.mxu0
      %v2538 = vadd.f32 0.0, %v2537
      %2539 = vmatmul.bf16.gmra.mxu0 %v2465
      %v2540 = vpop.f32.mrf.mxu0
      %v2541 = vadd.f32 0.0, %v2540
      %v2542 = vpop.f32.mrf.mxu0
      %v2543 = vadd.f32 0.0, %v2542
      %2544 = vmatmul.bf16.gmra.mxu0 %v2468
      %v2545 = vpop.f32.mrf.mxu0
      %v2546 = vadd.f32 0.0, %v2545
      %v2547 = vpop.f32.mrf.mxu0
      %v2548 = vadd.f32 0.0, %v2547
      %2549 = vmatmul.bf16.gmra.mxu0 %v2471
      %v2550 = vpop.f32.mrf.mxu0
      %v2551 = vadd.f32 0.0, %v2550
      %v2552 = vpop.f32.mrf.mxu0
      %v2553 = vadd.f32 0.0, %v2552
      %2554 = vmatmul.bf16.gmra.mxu0 %v2474
      %v2555 = vpop.f32.mrf.mxu0
      %v2556 = vadd.f32 0.0, %v2555
      %v2557 = vpop.f32.mrf.mxu0
      %v2558 = vadd.f32 0.0, %v2557
      %2559 = vmatmul.bf16.gmra.mxu0 %v2477
      %v2560 = vpop.f32.mrf.mxu0
      %v2561 = vadd.f32 0.0, %v2560
      %v2562 = vpop.f32.mrf.mxu0
      %v2563 = vadd.f32 0.0, %v2562
      %2564 = vmatmul.bf16.gmra.mxu0 %v2480
      %v2565 = vpop.f32.mrf.mxu0
      %v2566 = vadd.f32 0.0, %v2565
      %v2567 = vpop.f32.mrf.mxu0
      %v2568 = vadd.f32 0.0, %v2567
      %2569 = vmatmul.bf16.gmra.mxu0 %v2483
      %v2570 = vpop.f32.mrf.mxu0
      %v2571 = vadd.f32 0.0, %v2570
      %v2572 = vpop.f32.mrf.mxu0
      %v2573 = vadd.f32 0.0, %v2572
      %2574 = vmatmul.bf16.gmra.mxu0 %v2486
      %v2575 = vpop.f32.mrf.mxu0
      %v2576 = vadd.f32 0.0, %v2575
      %v2577 = vpop.f32.mrf.mxu0
      %v2578 = vadd.f32 0.0, %v2577
      %2579 = vdwg.mxu0
      %v2582 = vunpack.c.l.b16 %v2313
      %v2583 = vunpack.c.l.b16 %v2314
      %v2584 = vpack.c.b16 %v2583, %v2582
      %v2587 = vunpack.c.l.b16 %v2350
      %v2588 = vunpack.c.l.b16 %v2351
      %v2589 = vpack.c.b16 %v2588, %v2587
      %v2591 = vsel %vm987, %v2584, 0
      %v2594 = vsel %vm589, %v2589, 0
      %2596 = vmatpush.bf16.msra.mxu0 0
      %2597 = vmatpush.bf16.msra.mxu0 0
      %2598 = vmatpush.bf16.msra.mxu0 0
      %2599 = vmatpush.bf16.msra.mxu0 0
      %2600 = vmatpush.bf16.msra.mxu0 0
      %2601 = vmatpush.bf16.msra.mxu0 0
      %2602 = vmatpush.bf16.msra.mxu0 0
      %2603 = vmatpush.bf16.msra.mxu0 %v2594
      %2604 = vmatmul.bf16.gmra.mxu0 %v2591
      %v2605 = vpop.f32.mrf.mxu0
      %v2606 = vadd.f32 %v2501, %v2605
      %v2607 = vpop.f32.mrf.mxu0
      %v2608 = vadd.f32 %v2503, %v2607
      %2609 = vmatmul.bf16.gmra.mxu0 %v2441
      %v2610 = vpop.f32.mrf.mxu0
      %v2611 = vadd.f32 %v2506, %v2610
      %v2612 = vpop.f32.mrf.mxu0
      %v2613 = vadd.f32 %v2508, %v2612
      %2614 = vmatmul.bf16.gmra.mxu0 %v2444
      %v2615 = vpop.f32.mrf.mxu0
      %v2616 = vadd.f32 %v2511, %v2615
      %v2617 = vpop.f32.mrf.mxu0
      %v2618 = vadd.f32 %v2513, %v2617
      %2619 = vmatmul.bf16.gmra.mxu0 %v2447
      %v2620 = vpop.f32.mrf.mxu0
      %v2621 = vadd.f32 %v2516, %v2620
      %v2622 = vpop.f32.mrf.mxu0
      %v2623 = vadd.f32 %v2518, %v2622
      %2624 = vmatmul.bf16.gmra.mxu0 %v2450
      %v2625 = vpop.f32.mrf.mxu0
      %v2626 = vadd.f32 %v2521, %v2625
      %v2627 = vpop.f32.mrf.mxu0
      %v2628 = vadd.f32 %v2523, %v2627
      %2629 = vmatmul.bf16.gmra.mxu0 %v2453
      %v2630 = vpop.f32.mrf.mxu0
      %v2631 = vadd.f32 %v2526, %v2630
      %v2632 = vpop.f32.mrf.mxu0
      %v2633 = vadd.f32 %v2528, %v2632
      %2634 = vmatmul.bf16.gmra.mxu0 %v2456
      %v2635 = vpop.f32.mrf.mxu0
      %v2636 = vadd.f32 %v2531, %v2635
      %v2637 = vpop.f32.mrf.mxu0
      %v2638 = vadd.f32 %v2533, %v2637
      %2639 = vmatmul.bf16.gmra.mxu0 %v2459
      %v2640 = vpop.f32.mrf.mxu0
      %v2641 = vadd.f32 %v2536, %v2640
      %v2642 = vpop.f32.mrf.mxu0
      %v2643 = vadd.f32 %v2538, %v2642
      %2644 = vmatmul.bf16.gmra.mxu0 %v2462
      %v2645 = vpop.f32.mrf.mxu0
      %v2646 = vadd.f32 %v2541, %v2645
      %v2647 = vpop.f32.mrf.mxu0
      %v2648 = vadd.f32 %v2543, %v2647
      %2649 = vmatmul.bf16.gmra.mxu0 %v2465
      %v2650 = vpop.f32.mrf.mxu0
      %v2651 = vadd.f32 %v2546, %v2650
      %v2652 = vpop.f32.mrf.mxu0
      %v2653 = vadd.f32 %v2548, %v2652
      %2654 = vmatmul.bf16.gmra.mxu0 %v2468
      %v2655 = vpop.f32.mrf.mxu0
      %v2656 = vadd.f32 %v2551, %v2655
      %v2657 = vpop.f32.mrf.mxu0
      %v2658 = vadd.f32 %v2553, %v2657
      %2659 = vmatmul.bf16.gmra.mxu0 %v2471
      %v2660 = vpop.f32.mrf.mxu0
      %v2661 = vadd.f32 %v2556, %v2660
      %v2662 = vpop.f32.mrf.mxu0
      %v2663 = vadd.f32 %v2558, %v2662
      %2664 = vmatmul.bf16.gmra.mxu0 %v2474
      %v2665 = vpop.f32.mrf.mxu0
      %v2666 = vadd.f32 %v2561, %v2665
      %v2667 = vpop.f32.mrf.mxu0
      %v2668 = vadd.f32 %v2563, %v2667
      %2669 = vmatmul.bf16.gmra.mxu0 %v2477
      %v2670 = vpop.f32.mrf.mxu0
      %v2671 = vadd.f32 %v2566, %v2670
      %v2672 = vpop.f32.mrf.mxu0
      %v2673 = vadd.f32 %v2568, %v2672
      %2674 = vmatmul.bf16.gmra.mxu0 %v2480
      %v2675 = vpop.f32.mrf.mxu0
      %v2676 = vadd.f32 %v2571, %v2675
      %v2677 = vpop.f32.mrf.mxu0
      %v2678 = vadd.f32 %v2573, %v2677
      %2679 = vmatmul.bf16.gmra.mxu0 %v2483
      %v2680 = vpop.f32.mrf.mxu0
      %v2681 = vadd.f32 %v2576, %v2680
      %v2682 = vpop.f32.mrf.mxu0
      %v2683 = vadd.f32 %v2578, %v2682
      %2684 = vdwg.mxu0
      %s2685 = scalar_lea.vmem %s1, 40
      %v2686 = vld [vmem:[%s2685] sm:$0xf]
      %v2687 = vld [vmem:[%s2685 + $0x4] sm:$0x3]
      %v2690 = vunpack.c.l.b16 %v2347
      %v2691 = vunpack.c.l.b16 %v2348
      %v2692 = vpack.c.b16 %v2691, %v2690
      %v2695 = vunpack.c.l.b16 %v2686
      %v2696 = vunpack.c.l.b16 %v2687
      %v2697 = vpack.c.b16 %v2696, %v2695
      %v2699 = vsel %vm987, %v2692, 0
      %v2702 = vsel %vm589, %v2697, 0
      %2704 = vmatpush.bf16.msra.mxu0 0
      %2705 = vmatpush.bf16.msra.mxu0 0
      %2706 = vmatpush.bf16.msra.mxu0 0
      %2707 = vmatpush.bf16.msra.mxu0 0
      %2708 = vmatpush.bf16.msra.mxu0 0
      %2709 = vmatpush.bf16.msra.mxu0 0
      %2710 = vmatpush.bf16.msra.mxu0 0
      %2711 = vmatpush.bf16.msra.mxu0 %v2702
      %2712 = vmatmul.bf16.gmra.mxu0 %v2444
      %v2713 = vpop.f32.mrf.mxu0
      %v2714 = vadd.f32 0.0, %v2713
      %v2715 = vpop.f32.mrf.mxu0
      %v2716 = vadd.f32 0.0, %v2715
      %2717 = vmatmul.bf16.gmra.mxu0 %v2447
      %v2718 = vpop.f32.mrf.mxu0
      %v2719 = vadd.f32 0.0, %v2718
      %v2720 = vpop.f32.mrf.mxu0
      %v2721 = vadd.f32 0.0, %v2720
      %2722 = vmatmul.bf16.gmra.mxu0 %v2450
      %v2723 = vpop.f32.mrf.mxu0
      %v2724 = vadd.f32 0.0, %v2723
      %v2725 = vpop.f32.mrf.mxu0
      %v2726 = vadd.f32 0.0, %v2725
      %2727 = vmatmul.bf16.gmra.mxu0 %v2453
      %v2728 = vpop.f32.mrf.mxu0
      %v2729 = vadd.f32 0.0, %v2728
      %v2730 = vpop.f32.mrf.mxu0
      %v2731 = vadd.f32 0.0, %v2730
      %2732 = vmatmul.bf16.gmra.mxu0 %v2456
      %v2733 = vpop.f32.mrf.mxu0
      %v2734 = vadd.f32 0.0, %v2733
      %v2735 = vpop.f32.mrf.mxu0
      %v2736 = vadd.f32 0.0, %v2735
      %2737 = vmatmul.bf16.gmra.mxu0 %v2459
      %v2738 = vpop.f32.mrf.mxu0
      %v2739 = vadd.f32 0.0, %v2738
      %v2740 = vpop.f32.mrf.mxu0
      %v2741 = vadd.f32 0.0, %v2740
      %2742 = vmatmul.bf16.gmra.mxu0 %v2462
      %v2743 = vpop.f32.mrf.mxu0
      %v2744 = vadd.f32 0.0, %v2743
      %v2745 = vpop.f32.mrf.mxu0
      %v2746 = vadd.f32 0.0, %v2745
      %2747 = vmatmul.bf16.gmra.mxu0 %v2465
      %v2748 = vpop.f32.mrf.mxu0
      %v2749 = vadd.f32 0.0, %v2748
      %v2750 = vpop.f32.mrf.mxu0
      %v2751 = vadd.f32 0.0, %v2750
      %2752 = vmatmul.bf16.gmra.mxu0 %v2468
      %v2753 = vpop.f32.mrf.mxu0
      %v2754 = vadd.f32 0.0, %v2753
      %v2755 = vpop.f32.mrf.mxu0
      %v2756 = vadd.f32 0.0, %v2755
      %2757 = vmatmul.bf16.gmra.mxu0 %v2471
      %v2758 = vpop.f32.mrf.mxu0
      %v2759 = vadd.f32 0.0, %v2758
      %v2760 = vpop.f32.mrf.mxu0
      %v2761 = vadd.f32 0.0, %v2760
      %2762 = vmatmul.bf16.gmra.mxu0 %v2474
      %v2763 = vpop.f32.mrf.mxu0
      %v2764 = vadd.f32 0.0, %v2763
      %v2765 = vpop.f32.mrf.mxu0
      %v2766 = vadd.f32 0.0, %v2765
      %2767 = vmatmul.bf16.gmra.mxu0 %v2477
      %v2768 = vpop.f32.mrf.mxu0
      %v2769 = vadd.f32 0.0, %v2768
      %v2770 = vpop.f32.mrf.mxu0
      %v2771 = vadd.f32 0.0, %v2770
      %2772 = vmatmul.bf16.gmra.mxu0 %v2480
      %v2773 = vpop.f32.mrf.mxu0
      %v2774 = vadd.f32 0.0, %v2773
      %v2775 = vpop.f32.mrf.mxu0
      %v2776 = vadd.f32 0.0, %v2775
      %2777 = vmatmul.bf16.gmra.mxu0 %v2483
      %v2778 = vpop.f32.mrf.mxu0
      %v2779 = vadd.f32 0.0, %v2778
      %v2780 = vpop.f32.mrf.mxu0
      %v2781 = vadd.f32 0.0, %v2780
      %2782 = vmatmul.bf16.gmra.mxu0 %v2486
      %v2783 = vpop.f32.mrf.mxu0
      %v2784 = vadd.f32 0.0, %v2783
      %v2785 = vpop.f32.mrf.mxu0
      %v2786 = vadd.f32 0.0, %v2785
      %2787 = vmatmul.bf16.gmra.mxu0 %v2699
      %v2788 = vpop.f32.mrf.mxu0
      %v2789 = vadd.f32 0.0, %v2788
      %v2790 = vpop.f32.mrf.mxu0
      %v2791 = vadd.f32 0.0, %v2790
      %2792 = vdwg.mxu0
      %v2793 = vadd.f32 %v2606, %v2714
      %v2794 = vadd.f32 %v2608, %v2716
      %v2795 = vadd.f32 %v2611, %v2719
      %v2796 = vadd.f32 %v2613, %v2721
      %v2797 = vadd.f32 %v2616, %v2724
      %v2798 = vadd.f32 %v2618, %v2726
      %v2799 = vadd.f32 %v2621, %v2729
      %v2800 = vadd.f32 %v2623, %v2731
      %v2801 = vadd.f32 %v2626, %v2734
      %v2802 = vadd.f32 %v2628, %v2736
      %v2803 = vadd.f32 %v2631, %v2739
      %v2804 = vadd.f32 %v2633, %v2741
      %v2805 = vadd.f32 %v2636, %v2744
      %v2806 = vadd.f32 %v2638, %v2746
      %v2807 = vadd.f32 %v2641, %v2749
      %v2808 = vadd.f32 %v2643, %v2751
      %v2809 = vadd.f32 %v2646, %v2754
      %v2810 = vadd.f32 %v2648, %v2756
      %v2811 = vadd.f32 %v2651, %v2759
      %v2812 = vadd.f32 %v2653, %v2761
      %v2813 = vadd.f32 %v2656, %v2764
      %v2814 = vadd.f32 %v2658, %v2766
      %v2815 = vadd.f32 %v2661, %v2769
      %v2816 = vadd.f32 %v2663, %v2771
      %v2817 = vadd.f32 %v2666, %v2774
      %v2818 = vadd.f32 %v2668, %v2776
      %v2819 = vadd.f32 %v2671, %v2779
      %v2820 = vadd.f32 %v2673, %v2781
      %v2821 = vadd.f32 %v2676, %v2784
      %v2822 = vadd.f32 %v2678, %v2786
      %v2823 = vadd.f32 %v2681, %v2789
      %v2824 = vadd.f32 %v2683, %v2791
      %v2825 = vsel %vm206, %v2793, 0.0
      %v2826 = vsel %vm206, %v2794, 0.0
      %v2827 = vadd.f32 %v2825, %v2826
      %v2828 = vsel %vm206, %v2795, 0.0
      %v2829 = vadd.f32 %v2827, %v2828
      %v2830 = vsel %vm206, %v2796, 0.0
      %v2831 = vadd.f32 %v2829, %v2830
      %v2832 = vsel %vm206, %v2797, 0.0
      %v2833 = vadd.f32 %v2831, %v2832
      %v2834 = vsel %vm206, %v2798, 0.0
      %v2835 = vadd.f32 %v2833, %v2834
      %v2836 = vsel %vm206, %v2799, 0.0
      %v2837 = vadd.f32 %v2835, %v2836
      %v2838 = vsel %vm206, %v2800, 0.0
      %v2839 = vadd.f32 %v2837, %v2838
      %v2840 = vsel %vm206, %v2801, 0.0
      %v2841 = vadd.f32 %v2839, %v2840
      %v2842 = vsel %vm206, %v2802, 0.0
      %v2843 = vadd.f32 %v2841, %v2842
      %v2844 = vsel %vm206, %v2803, 0.0
      %v2845 = vadd.f32 %v2843, %v2844
      %v2846 = vsel %vm206, %v2804, 0.0
      %v2847 = vadd.f32 %v2845, %v2846
      %v2848 = vsel %vm206, %v2805, 0.0
      %v2849 = vadd.f32 %v2847, %v2848
      %v2850 = vsel %vm206, %v2806, 0.0
      %v2851 = vadd.f32 %v2849, %v2850
      %v2852 = vsel %vm206, %v2807, 0.0
      %v2853 = vadd.f32 %v2851, %v2852
      %v2854 = vsel %vm206, %v2808, 0.0
      %v2855 = vadd.f32 %v2853, %v2854
      %v2856 = vsel %vm206, %v2809, 0.0
      %v2857 = vadd.f32 %v2855, %v2856
      %v2858 = vsel %vm206, %v2810, 0.0
      %v2859 = vadd.f32 %v2857, %v2858
      %v2860 = vsel %vm206, %v2811, 0.0
      %v2861 = vadd.f32 %v2859, %v2860
      %v2862 = vsel %vm206, %v2812, 0.0
      %v2863 = vadd.f32 %v2861, %v2862
      %v2864 = vsel %vm206, %v2813, 0.0
      %v2865 = vadd.f32 %v2863, %v2864
      %v2866 = vsel %vm206, %v2814, 0.0
      %v2867 = vadd.f32 %v2865, %v2866
      %v2868 = vsel %vm206, %v2815, 0.0
      %v2869 = vadd.f32 %v2867, %v2868
      %v2870 = vsel %vm206, %v2816, 0.0
      %v2871 = vadd.f32 %v2869, %v2870
      %v2872 = vsel %vm206, %v2817, 0.0
      %v2873 = vadd.f32 %v2871, %v2872
      %v2874 = vsel %vm206, %v2818, 0.0
      %v2875 = vadd.f32 %v2873, %v2874
      %v2876 = vsel %vm206, %v2819, 0.0
      %v2877 = vadd.f32 %v2875, %v2876
      %v2878 = vsel %vm206, %v2820, 0.0
      %v2879 = vadd.f32 %v2877, %v2878
      %v2880 = vsel %vm206, %v2821, 0.0
      %v2881 = vadd.f32 %v2879, %v2880
      %v2882 = vsel %vm206, %v2822, 0.0
      %v2883 = vadd.f32 %v2881, %v2882
      %v2884 = vsel %vm206, %v2823, 0.0
      %v2885 = vadd.f32 %v2883, %v2884
      %v2886 = vsel %vm206, %v2824, 0.0
      %v2887 = vadd.f32 %v2885, %v2886
      %v2888 = vrot.slane %v2887, 4
      %v2889 = vadd.f32 %v2887, %v2888
      %v2890 = vrot.slane %v2889, 2
      %v2891 = vadd.f32 %v2889, %v2890
      %v2892 = vrot.slane %v2891, 1
      %v2893 = vadd.f32 %v2891, %v2892
      %v2894 = vmul.f32 %v2893, 0.00390625
      %v2895 = vmul.f32 %v2793, %v2793
      %v2896 = vmul.f32 %v2794, %v2794
      %v2897 = vmul.f32 %v2795, %v2795
      %v2898 = vmul.f32 %v2796, %v2796
      %v2899 = vmul.f32 %v2797, %v2797
      %v2900 = vmul.f32 %v2798, %v2798
      %v2901 = vmul.f32 %v2799, %v2799
      %v2902 = vmul.f32 %v2800, %v2800
      %v2903 = vmul.f32 %v2801, %v2801
      %v2904 = vmul.f32 %v2802, %v2802
      %v2905 = vmul.f32 %v2803, %v2803
      %v2906 = vmul.f32 %v2804, %v2804
      %v2907 = vmul.f32 %v2805, %v2805
      %v2908 = vmul.f32 %v2806, %v2806
      %v2909 = vmul.f32 %v2807, %v2807
      %v2910 = vmul.f32 %v2808, %v2808
      %v2911 = vmul.f32 %v2809, %v2809
      %v2912 = vmul.f32 %v2810, %v2810
      %v2913 = vmul.f32 %v2811, %v2811
      %v2914 = vmul.f32 %v2812, %v2812
      %v2915 = vmul.f32 %v2813, %v2813
      %v2916 = vmul.f32 %v2814, %v2814
      %v2917 = vmul.f32 %v2815, %v2815
      %v2918 = vmul.f32 %v2816, %v2816
      %v2919 = vmul.f32 %v2817, %v2817
      %v2920 = vmul.f32 %v2818, %v2818
      %v2921 = vmul.f32 %v2819, %v2819
      %v2922 = vmul.f32 %v2820, %v2820
      %v2923 = vmul.f32 %v2821, %v2821
      %v2924 = vmul.f32 %v2822, %v2822
      %v2925 = vmul.f32 %v2823, %v2823
      %v2926 = vmul.f32 %v2824, %v2824
      %v2927 = vsel %vm206, %v2895, 0.0
      %v2928 = vsel %vm206, %v2896, 0.0
      %v2929 = vadd.f32 %v2927, %v2928
      %v2930 = vsel %vm206, %v2897, 0.0
      %v2931 = vadd.f32 %v2929, %v2930
      %v2932 = vsel %vm206, %v2898, 0.0
      %v2933 = vadd.f32 %v2931, %v2932
      %v2934 = vsel %vm206, %v2899, 0.0
      %v2935 = vadd.f32 %v2933, %v2934
      %v2936 = vsel %vm206, %v2900, 0.0
      %v2937 = vadd.f32 %v2935, %v2936
      %v2938 = vsel %vm206, %v2901, 0.0
      %v2939 = vadd.f32 %v2937, %v2938
      %v2940 = vsel %vm206, %v2902, 0.0
      %v2941 = vadd.f32 %v2939, %v2940
      %v2942 = vsel %vm206, %v2903, 0.0
      %v2943 = vadd.f32 %v2941, %v2942
      %v2944 = vsel %vm206, %v2904, 0.0
      %v2945 = vadd.f32 %v2943, %v2944
      %v2946 = vsel %vm206, %v2905, 0.0
      %v2947 = vadd.f32 %v2945, %v2946
      %v2948 = vsel %vm206, %v2906, 0.0
      %v2949 = vadd.f32 %v2947, %v2948
      %v2950 = vsel %vm206, %v2907, 0.0
      %v2951 = vadd.f32 %v2949, %v2950
      %v2952 = vsel %vm206, %v2908, 0.0
      %v2953 = vadd.f32 %v2951, %v2952
      %v2954 = vsel %vm206, %v2909, 0.0
      %v2955 = vadd.f32 %v2953, %v2954
      %v2956 = vsel %vm206, %v2910, 0.0
      %v2957 = vadd.f32 %v2955, %v2956
      %v2958 = vsel %vm206, %v2911, 0.0
      %v2959 = vadd.f32 %v2957, %v2958
      %v2960 = vsel %vm206, %v2912, 0.0
      %v2961 = vadd.f32 %v2959, %v2960
      %v2962 = vsel %vm206, %v2913, 0.0
      %v2963 = vadd.f32 %v2961, %v2962
      %v2964 = vsel %vm206, %v2914, 0.0
      %v2965 = vadd.f32 %v2963, %v2964
      %v2966 = vsel %vm206, %v2915, 0.0
      %v2967 = vadd.f32 %v2965, %v2966
      %v2968 = vsel %vm206, %v2916, 0.0
      %v2969 = vadd.f32 %v2967, %v2968
      %v2970 = vsel %vm206, %v2917, 0.0
      %v2971 = vadd.f32 %v2969, %v2970
      %v2972 = vsel %vm206, %v2918, 0.0
      %v2973 = vadd.f32 %v2971, %v2972
      %v2974 = vsel %vm206, %v2919, 0.0
      %v2975 = vadd.f32 %v2973, %v2974
      %v2976 = vsel %vm206, %v2920, 0.0
      %v2977 = vadd.f32 %v2975, %v2976
      %v2978 = vsel %vm206, %v2921, 0.0
      %v2979 = vadd.f32 %v2977, %v2978
      %v2980 = vsel %vm206, %v2922, 0.0
      %v2981 = vadd.f32 %v2979, %v2980
      %v2982 = vsel %vm206, %v2923, 0.0
      %v2983 = vadd.f32 %v2981, %v2982
      %v2984 = vsel %vm206, %v2924, 0.0
      %v2985 = vadd.f32 %v2983, %v2984
      %v2986 = vsel %vm206, %v2925, 0.0
      %v2987 = vadd.f32 %v2985, %v2986
      %v2988 = vsel %vm206, %v2926, 0.0
      %v2989 = vadd.f32 %v2987, %v2988
      %v2990 = vrot.slane %v2989, 4
      %v2991 = vadd.f32 %v2989, %v2990
      %v2992 = vrot.slane %v2991, 2
      %v2993 = vadd.f32 %v2991, %v2992
      %v2994 = vrot.slane %v2993, 1
      %v2995 = vadd.f32 %v2993, %v2994
      %v2996 = vmul.f32 %v2995, 0.00390625
      %v2997 = vmul.f32 %v2894, %v2894
      %v2998 = vsub.f32 %v2996, %v2997
      %v2999 = vmax.f32 %v2998, 0.0
      %v3000 = vadd.f32 %v2999, 1e-05
      %v3001 = vrsqrt.pop %v3000
      %v3002 = vmul.f32 %v3001, %v3000
      %v3003 = vmul.f32 %v3002, %v3001
      %v3004 = vmul.f32 0.5, %v3003
      %v3005 = vsub.f32 1.5, %v3004
      %v3006 = vmul.f32 %v3001, %v3005
      %vm3007 = vweird.f32 %v3000
      %vm3008 = vweird.f32 %v3001
      %vm3009 = vmor %vm3007, %vm3008
      %v3010 = vsel %vm3009, %v3001, %v3006
      %v3011 = vmul.f32 %v204, %v3010
      %v3012 = vmul.f32 %v2894, %v3011
      %v3014 = vrot.slane %v3012, 7
      %v3016 = vsub.f32 %v204, %v3014
      %v3017 = vperm.slane %v3011, 2
      %v3018 = vmul.f32 %v2793, %v3017
      %v3019 = vmul.f32 %v2794, %v3017
      %v3020 = vmul.f32 %v2795, %v3017
      %v3021 = vmul.f32 %v2796, %v3017
      %v3022 = vmul.f32 %v2797, %v3017
      %v3023 = vmul.f32 %v2798, %v3017
      %v3024 = vmul.f32 %v2799, %v3017
      %v3025 = vmul.f32 %v2800, %v3017
      %v3026 = vmul.f32 %v2801, %v3017
      %v3027 = vmul.f32 %v2802, %v3017
      %v3028 = vmul.f32 %v2803, %v3017
      %v3029 = vmul.f32 %v2804, %v3017
      %v3030 = vmul.f32 %v2805, %v3017
      %v3031 = vmul.f32 %v2806, %v3017
      %v3032 = vmul.f32 %v2807, %v3017
      %v3033 = vmul.f32 %v2808, %v3017
      %v3034 = vmul.f32 %v2809, %v3017
      %v3035 = vmul.f32 %v2810, %v3017
      %v3036 = vmul.f32 %v2811, %v3017
      %v3037 = vmul.f32 %v2812, %v3017
      %v3038 = vmul.f32 %v2813, %v3017
      %v3039 = vmul.f32 %v2814, %v3017
      %v3040 = vmul.f32 %v2815, %v3017
      %v3041 = vmul.f32 %v2816, %v3017
      %v3042 = vmul.f32 %v2817, %v3017
      %v3043 = vmul.f32 %v2818, %v3017
      %v3044 = vmul.f32 %v2819, %v3017
      %v3045 = vmul.f32 %v2820, %v3017
      %v3046 = vmul.f32 %v2821, %v3017
      %v3047 = vmul.f32 %v2822, %v3017
      %v3048 = vmul.f32 %v2823, %v3017
      %v3049 = vmul.f32 %v2824, %v3017
      %v3050 = vperm.slane %v3016, 3
      %v3051 = vadd.f32 %v3018, %v3050
      %v3052 = vadd.f32 %v3019, %v3050
      %v3053 = vadd.f32 %v3020, %v3050
      %v3054 = vadd.f32 %v3021, %v3050
      %v3055 = vadd.f32 %v3022, %v3050
      %v3056 = vadd.f32 %v3023, %v3050
      %v3057 = vadd.f32 %v3024, %v3050
      %v3058 = vadd.f32 %v3025, %v3050
      %v3059 = vadd.f32 %v3026, %v3050
      %v3060 = vadd.f32 %v3027, %v3050
      %v3061 = vadd.f32 %v3028, %v3050
      %v3062 = vadd.f32 %v3029, %v3050
      %v3063 = vadd.f32 %v3030, %v3050
      %v3064 = vadd.f32 %v3031, %v3050
      %v3065 = vadd.f32 %v3032, %v3050
      %v3066 = vadd.f32 %v3033, %v3050
      %v3067 = vadd.f32 %v3034, %v3050
      %v3068 = vadd.f32 %v3035, %v3050
      %v3069 = vadd.f32 %v3036, %v3050
      %v3070 = vadd.f32 %v3037, %v3050
      %v3071 = vadd.f32 %v3038, %v3050
      %v3072 = vadd.f32 %v3039, %v3050
      %v3073 = vadd.f32 %v3040, %v3050
      %v3074 = vadd.f32 %v3041, %v3050
      %v3075 = vadd.f32 %v3042, %v3050
      %v3076 = vadd.f32 %v3043, %v3050
      %v3077 = vadd.f32 %v3044, %v3050
      %v3078 = vadd.f32 %v3045, %v3050
      %v3079 = vadd.f32 %v3046, %v3050
      %v3080 = vadd.f32 %v3047, %v3050
      %v3081 = vadd.f32 %v3048, %v3050
      %v3082 = vadd.f32 %v3049, %v3050
      %v3083 = vadd.f32 %v3051, %v172
      %v3084 = vadd.f32 %v3052, %v173
      %v3085 = vadd.f32 %v3053, %v174
      %v3086 = vadd.f32 %v3054, %v175
      %v3087 = vadd.f32 %v3055, %v176
      %v3088 = vadd.f32 %v3056, %v177
      %v3089 = vadd.f32 %v3057, %v178
      %v3090 = vadd.f32 %v3058, %v179
      %v3091 = vadd.f32 %v3059, %v180
      %v3092 = vadd.f32 %v3060, %v181
      %v3093 = vadd.f32 %v3061, %v182
      %v3094 = vadd.f32 %v3062, %v183
      %v3095 = vadd.f32 %v3063, %v184
      %v3096 = vadd.f32 %v3064, %v185
      %v3097 = vadd.f32 %v3065, %v186
      %v3098 = vadd.f32 %v3066, %v187
      %v3099 = vadd.f32 %v3067, %v188
      %v3100 = vadd.f32 %v3068, %v189
      %v3101 = vadd.f32 %v3069, %v190
      %v3102 = vadd.f32 %v3070, %v191
      %v3103 = vadd.f32 %v3071, %v192
      %v3104 = vadd.f32 %v3072, %v193
      %v3105 = vadd.f32 %v3073, %v194
      %v3106 = vadd.f32 %v3074, %v195
      %v3107 = vadd.f32 %v3075, %v196
      %v3108 = vadd.f32 %v3076, %v197
      %v3109 = vadd.f32 %v3077, %v198
      %v3110 = vadd.f32 %v3078, %v199
      %v3111 = vadd.f32 %v3079, %v200
      %v3112 = vadd.f32 %v3080, %v201
      %v3113 = vadd.f32 %v3081, %v202
      %v3114 = vadd.f32 %v3082, %v203
      %3115 = vst.msk [vmem:[%s170] sm:$0xff] %vm206, %v3083
      %3116 = vst.msk [vmem:[%s170 + $0x8] sm:$0xff] %vm206, %v3084
      %3117 = vst.msk [vmem:[%s170 + $0x10] sm:$0xff] %vm206, %v3085
      %3118 = vst.msk [vmem:[%s170 + $0x18] sm:$0xff] %vm206, %v3086
      %3119 = vst.msk [vmem:[%s170 + $0x20] sm:$0xff] %vm206, %v3087
      %3120 = vst.msk [vmem:[%s170 + $0x28] sm:$0xff] %vm206, %v3088
      %3121 = vst.msk [vmem:[%s170 + $0x30] sm:$0xff] %vm206, %v3089
      %3122 = vst.msk [vmem:[%s170 + $0x38] sm:$0xff] %vm206, %v3090
      %3123 = vst.msk [vmem:[%s170 + $0x40] sm:$0xff] %vm206, %v3091
      %3124 = vst.msk [vmem:[%s170 + $0x48] sm:$0xff] %vm206, %v3092
      %3125 = vst.msk [vmem:[%s170 + $0x50] sm:$0xff] %vm206, %v3093
      %3126 = vst.msk [vmem:[%s170 + $0x58] sm:$0xff] %vm206, %v3094
      %3127 = vst.msk [vmem:[%s170 + $0x60] sm:$0xff] %vm206, %v3095
      %3128 = vst.msk [vmem:[%s170 + $0x68] sm:$0xff] %vm206, %v3096
      %3129 = vst.msk [vmem:[%s170 + $0x70] sm:$0xff] %vm206, %v3097
      %3130 = vst.msk [vmem:[%s170 + $0x78] sm:$0xff] %vm206, %v3098
      %3131 = vst.msk [vmem:[%s170 + $0x80] sm:$0xff] %vm206, %v3099
      %3132 = vst.msk [vmem:[%s170 + $0x88] sm:$0xff] %vm206, %v3100
      %3133 = vst.msk [vmem:[%s170 + $0x90] sm:$0xff] %vm206, %v3101
      %3134 = vst.msk [vmem:[%s170 + $0x98] sm:$0xff] %vm206, %v3102
      %3135 = vst.msk [vmem:[%s170 + $0xa0] sm:$0xff] %vm206, %v3103
      %3136 = vst.msk [vmem:[%s170 + $0xa8] sm:$0xff] %vm206, %v3104
      %3137 = vst.msk [vmem:[%s170 + $0xb0] sm:$0xff] %vm206, %v3105
      %3138 = vst.msk [vmem:[%s170 + $0xb8] sm:$0xff] %vm206, %v3106
      %3139 = vst.msk [vmem:[%s170 + $0xc0] sm:$0xff] %vm206, %v3107
      %3140 = vst.msk [vmem:[%s170 + $0xc8] sm:$0xff] %vm206, %v3108
      %3141 = vst.msk [vmem:[%s170 + $0xd0] sm:$0xff] %vm206, %v3109
      %3142 = vst.msk [vmem:[%s170 + $0xd8] sm:$0xff] %vm206, %v3110
      %3143 = vst.msk [vmem:[%s170 + $0xe0] sm:$0xff] %vm206, %v3111
      %3144 = vst.msk [vmem:[%s170 + $0xe8] sm:$0xff] %vm206, %v3112
      %3145 = vst.msk [vmem:[%s170 + $0xf0] sm:$0xff] %vm206, %v3113
      %3146 = vst.msk [vmem:[%s170 + $0xf8] sm:$0xff] %vm206, %v3114
      %p3147 = scmp.lt.s32.totalorder %s14, 1
      %s3148 = scalar_select %p3147, %s14, 1
      %s3149 = smul.addr %s3148, 32
      %s3150 = smul.addr %s3149, 8
      %s3151 = scalar_lea.vmem %s3, %s3150
      // Predicated region
      $region33: #{tpu_custom_call.1} parent=31 // pred_check
        %p3152 = pneg %p100
      $region34: #{tpu_custom_call.1} parent=31 // pred_check_branch
        %3154 = sbr.rel (%p3152) target = $region36
      $region35: #{tpu_custom_call.1} parent=31 // pred_region
        _
      $region36: #{tpu_custom_call.1} parent=31 // pred_fallthru
        _
    $region32: #{tpu_custom_call.1} parent=5 // pred_fallthru
      _
    %p3155 = scmp.le.s32.totalorder 2, %s9
    // Predicated region
    $region37: #{tpu_custom_call.1} parent=5 // pred_check
      %p3156 = pneg %p3155
    $region38: #{tpu_custom_call.1} parent=5 // pred_check_branch
      %3158 = sbr.rel (%p3156) target = $region40
    $region39: #{tpu_custom_call.1} parent=5 // pred_region
      %s3159 = ssub.s32 %s9, 2
      // Predicated region
      $region41: #{tpu_custom_call.1} parent=39 // pred_check
        %p3160 = pneg %p106
      $region42: #{tpu_custom_call.1} parent=39 // pred_check_branch
        %3162 = sbr.rel (%p3160) target = $region44
      $region43: #{tpu_custom_call.1} parent=39 // pred_region
        %p3163 = scmp.lt.s32.totalorder %s15, 1
        %s3164 = scalar_select %p3163, %s15, 1
        %s3165 = smul.addr %s3164, 32
        %s3166 = smul.addr %s3165, 8
        %s3167 = scalar_lea.vmem %s3, %s3166
      $region44: #{tpu_custom_call.1} parent=39 // pred_fallthru
        _
    $region40: #{tpu_custom_call.1} parent=5 // pred_fallthru
      _
  $region6: #{tpu_custom_call.1} parent=0 // loop_footer
    %s13 = sadd.s32 1, %s9
  $region7: #{tpu_custom_call.1} parent=0 // loop_footer_branch
    %8 = sbr.rel target = $region3
  $region8: #{tpu_custom_call.1} parent=0 // loop_exit
    _

</llo_original>
